<compile_context>
chip_gen: v5e
topology: v5e:2x2
jax: 0.10.0
libtpu: 0.0.40
codegen_flags: <defaults>
</compile_context>

<pallas_src>
import functools

import numpy as np
import jax
import jax.numpy as jnp
from jax import lax
from jax.experimental import pallas as pl
from jax.experimental.pallas import tpu as pltpu


def _round_up(x, m):
    return ((x + m - 1) // m) * m


def _pad2d(a, rows, cols):
    r, c = a.shape
    if r == rows and c == cols:
        return a
    return jnp.pad(a, ((0, rows - r), (0, cols - c)))


def _vmem_limit(tile_bytes):
    """VMEM limit derived from the double-buffered tile footprint + headroom,
    capped well under v7x's 64 MiB physical VMEM."""
    return int(min(max(tile_bytes + (8 << 20), 16 << 20), 48 << 20))


# ----------------------------------------------------------------------------
# Backbone conv (im2col matmul) kernels
# ----------------------------------------------------------------------------
def _matmul_k1_kernel(*refs, use_bias, negative_slope):
    """Single-K-step tile: o = leaky_relu(x @ w + b); no accumulator scratch."""
    if use_bias:
        x_ref, w_ref, b_ref, o_ref = refs
    else:
        x_ref, w_ref, o_ref = refs
        b_ref = None
    y = jnp.dot(x_ref[...], w_ref[...], preferred_element_type=jnp.float32)
    if use_bias:
        y = y + b_ref[...]
    if negative_slope is not None:
        y = jnp.where(y >= 0, y, y * negative_slope)
    o_ref[...] = y.astype(o_ref.dtype)


def _matmul_acc_kernel(*refs, use_bias, negative_slope):
    """Multi-K-step tile with f32 VMEM accumulator; bias folded into k==0 init."""
    if use_bias:
        x_ref, w_ref, b_ref, o_ref, acc_ref = refs
    else:
        x_ref, w_ref, o_ref, acc_ref = refs
        b_ref = None
    k = pl.program_id(2)

    @pl.when(k == 0)
    def _():
        if use_bias:
            acc_ref[...] = jnp.broadcast_to(b_ref[...], acc_ref.shape)
        else:
            acc_ref[...] = jnp.zeros_like(acc_ref)

    acc_ref[...] += jnp.dot(x_ref[...], w_ref[...],
                            preferred_element_type=jnp.float32)

    @pl.when(k == pl.num_programs(2) - 1)
    def _():
        acc = acc_ref[...]
        if negative_slope is not None:
            acc = jnp.where(acc >= 0, acc, acc * negative_slope)
        o_ref[...] = acc.astype(o_ref.dtype)


def pallas_matmul(x, w, b=None, negative_slope=None, out_dtype=jnp.float32,
                  tm=256, tn=256, tk=1024):
    """o = leaky_relu(x @ w + b).  x:(M,K) w:(K,N) b:(N,) or None."""
    M, K = x.shape
    K2, N = w.shape
    assert K == K2
    use_bias = b is not None

    # >=2 M tiles whenever M allows (both v7x TensorCores busy).
    if M > 16:
        TM = min(tm, _round_up(-(-M // 2), 16))
    else:
        TM = _round_up(max(M, 8), 8)
    TN = min(tn, _round_up(N, 128))
    TK = min(tk, _round_up(K, 128))
    Mp, Kp, Np = _round_up(M, TM), _round_up(K, TK), _round_up(N, TN)

    xp = _pad2d(x.astype(jnp.bfloat16), Mp, Kp)
    wp = _pad2d(w.astype(jnp.bfloat16), Kp, Np)
    args = [xp, wp]
    if use_bias:
        args.append(_pad2d(b.reshape(1, N).astype(jnp.float32), 1, Np))

    out_bytes = jnp.dtype(out_dtype).itemsize
    single_k = (Kp == TK)

    if single_k:
        # Specialized path: no f32 scratch, no init/finalize branches.
        in_specs = [pl.BlockSpec((TM, Kp), lambda i, j: (i, 0)),
                    pl.BlockSpec((Kp, TN), lambda i, j: (0, j))]
        if use_bias:
            in_specs.append(pl.BlockSpec((1, TN), lambda i, j: (0, j)))
        kernel = functools.partial(_matmul_k1_kernel, use_bias=use_bias,
                                   negative_slope=negative_slope)
        tile_bytes = 2 * (TM * Kp * 2 + Kp * TN * 2 + TN * 4 + TM * TN * out_bytes)
        out = pl.pallas_call(
            kernel,
            out_shape=jax.ShapeDtypeStruct((Mp, Np), out_dtype),
            grid=(Mp // TM, Np // TN),
            in_specs=in_specs,
            out_specs=pl.BlockSpec((TM, TN), lambda i, j: (i, j)),
            compiler_params=pltpu.CompilerParams(
                dimension_semantics=("parallel", "parallel"),
                vmem_limit_bytes=_vmem_limit(tile_bytes)),
        )(*args)
    else:
        in_specs = [pl.BlockSpec((TM, TK), lambda i, j, k: (i, k)),
                    pl.BlockSpec((TK, TN), lambda i, j, k: (k, j))]
        if use_bias:
            in_specs.append(pl.BlockSpec((1, TN), lambda i, j, k: (0, j)))
        kernel = functools.partial(_matmul_acc_kernel, use_bias=use_bias,
                                   negative_slope=negative_slope)
        tile_bytes = (2 * (TM * TK * 2 + TK * TN * 2 + TN * 4 + TM * TN * out_bytes)
                      + TM * TN * 4)
        out = pl.pallas_call(
            kernel,
            out_shape=jax.ShapeDtypeStruct((Mp, Np), out_dtype),
            grid=(Mp // TM, Np // TN, Kp // TK),
            in_specs=in_specs,
            out_specs=pl.BlockSpec((TM, TN), lambda i, j, k: (i, j)),
            scratch_shapes=[pltpu.VMEM((TM, TN), jnp.float32)],
            compiler_params=pltpu.CompilerParams(
                dimension_semantics=("parallel", "parallel", "arbitrary"),
                vmem_limit_bytes=_vmem_limit(tile_bytes)),
        )(*args)

    if Mp == M and Np == N:
        return out
    return out[:M, :N]


# ----------------------------------------------------------------------------
# Fused "head" kernel:
#   CAM pooling + CAM logits + CAM-reweighted conv1x1 + LeakyReLU + heatmap +
#   final (reflect-pad-folded) 4x4 conv — single pallas_call, everything in VMEM.
# ----------------------------------------------------------------------------
def _head_kernel(x_ref, wg_ref, wm_ref, w1_ref, b1_ref, wf_ref,
                 cam_ref, out_ref, hm_ref, *, negative_slope):
    B, HW, _ = x_ref.shape
    row_ids = lax.broadcasted_iota(jnp.int32, (HW, 1), 0)
    for b in range(B):                         # B is tiny & static -> unrolled
        xb = x_ref[b]                          # (HW, C) f32
        gap = jnp.mean(xb, axis=0, keepdims=True)       # adaptive_avg_pool2d
        gmp = jnp.max(xb, axis=0, keepdims=True)        # adaptive_max_pool2d
        cam_ref[b] = (
            jnp.dot(gap, wg_ref[...], preferred_element_type=jnp.float32)
            + jnp.dot(gmp, wm_ref[...], preferred_element_type=jnp.float32))

        # conv1x1 with the CAM channel re-weighting folded into w1_ref.
        y = jnp.dot(xb, w1_ref[...], preferred_element_type=jnp.float32)
        y = y + b1_ref[...]
        y = jnp.where(y >= 0, y, y * negative_slope)    # LeakyReLU(0.2)
        # padded output channels have zero weight and zero bias -> stay 0,
        # so the channel-sum heatmap below is exact.
        hm_ref[b] = jnp.sum(y, axis=1, keepdims=True)   # (HW, 1) narrow store

        # final spectral-norm 4x4 conv with ReflectionPad2d folded into wf_ref:
        # out[:, o] = sum_h y[h, :] @ wf_ref[h][:, o]
        acc = jnp.zeros((1, out_ref.shape[-1]), jnp.float32)
        for h in range(HW):
            y_h = jnp.sum(jnp.where(row_ids == h, y, 0.0),
                          axis=0, keepdims=True)        # row select, no slicing
            acc = acc + jnp.dot(y_h, wf_ref[h],
                                preferred_element_type=jnp.float32)
        out_ref[b] = acc


def pallas_head(x3, wg, wm, w1p, b1p, wfp, negative_slope=0.2):
    B, HW, _ = x3.shape
    kernel = functools.partial(_head_kernel, negative_slope=negative_slope)
    cam, out, hm = pl.pallas_call(
        kernel,
        out_shape=(jax.ShapeDtypeStruct((B, 1, 128), jnp.float32),   # cam logits
                   jax.ShapeDtypeStruct((B, 1, 128), jnp.float32),   # final conv
                   jax.ShapeDtypeStruct((B, HW, 1), jnp.float32)),   # heatmap
    )(x3, wg, wm, w1p, b1p, wfp)
    return cam, out, hm


# ----------------------------------------------------------------------------
# Plain-JAX glue: padding, im2col, spectral norm, params
# ----------------------------------------------------------------------------
def reflect_pad(x_nhwc, p=1):
    return jnp.pad(x_nhwc, ((0, 0), (p, p), (p, p), (0, 0)), mode="reflect")


def im2col(x_nhwc, k, stride):
    # TODO(synk): fuse the k*k patch extraction into the conv kernel (shifted
    # windows / space-to-depth as a reduction axis) to avoid materializing the
    # 16x-expanded patch tensor for realistic image sizes.
    B, Hp, Wp, C = x_nhwc.shape
    Ho = (Hp - k) // stride + 1
    Wo = (Wp - k) // stride + 1
    cols = []
    for kh in range(k):
        for kw in range(k):
            cols.append(
                x_nhwc[:, kh:kh + (Ho - 1) * stride + 1:stride,
                       kw:kw + (Wo - 1) * stride + 1:stride, :])
    patches = jnp.stack(cols, axis=3)                   # (B, Ho, Wo, k*k, C)
    return patches.reshape(B * Ho * Wo, k * k * C), (B, Ho, Wo)


def _reflect_tap_matrix(n, n_out, k=4):
    """S[o, t, p] = 1 if ReflectionPad2d(1) maps padded index (o + t) -> p."""
    rmap = [1] + list(range(n)) + [n - 2]
    S = np.zeros((n_out, k, n), np.float32)
    for o in range(n_out):
        for t in range(k):
            S[o, t, rmap[o + t]] = 1.0
    return jnp.asarray(S)


def spectral_sigma(w2d, iters=20):
    """Approximate largest singular value via power iteration (torch-like)."""
    u = jnp.ones((w2d.shape[0],), jnp.float32)
    v = jnp.ones((w2d.shape[1],), jnp.float32)
    for _ in range(iters):
        v = w2d.T @ u
        v = v / (jnp.linalg.norm(v) + 1e-12)
        u = w2d @ v
        u = u / (jnp.linalg.norm(u) + 1e-12)
    return u @ (w2d @ v)


def spectral_norm_weight(w):
    w2d = w.reshape(w.shape[0], -1)
    return w / spectral_sigma(w2d)


def init_params(key, input_nc=3, ndf=8, n_layers=5):
    ks = iter(jax.random.split(key, 32))
    p = {}
    chans = [input_nc, ndf]
    for i in range(1, n_layers - 2):
        chans.append(ndf * (2 ** i))
    chans.append(ndf * (2 ** (n_layers - 2)))
    strides = [2] * (n_layers - 2) + [1]
    p["strides"] = strides
    p["n_convs"] = len(strides)
    for i, (cin, cout) in enumerate(zip(chans[:-1], chans[1:])):
        w = 0.05 * jax.random.normal(next(ks), (cout, cin, 4, 4), jnp.float32)
        b = 0.05 * jax.random.normal(next(ks), (cout,), jnp.float32)
        p[f"conv{i}_w_sn"] = spectral_norm_weight(w)   # spectral_norm folded at init
        p[f"conv{i}_b"] = b
    C = ndf * (2 ** (n_layers - 2))
    gap_w = 0.05 * jax.random.normal(next(ks), (1, C), jnp.float32)
    gmp_w = 0.05 * jax.random.normal(next(ks), (1, C), jnp.float32)
    p["gap_w_orig"] = gap_w
    p["gmp_w_orig"] = gmp_w
    p["gap_w_sn"] = spectral_norm_weight(gap_w)
    p["gmp_w_sn"] = spectral_norm_weight(gmp_w)
    p["conv1x1_w"] = 0.05 * jax.random.normal(next(ks), (C, 2 * C, 1, 1), jnp.float32)
    p["conv1x1_b"] = 0.05 * jax.random.normal(next(ks), (C,), jnp.float32)
    wf = 0.05 * jax.random.normal(next(ks), (1, C, 4, 4), jnp.float32)
    p["conv_final_w_sn"] = spectral_norm_weight(wf)
    return p


# ----------------------------------------------------------------------------
# Forward pass (matches Discriminator.forward)
# ----------------------------------------------------------------------------
def discriminator_forward(params, x_nchw):
    # NCHW -> NHWC; bf16 backbone activations (f32 accumulation in-kernel),
    # f32 out of the last conv so CAM pooling / logits are full precision.
    x = jnp.transpose(x_nchw, (0, 2, 3, 1)).astype(jnp.bfloat16)

    n_convs = params["n_convs"]
    for i in range(n_convs):
        w = params[f"conv{i}_w_sn"]                     # (Cout, Cin, 4, 4)
        b = params[f"conv{i}_b"]
        xp = reflect_pad(x, 1)
        patches, (B, Ho, Wo) = im2col(xp, 4, params["strides"][i])
        wmat = jnp.transpose(w, (2, 3, 1, 0)).reshape(-1, w.shape[0])
        last = (i == n_convs - 1)
        y = pallas_matmul(patches, wmat, b, negative_slope=0.2,
                          out_dtype=jnp.float32 if last else jnp.bfloat16)
        x = y.reshape(B, Ho, Wo, w.shape[0])

    B, H, W, C = x.shape
    HW = H * W
    x3 = x.reshape(B, HW, C)                            # f32

    # ---- fold weights for the fused head kernel -----------------------------
    NP1 = _round_up(C, 128)          # lane-dense conv1x1 output width
    gap_sn = params["gap_w_sn"].reshape(C)
    gmp_sn = params["gmp_w_sn"].reshape(C)
    wg = jnp.zeros((C, 128), jnp.float32).at[:, 0].set(gap_sn)   # lane 0 = gap logit
    wm = jnp.zeros((C, 128), jnp.float32).at[:, 1].set(gmp_sn)   # lane 1 = gmp logit

    # CAM channel re-weighting (uses weight_orig, like torch parameters()[0])
    # folded into the conv1x1 weight -> no (B, HW, 2C) concat tensor.
    w1 = params["conv1x1_w"][:, :, 0, 0]                # (Cout=C, 2C)
    w1_eff = (w1[:, :C] * params["gap_w_orig"]
              + w1[:, C:] * params["gmp_w_orig"]).T     # (C_in, C_out)
    w1p = jnp.pad(w1_eff, ((0, 0), (0, NP1 - C)))       # (C, NP1); pad cols zero
    b1p = jnp.pad(params["conv1x1_b"].reshape(1, C), ((0, 0), (0, NP1 - C)))

    # Final spectral-norm 4x4 conv + its ReflectionPad2d folded into an exact
    # effective weight (HW, NP1, 128); only economical because H, W are tiny.
    Hf, Wf = H - 1, W - 1
    wf_c = params["conv_final_w_sn"][0]                 # (C, 4, 4)
    S_h = _reflect_tap_matrix(H, Hf)                    # (Hf, 4, H)
    S_w = _reflect_tap_matrix(W, Wf)                    # (Wf, 4, W)
    A = jnp.einsum('akp,blq,ckl->pqcab', S_h, S_w, wf_c)   # (H, W, C, Hf, Wf)
    wf_eff = A.reshape(HW, C, Hf * Wf)
    wfp = jnp.pad(wf_eff, ((0, 0), (0, NP1 - C), (0, 128 - Hf * Wf)))

    cam, out, hm = pallas_head(x3, wg, wm, w1p, b1p, wfp, negative_slope=0.2)

    cam_logit = cam[:, 0, :2]                                   # (B, 2)
    out_nchw = out[:, 0, :Hf * Wf].reshape(B, 1, Hf, Wf)        # (B, 1, Hf, Wf)
    heatmap_nchw = hm[:, :, 0].reshape(B, 1, H, W)              # (B, 1, H, W)
    return out_nchw, cam_logit, heatmap_nchw


# ----------------------------------------------------------------------------
if __name__ == "__main__":
    key = jax.random.PRNGKey(0)
    k_par, k_in = jax.random.split(key)

    input_nc, ndf, n_layers = 3, 8, 5
    params = init_params(k_par, input_nc=input_nc, ndf=ndf, n_layers=n_layers)

    # small deterministic input (B, C, H, W); H=W=32 so the final k=4 conv is valid
    x = jax.random.normal(k_in, (2, input_nc, 32, 32), jnp.float32)

    fwd = jax.jit(lambda inp: discriminator_forward(params, inp))
    out, cam_logit, heatmap = fwd(x)
    jax.block_until_ready((out, cam_logit, heatmap))

    assert out.shape == (2, 1, 2, 2), out.shape
    assert cam_logit.shape == (2, 2), cam_logit.shape
    assert heatmap.shape == (2, 1, 3, 3), heatmap.shape
    print("KERNEL_OK")
</pallas_src>

<mosaic_0001>
module attributes {stable_mosaic.version = 11 : i64} {
  func.func @_matmul_k1_kernel(%arg0: i32, %arg1: i32, %arg2: memref<256x128xbf16, #tpu.memory_space<vmem>>, %arg3: memref<128x128xbf16, #tpu.memory_space<vmem>>, %arg4: memref<1x128xf32, #tpu.memory_space<vmem>>, %arg5: memref<256x128xbf16, #tpu.memory_space<vmem>>) attributes {dimension_semantics = [#tpu.dimension_semantics<parallel>, #tpu.dimension_semantics<parallel>], iteration_bounds = array<i64: 2, 1>, scalar_prefetch = 0 : i64, scratch_operands = 0 : i64, tpu.core_type = #tpu.core_type<tc>, window_params = [{transform_indices = @transform_0, window_bounds = array<i64: 256, 128>}, {transform_indices = @transform_1, window_bounds = array<i64: 128, 128>}, {transform_indices = @transform_2, window_bounds = array<i64: 1, 128>}, {transform_indices = @transform_3, window_bounds = array<i64: 256, 128>}]} {
    %c0 = arith.constant 0 : index
    %c0_0 = arith.constant 0 : index
    %0 = vector.load %arg2[%c0, %c0_0] : memref<256x128xbf16, #tpu.memory_space<vmem>>, vector<256x128xbf16>
    %c0_1 = arith.constant 0 : index
    %c0_2 = arith.constant 0 : index
    %1 = vector.load %arg3[%c0_1, %c0_2] : memref<128x128xbf16, #tpu.memory_space<vmem>>, vector<128x128xbf16>
    %cst = arith.constant dense<0.000000e+00> : vector<256x128xf32>
    %2 = tpu.matmul %0, %1, %cst {dimension_numbers = #tpu.dot_dimension_numbers<[1], [0], [0], [1], [0, 0, 1, 1], [], []>} : vector<256x128xbf16>, vector<128x128xbf16>, vector<256x128xf32> -> vector<256x128xf32>
    %c0_3 = arith.constant 0 : index
    %c0_4 = arith.constant 0 : index
    %3 = vector.load %arg4[%c0_3, %c0_4] : memref<1x128xf32, #tpu.memory_space<vmem>>, vector<1x128xf32>
    %4 = vector.broadcast %3 : vector<1x128xf32> to vector<256x128xf32>
    %5 = arith.addf %2, %4 : vector<256x128xf32>
    %cst_5 = arith.constant 0.000000e+00 : f32
    %6 = vector.broadcast %cst_5 : f32 to vector<256x128xf32>
    %7 = arith.cmpf oge, %5, %6 : vector<256x128xf32>
    %cst_6 = arith.constant 2.000000e-01 : f32
    %8 = vector.broadcast %cst_6 : f32 to vector<256x128xf32>
    %9 = arith.mulf %5, %8 : vector<256x128xf32>
    %10 = arith.select %7, %5, %9 : vector<256x128xi1>, vector<256x128xf32>
    %11 = arith.truncf %10 : vector<256x128xf32> to vector<256x128xbf16>
    %c0_7 = arith.constant 0 : index
    %c0_8 = arith.constant 0 : index
    %12 = vector.load %arg5[%c0_7, %c0_8] : memref<256x128xbf16, #tpu.memory_space<vmem>>, vector<256x128xbf16>
    tpu.vector_store %arg5[%c0_7, %c0_8], %11 {strides = array<i32>} : memref<256x128xbf16, #tpu.memory_space<vmem>>, vector<256x128xbf16>,
    return
  }
  func.func @transform_0(%arg0: i32, %arg1: i32) -> (i32, i32) {
    %c0_i32 = arith.constant 0 : i32
    %c0_i32_0 = arith.constant 0 : i32
    return %arg0, %c0_i32 : i32, i32
  }
  func.func @transform_1(%arg0: i32, %arg1: i32) -> (i32, i32) {
    %c0_i32 = arith.constant 0 : i32
    %c0_i32_0 = arith.constant 0 : i32
    return %c0_i32, %arg1 : i32, i32
  }
  func.func @transform_2(%arg0: i32, %arg1: i32) -> (i32, i32) {
    %c0_i32 = arith.constant 0 : i32
    %c0_i32_0 = arith.constant 0 : i32
    return %c0_i32, %arg1 : i32, i32
  }
  func.func @transform_3(%arg0: i32, %arg1: i32) -> (i32, i32) {
    %c0_i32 = arith.constant 0 : i32
    return %arg0, %arg1 : i32, i32
  }
}

module attributes {stable_mosaic.version = 11 : i64} {
  func.func @_matmul_k1_kernel(%arg0: i32, %arg1: i32, %arg2: memref<64x128xbf16, #tpu.memory_space<vmem>>, %arg3: memref<128x128xbf16, #tpu.memory_space<vmem>>, %arg4: memref<1x128xf32, #tpu.memory_space<vmem>>, %arg5: memref<64x128xbf16, #tpu.memory_space<vmem>>) attributes {dimension_semantics = [#tpu.dimension_semantics<parallel>, #tpu.dimension_semantics<parallel>], iteration_bounds = array<i64: 2, 1>, scalar_prefetch = 0 : i64, scratch_operands = 0 : i64, tpu.core_type = #tpu.core_type<tc>, window_params = [{transform_indices = @transform_0, window_bounds = array<i64: 64, 128>}, {transform_indices = @transform_1, window_bounds = array<i64: 128, 128>}, {transform_indices = @transform_2, window_bounds = array<i64: 1, 128>}, {transform_indices = @transform_3, window_bounds = array<i64: 64, 128>}]} {
    %c0 = arith.constant 0 : index
    %c0_0 = arith.constant 0 : index
    %0 = vector.load %arg2[%c0, %c0_0] : memref<64x128xbf16, #tpu.memory_space<vmem>>, vector<64x128xbf16>
    %c0_1 = arith.constant 0 : index
    %c0_2 = arith.constant 0 : index
    %1 = vector.load %arg3[%c0_1, %c0_2] : memref<128x128xbf16, #tpu.memory_space<vmem>>, vector<128x128xbf16>
    %cst = arith.constant dense<0.000000e+00> : vector<64x128xf32>
    %2 = tpu.matmul %0, %1, %cst {dimension_numbers = #tpu.dot_dimension_numbers<[1], [0], [0], [1], [0, 0, 1, 1], [], []>} : vector<64x128xbf16>, vector<128x128xbf16>, vector<64x128xf32> -> vector<64x128xf32>
    %c0_3 = arith.constant 0 : index
    %c0_4 = arith.constant 0 : index
    %3 = vector.load %arg4[%c0_3, %c0_4] : memref<1x128xf32, #tpu.memory_space<vmem>>, vector<1x128xf32>
    %4 = vector.broadcast %3 : vector<1x128xf32> to vector<64x128xf32>
    %5 = arith.addf %2, %4 : vector<64x128xf32>
    %cst_5 = arith.constant 0.000000e+00 : f32
    %6 = vector.broadcast %cst_5 : f32 to vector<64x128xf32>
    %7 = arith.cmpf oge, %5, %6 : vector<64x128xf32>
    %cst_6 = arith.constant 2.000000e-01 : f32
    %8 = vector.broadcast %cst_6 : f32 to vector<64x128xf32>
    %9 = arith.mulf %5, %8 : vector<64x128xf32>
    %10 = arith.select %7, %5, %9 : vector<64x128xi1>, vector<64x128xf32>
    %11 = arith.truncf %10 : vector<64x128xf32> to vector<64x128xbf16>
    %c0_7 = arith.constant 0 : index
    %c0_8 = arith.constant 0 : index
    %12 = vector.load %arg5[%c0_7, %c0_8] : memref<64x128xbf16, #tpu.memory_space<vmem>>, vector<64x128xbf16>
    tpu.vector_store %arg5[%c0_7, %c0_8], %11 {strides = array<i32>} : memref<64x128xbf16, #tpu.memory_space<vmem>>, vector<64x128xbf16>,
    return
  }
  func.func @transform_0(%arg0: i32, %arg1: i32) -> (i32, i32) {
    %c0_i32 = arith.constant 0 : i32
    %c0_i32_0 = arith.constant 0 : i32
    return %arg0, %c0_i32 : i32, i32
  }
  func.func @transform_1(%arg0: i32, %arg1: i32) -> (i32, i32) {
    %c0_i32 = arith.constant 0 : i32
    %c0_i32_0 = arith.constant 0 : i32
    return %c0_i32, %arg1 : i32, i32
  }
  func.func @transform_2(%arg0: i32, %arg1: i32) -> (i32, i32) {
    %c0_i32 = arith.constant 0 : i32
    %c0_i32_0 = arith.constant 0 : i32
    return %c0_i32, %arg1 : i32, i32
  }
  func.func @transform_3(%arg0: i32, %arg1: i32) -> (i32, i32) {
    %c0_i32 = arith.constant 0 : i32
    return %arg0, %arg1 : i32, i32
  }
}

module attributes {stable_mosaic.version = 11 : i64} {
  func.func @_matmul_k1_kernel(%arg0: i32, %arg1: i32, %arg2: memref<16x256xbf16, #tpu.memory_space<vmem>>, %arg3: memref<256x128xbf16, #tpu.memory_space<vmem>>, %arg4: memref<1x128xf32, #tpu.memory_space<vmem>>, %arg5: memref<16x128xbf16, #tpu.memory_space<vmem>>) attributes {dimension_semantics = [#tpu.dimension_semantics<parallel>, #tpu.dimension_semantics<parallel>], iteration_bounds = array<i64: 2, 1>, scalar_prefetch = 0 : i64, scratch_operands = 0 : i64, tpu.core_type = #tpu.core_type<tc>, window_params = [{transform_indices = @transform_0, window_bounds = array<i64: 16, 256>}, {transform_indices = @transform_1, window_bounds = array<i64: 256, 128>}, {transform_indices = @transform_2, window_bounds = array<i64: 1, 128>}, {transform_indices = @transform_3, window_bounds = array<i64: 16, 128>}]} {
    %c0 = arith.constant 0 : index
    %c0_0 = arith.constant 0 : index
    %0 = vector.load %arg2[%c0, %c0_0] : memref<16x256xbf16, #tpu.memory_space<vmem>>, vector<16x256xbf16>
    %c0_1 = arith.constant 0 : index
    %c0_2 = arith.constant 0 : index
    %1 = vector.load %arg3[%c0_1, %c0_2] : memref<256x128xbf16, #tpu.memory_space<vmem>>, vector<256x128xbf16>
    %cst = arith.constant dense<0.000000e+00> : vector<16x128xf32>
    %2 = tpu.matmul %0, %1, %cst {dimension_numbers = #tpu.dot_dimension_numbers<[1], [0], [0], [1], [0, 0, 1, 1], [], []>} : vector<16x256xbf16>, vector<256x128xbf16>, vector<16x128xf32> -> vector<16x128xf32>
    %c0_3 = arith.constant 0 : index
    %c0_4 = arith.constant 0 : index
    %3 = vector.load %arg4[%c0_3, %c0_4] : memref<1x128xf32, #tpu.memory_space<vmem>>, vector<1x128xf32>
    %4 = vector.broadcast %3 : vector<1x128xf32> to vector<16x128xf32>
    %5 = arith.addf %2, %4 : vector<16x128xf32>
    %cst_5 = arith.constant 0.000000e+00 : f32
    %6 = vector.broadcast %cst_5 : f32 to vector<16x128xf32>
    %7 = arith.cmpf oge, %5, %6 : vector<16x128xf32>
    %cst_6 = arith.constant 2.000000e-01 : f32
    %8 = vector.broadcast %cst_6 : f32 to vector<16x128xf32>
    %9 = arith.mulf %5, %8 : vector<16x128xf32>
    %10 = arith.select %7, %5, %9 : vector<16x128xi1>, vector<16x128xf32>
    %11 = arith.truncf %10 : vector<16x128xf32> to vector<16x128xbf16>
    %c0_7 = arith.constant 0 : index
    %c0_8 = arith.constant 0 : index
    %12 = vector.load %arg5[%c0_7, %c0_8] : memref<16x128xbf16, #tpu.memory_space<vmem>>, vector<16x128xbf16>
    tpu.vector_store %arg5[%c0_7, %c0_8], %11 {strides = array<i32>} : memref<16x128xbf16, #tpu.memory_space<vmem>>, vector<16x128xbf16>,
    return
  }
  func.func @transform_0(%arg0: i32, %arg1: i32) -> (i32, i32) {
    %c0_i32 = arith.constant 0 : i32
    %c0_i32_0 = arith.constant 0 : i32
    return %arg0, %c0_i32 : i32, i32
  }
  func.func @transform_1(%arg0: i32, %arg1: i32) -> (i32, i32) {
    %c0_i32 = arith.constant 0 : i32
    %c0_i32_0 = arith.constant 0 : i32
    return %c0_i32, %arg1 : i32, i32
  }
  func.func @transform_2(%arg0: i32, %arg1: i32) -> (i32, i32) {
    %c0_i32 = arith.constant 0 : i32
    %c0_i32_0 = arith.constant 0 : i32
    return %c0_i32, %arg1 : i32, i32
  }
  func.func @transform_3(%arg0: i32, %arg1: i32) -> (i32, i32) {
    %c0_i32 = arith.constant 0 : i32
    return %arg0, %arg1 : i32, i32
  }
}

module attributes {stable_mosaic.version = 11 : i64} {
  func.func @_matmul_k1_kernel(%arg0: i32, %arg1: i32, %arg2: memref<16x512xbf16, #tpu.memory_space<vmem>>, %arg3: memref<512x128xbf16, #tpu.memory_space<vmem>>, %arg4: memref<1x128xf32, #tpu.memory_space<vmem>>, %arg5: memref<16x128xf32, #tpu.memory_space<vmem>>) attributes {dimension_semantics = [#tpu.dimension_semantics<parallel>, #tpu.dimension_semantics<parallel>], iteration_bounds = array<i64: 2, 1>, scalar_prefetch = 0 : i64, scratch_operands = 0 : i64, tpu.core_type = #tpu.core_type<tc>, window_params = [{transform_indices = @transform_0, window_bounds = array<i64: 16, 512>}, {transform_indices = @transform_1, window_bounds = array<i64: 512, 128>}, {transform_indices = @transform_2, window_bounds = array<i64: 1, 128>}, {transform_indices = @transform_3, window_bounds = array<i64: 16, 128>}]} {
    %c0 = arith.constant 0 : index
    %c0_0 = arith.constant 0 : index
    %0 = vector.load %arg2[%c0, %c0_0] : memref<16x512xbf16, #tpu.memory_space<vmem>>, vector<16x512xbf16>
    %c0_1 = arith.constant 0 : index
    %c0_2 = arith.constant 0 : index
    %1 = vector.load %arg3[%c0_1, %c0_2] : memref<512x128xbf16, #tpu.memory_space<vmem>>, vector<512x128xbf16>
    %cst = arith.constant dense<0.000000e+00> : vector<16x128xf32>
    %2 = tpu.matmul %0, %1, %cst {dimension_numbers = #tpu.dot_dimension_numbers<[1], [0], [0], [1], [0, 0, 1, 1], [], []>} : vector<16x512xbf16>, vector<512x128xbf16>, vector<16x128xf32> -> vector<16x128xf32>
    %c0_3 = arith.constant 0 : index
    %c0_4 = arith.constant 0 : index
    %3 = vector.load %arg4[%c0_3, %c0_4] : memref<1x128xf32, #tpu.memory_space<vmem>>, vector<1x128xf32>
    %4 = vector.broadcast %3 : vector<1x128xf32> to vector<16x128xf32>
    %5 = arith.addf %2, %4 : vector<16x128xf32>
    %cst_5 = arith.constant 0.000000e+00 : f32
    %6 = vector.broadcast %cst_5 : f32 to vector<16x128xf32>
    %7 = arith.cmpf oge, %5, %6 : vector<16x128xf32>
    %cst_6 = arith.constant 2.000000e-01 : f32
    %8 = vector.broadcast %cst_6 : f32 to vector<16x128xf32>
    %9 = arith.mulf %5, %8 : vector<16x128xf32>
    %10 = arith.select %7, %5, %9 : vector<16x128xi1>, vector<16x128xf32>
    %c0_7 = arith.constant 0 : index
    %c0_8 = arith.constant 0 : index
    %11 = vector.load %arg5[%c0_7, %c0_8] : memref<16x128xf32, #tpu.memory_space<vmem>>, vector<16x128xf32>
    tpu.vector_store %arg5[%c0_7, %c0_8], %10 {strides = array<i32>} : memref<16x128xf32, #tpu.memory_space<vmem>>, vector<16x128xf32>,
    return
  }
  func.func @transform_0(%arg0: i32, %arg1: i32) -> (i32, i32) {
    %c0_i32 = arith.constant 0 : i32
    %c0_i32_0 = arith.constant 0 : i32
    return %arg0, %c0_i32 : i32, i32
  }
  func.func @transform_1(%arg0: i32, %arg1: i32) -> (i32, i32) {
    %c0_i32 = arith.constant 0 : i32
    %c0_i32_0 = arith.constant 0 : i32
    return %c0_i32, %arg1 : i32, i32
  }
  func.func @transform_2(%arg0: i32, %arg1: i32) -> (i32, i32) {
    %c0_i32 = arith.constant 0 : i32
    %c0_i32_0 = arith.constant 0 : i32
    return %c0_i32, %arg1 : i32, i32
  }
  func.func @transform_3(%arg0: i32, %arg1: i32) -> (i32, i32) {
    %c0_i32 = arith.constant 0 : i32
    return %arg0, %arg1 : i32, i32
  }
}

module attributes {stable_mosaic.version = 11 : i64} {
  func.func @_head_kernel(%arg0: memref<2x9x64xf32, #tpu.memory_space<vmem>>, %arg1: memref<64x128xf32, #tpu.memory_space<vmem>>, %arg2: memref<64x128xf32, #tpu.memory_space<vmem>>, %arg3: memref<64x128xf32, #tpu.memory_space<vmem>>, %arg4: memref<1x128xf32, #tpu.memory_space<vmem>>, %arg5: memref<9x128x128xf32, #tpu.memory_space<vmem>>, %arg6: memref<2x1x128xf32, #tpu.memory_space<vmem>>, %arg7: memref<2x1x128xf32, #tpu.memory_space<vmem>>, %arg8: memref<2x9x1xf32, #tpu.memory_space<vmem>>) attributes {dimension_semantics = [], scalar_prefetch = 0 : i64, scratch_operands = 0 : i64, tpu.core_type = #tpu.core_type<tc>} {
    %0 = tpu.iota {dimensions = array<i32: 0>} : vector<9x1xi32>
    %c0 = arith.constant 0 : index
    %c0_0 = arith.constant 0 : index
    %c0_1 = arith.constant 0 : index
    %1 = vector.load %arg0[%c0, %c0_0, %c0_1] : memref<2x9x64xf32, #tpu.memory_space<vmem>>, vector<1x9x64xf32>
    %2 = vector.shape_cast %1 : vector<1x9x64xf32> to vector<9x64xf32>
    %cst = arith.constant dense<0.000000e+00> : vector<64xf32>
    %3 = vector.multi_reduction <add>, %2, %cst [0] : vector<9x64xf32> to vector<64xf32>
    %4 = vector.shape_cast %3 : vector<64xf32> to vector<1x64xf32>
    %cst_2 = arith.constant 9.000000e+00 : f32
    %5 = vector.broadcast %cst_2 : f32 to vector<1x64xf32>
    %6 = arith.divf %4, %5 : vector<1x64xf32>
    %cst_3 = arith.constant dense<0xFF800000> : vector<64xf32>
    %7 = vector.multi_reduction <maximumf>, %2, %cst_3 [0] : vector<9x64xf32> to vector<64xf32>
    %8 = vector.shape_cast %7 : vector<64xf32> to vector<1x64xf32>
    %c0_4 = arith.constant 0 : index
    %c0_5 = arith.constant 0 : index
    %9 = vector.load %arg1[%c0_4, %c0_5] : memref<64x128xf32, #tpu.memory_space<vmem>>, vector<64x128xf32>
    %cst_6 = arith.constant dense<0.000000e+00> : vector<1x128xf32>
    %10 = tpu.matmul %6, %9, %cst_6 {dimension_numbers = #tpu.dot_dimension_numbers<[1], [0], [0], [1], [0, 0, 1, 1], [], []>} : vector<1x64xf32>, vector<64x128xf32>, vector<1x128xf32> -> vector<1x128xf32>
    %c0_7 = arith.constant 0 : index
    %c0_8 = arith.constant 0 : index
    %11 = vector.load %arg2[%c0_7, %c0_8] : memref<64x128xf32, #tpu.memory_space<vmem>>, vector<64x128xf32>
    %cst_9 = arith.constant dense<0.000000e+00> : vector<1x128xf32>
    %12 = tpu.matmul %8, %11, %cst_9 {dimension_numbers = #tpu.dot_dimension_numbers<[1], [0], [0], [1], [0, 0, 1, 1], [], []>} : vector<1x64xf32>, vector<64x128xf32>, vector<1x128xf32> -> vector<1x128xf32>
    %13 = arith.addf %10, %12 : vector<1x128xf32>
    %c0_10 = arith.constant 0 : index
    %c0_11 = arith.constant 0 : index
    %c0_12 = arith.constant 0 : index
    %14 = vector.load %arg6[%c0_10, %c0_11, %c0_12] : memref<2x1x128xf32, #tpu.memory_space<vmem>>, vector<1x1x128xf32>
    %15 = vector.shape_cast %14 : vector<1x1x128xf32> to vector<1x128xf32>
    %16 = vector.shape_cast %13 : vector<1x128xf32> to vector<1x1x128xf32>
    tpu.vector_store %arg6[%c0_10, %c0_11, %c0_12], %16 {strides = array<i32>} : memref<2x1x128xf32, #tpu.memory_space<vmem>>, vector<1x1x128xf32>,
    %c0_13 = arith.constant 0 : index
    %c0_14 = arith.constant 0 : index
    %17 = vector.load %arg3[%c0_13, %c0_14] : memref<64x128xf32, #tpu.memory_space<vmem>>, vector<64x128xf32>
    %cst_15 = arith.constant dense<0.000000e+00> : vector<9x128xf32>
    %18 = tpu.matmul %2, %17, %cst_15 {dimension_numbers = #tpu.dot_dimension_numbers<[1], [0], [0], [1], [0, 0, 1, 1], [], []>} : vector<9x64xf32>, vector<64x128xf32>, vector<9x128xf32> -> vector<9x128xf32>
    %c0_16 = arith.constant 0 : index
    %c0_17 = arith.constant 0 : index
    %19 = vector.load %arg4[%c0_16, %c0_17] : memref<1x128xf32, #tpu.memory_space<vmem>>, vector<1x128xf32>
    %20 = vector.broadcast %19 : vector<1x128xf32> to vector<9x128xf32>
    %21 = arith.addf %18, %20 : vector<9x128xf32>
    %cst_18 = arith.constant 0.000000e+00 : f32
    %22 = vector.broadcast %cst_18 : f32 to vector<9x128xf32>
    %23 = arith.cmpf oge, %21, %22 : vector<9x128xf32>
    %cst_19 = arith.constant 2.000000e-01 : f32
    %24 = vector.broadcast %cst_19 : f32 to vector<9x128xf32>
    %25 = arith.mulf %21, %24 : vector<9x128xf32>
    %26 = arith.select %23, %21, %25 : vector<9x128xi1>, vector<9x128xf32>
    %cst_20 = arith.constant dense<0.000000e+00> : vector<9xf32>
    %27 = vector.multi_reduction <add>, %26, %cst_20 [1] : vector<9x128xf32> to vector<9xf32>
    %28 = vector.shape_cast %27 : vector<9xf32> to vector<9x1xf32>
    %c0_21 = arith.constant 0 : index
    %c0_22 = arith.constant 0 : index
    %c0_23 = arith.constant 0 : index
    %29 = vector.load %arg8[%c0_21, %c0_22, %c0_23] : memref<2x9x1xf32, #tpu.memory_space<vmem>>, vector<1x9x1xf32>
    %30 = vector.shape_cast %29 : vector<1x9x1xf32> to vector<9x1xf32>
    %31 = vector.shape_cast %28 : vector<9x1xf32> to vector<1x9x1xf32>
    tpu.vector_store %arg8[%c0_21, %c0_22, %c0_23], %31 {strides = array<i32>} : memref<2x9x1xf32, #tpu.memory_space<vmem>>, vector<1x9x1xf32>,
    %cst_24 = arith.constant 0.000000e+00 : f32
    %32 = vector.broadcast %cst_24 : f32 to vector<1x128xf32>
    %c0_i32 = arith.constant 0 : i32
    %33 = vector.broadcast %c0_i32 : i32 to vector<9x1xi32>
    %34 = arith.cmpi eq, %0, %33 : vector<9x1xi32>
    %cst_25 = arith.constant 0.000000e+00 : f32
    %35 = vector.shape_cast %34 : vector<9x1xi1> to vector<9x1xi1>
    %36 = vector.broadcast %35 : vector<9x1xi1> to vector<9x128xi1>
    %37 = vector.broadcast %cst_25 : f32 to vector<9x128xf32>
    %38 = arith.select %36, %26, %37 : vector<9x128xi1>, vector<9x128xf32>
    %cst_26 = arith.constant dense<0.000000e+00> : vector<128xf32>
    %39 = vector.multi_reduction <add>, %38, %cst_26 [0] : vector<9x128xf32> to vector<128xf32>
    %40 = vector.shape_cast %39 : vector<128xf32> to vector<1x128xf32>
    %c0_27 = arith.constant 0 : index
    %c0_28 = arith.constant 0 : index
    %c0_29 = arith.constant 0 : index
    %41 = vector.load %arg5[%c0_27, %c0_28, %c0_29] : memref<9x128x128xf32, #tpu.memory_space<vmem>>, vector<1x128x128xf32>
    %42 = vector.shape_cast %41 : vector<1x128x128xf32> to vector<128x128xf32>
    %cst_30 = arith.constant dense<0.000000e+00> : vector<1x128xf32>
    %43 = tpu.matmul %40, %42, %cst_30 {dimension_numbers = #tpu.dot_dimension_numbers<[1], [0], [0], [1], [0, 0, 1, 1], [], []>} : vector<1x128xf32>, vector<128x128xf32>, vector<1x128xf32> -> vector<1x128xf32>
    %44 = arith.addf %32, %43 : vector<1x128xf32>
    %c1_i32 = arith.constant 1 : i32
    %45 = vector.broadcast %c1_i32 : i32 to vector<9x1xi32>
    %46 = arith.cmpi eq, %0, %45 : vector<9x1xi32>
    %cst_31 = arith.constant 0.000000e+00 : f32
    %47 = vector.shape_cast %46 : vector<9x1xi1> to vector<9x1xi1>
    %48 = vector.broadcast %47 : vector<9x1xi1> to vector<9x128xi1>
    %49 = vector.broadcast %cst_31 : f32 to vector<9x128xf32>
    %50 = arith.select %48, %26, %49 : vector<9x128xi1>, vector<9x128xf32>
    %cst_32 = arith.constant dense<0.000000e+00> : vector<128xf32>
    %51 = vector.multi_reduction <add>, %50, %cst_32 [0] : vector<9x128xf32> to vector<128xf32>
    %52 = vector.shape_cast %51 : vector<128xf32> to vector<1x128xf32>
    %c1 = arith.constant 1 : index
    %c0_33 = arith.constant 0 : index
    %c0_34 = arith.constant 0 : index
    %53 = vector.load %arg5[%c1, %c0_33, %c0_34] : memref<9x128x128xf32, #tpu.memory_space<vmem>>, vector<1x128x128xf32>
    %54 = vector.shape_cast %53 : vector<1x128x128xf32> to vector<128x128xf32>
    %cst_35 = arith.constant dense<0.000000e+00> : vector<1x128xf32>
    %55 = tpu.matmul %52, %54, %cst_35 {dimension_numbers = #tpu.dot_dimension_numbers<[1], [0], [0], [1], [0, 0, 1, 1], [], []>} : vector<1x128xf32>, vector<128x128xf32>, vector<1x128xf32> -> vector<1x128xf32>
    %56 = arith.addf %44, %55 : vector<1x128xf32>
    %c2_i32 = arith.constant 2 : i32
    %57 = vector.broadcast %c2_i32 : i32 to vector<9x1xi32>
    %58 = arith.cmpi eq, %0, %57 : vector<9x1xi32>
    %cst_36 = arith.constant 0.000000e+00 : f32
    %59 = vector.shape_cast %58 : vector<9x1xi1> to vector<9x1xi1>
    %60 = vector.broadcast %59 : vector<9x1xi1> to vector<9x128xi1>
    %61 = vector.broadcast %cst_36 : f32 to vector<9x128xf32>
    %62 = arith.select %60, %26, %61 : vector<9x128xi1>, vector<9x128xf32>
    %cst_37 = arith.constant dense<0.000000e+00> : vector<128xf32>
    %63 = vector.multi_reduction <add>, %62, %cst_37 [0] : vector<9x128xf32> to vector<128xf32>
    %64 = vector.shape_cast %63 : vector<128xf32> to vector<1x128xf32>
    %c2 = arith.constant 2 : index
    %c0_38 = arith.constant 0 : index
    %c0_39 = arith.constant 0 : index
    %65 = vector.load %arg5[%c2, %c0_38, %c0_39] : memref<9x128x128xf32, #tpu.memory_space<vmem>>, vector<1x128x128xf32>
    %66 = vector.shape_cast %65 : vector<1x128x128xf32> to vector<128x128xf32>
    %cst_40 = arith.constant dense<0.000000e+00> : vector<1x128xf32>
    %67 = tpu.matmul %64, %66, %cst_40 {dimension_numbers = #tpu.dot_dimension_numbers<[1], [0], [0], [1], [0, 0, 1, 1], [], []>} : vector<1x128xf32>, vector<128x128xf32>, vector<1x128xf32> -> vector<1x128xf32>
    %68 = arith.addf %56, %67 : vector<1x128xf32>
    %c3_i32 = arith.constant 3 : i32
    %69 = vector.broadcast %c3_i32 : i32 to vector<9x1xi32>
    %70 = arith.cmpi eq, %0, %69 : vector<9x1xi32>
    %cst_41 = arith.constant 0.000000e+00 : f32
    %71 = vector.shape_cast %70 : vector<9x1xi1> to vector<9x1xi1>
    %72 = vector.broadcast %71 : vector<9x1xi1> to vector<9x128xi1>
    %73 = vector.broadcast %cst_41 : f32 to vector<9x128xf32>
    %74 = arith.select %72, %26, %73 : vector<9x128xi1>, vector<9x128xf32>
    %cst_42 = arith.constant dense<0.000000e+00> : vector<128xf32>
    %75 = vector.multi_reduction <add>, %74, %cst_42 [0] : vector<9x128xf32> to vector<128xf32>
    %76 = vector.shape_cast %75 : vector<128xf32> to vector<1x128xf32>
    %c3 = arith.constant 3 : index
    %c0_43 = arith.constant 0 : index
    %c0_44 = arith.constant 0 : index
    %77 = vector.load %arg5[%c3, %c0_43, %c0_44] : memref<9x128x128xf32, #tpu.memory_space<vmem>>, vector<1x128x128xf32>
    %78 = vector.shape_cast %77 : vector<1x128x128xf32> to vector<128x128xf32>
    %cst_45 = arith.constant dense<0.000000e+00> : vector<1x128xf32>
    %79 = tpu.matmul %76, %78, %cst_45 {dimension_numbers = #tpu.dot_dimension_numbers<[1], [0], [0], [1], [0, 0, 1, 1], [], []>} : vector<1x128xf32>, vector<128x128xf32>, vector<1x128xf32> -> vector<1x128xf32>
    %80 = arith.addf %68, %79 : vector<1x128xf32>
    %c4_i32 = arith.constant 4 : i32
    %81 = vector.broadcast %c4_i32 : i32 to vector<9x1xi32>
    %82 = arith.cmpi eq, %0, %81 : vector<9x1xi32>
    %cst_46 = arith.constant 0.000000e+00 : f32
    %83 = vector.shape_cast %82 : vector<9x1xi1> to vector<9x1xi1>
    %84 = vector.broadcast %83 : vector<9x1xi1> to vector<9x128xi1>
    %85 = vector.broadcast %cst_46 : f32 to vector<9x128xf32>
    %86 = arith.select %84, %26, %85 : vector<9x128xi1>, vector<9x128xf32>
    %cst_47 = arith.constant dense<0.000000e+00> : vector<128xf32>
    %87 = vector.multi_reduction <add>, %86, %cst_47 [0] : vector<9x128xf32> to vector<128xf32>
    %88 = vector.shape_cast %87 : vector<128xf32> to vector<1x128xf32>
    %c4 = arith.constant 4 : index
    %c0_48 = arith.constant 0 : index
    %c0_49 = arith.constant 0 : index
    %89 = vector.load %arg5[%c4, %c0_48, %c0_49] : memref<9x128x128xf32, #tpu.memory_space<vmem>>, vector<1x128x128xf32>
    %90 = vector.shape_cast %89 : vector<1x128x128xf32> to vector<128x128xf32>
    %cst_50 = arith.constant dense<0.000000e+00> : vector<1x128xf32>
    %91 = tpu.matmul %88, %90, %cst_50 {dimension_numbers = #tpu.dot_dimension_numbers<[1], [0], [0], [1], [0, 0, 1, 1], [], []>} : vector<1x128xf32>, vector<128x128xf32>, vector<1x128xf32> -> vector<1x128xf32>
    %92 = arith.addf %80, %91 : vector<1x128xf32>
    %c5_i32 = arith.constant 5 : i32
    %93 = vector.broadcast %c5_i32 : i32 to vector<9x1xi32>
    %94 = arith.cmpi eq, %0, %93 : vector<9x1xi32>
    %cst_51 = arith.constant 0.000000e+00 : f32
    %95 = vector.shape_cast %94 : vector<9x1xi1> to vector<9x1xi1>
    %96 = vector.broadcast %95 : vector<9x1xi1> to vector<9x128xi1>
    %97 = vector.broadcast %cst_51 : f32 to vector<9x128xf32>
    %98 = arith.select %96, %26, %97 : vector<9x128xi1>, vector<9x128xf32>
    %cst_52 = arith.constant dense<0.000000e+00> : vector<128xf32>
    %99 = vector.multi_reduction <add>, %98, %cst_52 [0] : vector<9x128xf32> to vector<128xf32>
    %100 = vector.shape_cast %99 : vector<128xf32> to vector<1x128xf32>
    %c5 = arith.constant 5 : index
    %c0_53 = arith.constant 0 : index
    %c0_54 = arith.constant 0 : index
    %101 = vector.load %arg5[%c5, %c0_53, %c0_54] : memref<9x128x128xf32, #tpu.memory_space<vmem>>, vector<1x128x128xf32>
    %102 = vector.shape_cast %101 : vector<1x128x128xf32> to vector<128x128xf32>
    %cst_55 = arith.constant dense<0.000000e+00> : vector<1x128xf32>
    %103 = tpu.matmul %100, %102, %cst_55 {dimension_numbers = #tpu.dot_dimension_numbers<[1], [0], [0], [1], [0, 0, 1, 1], [], []>} : vector<1x128xf32>, vector<128x128xf32>, vector<1x128xf32> -> vector<1x128xf32>
    %104 = arith.addf %92, %103 : vector<1x128xf32>
    %c6_i32 = arith.constant 6 : i32
    %105 = vector.broadcast %c6_i32 : i32 to vector<9x1xi32>
    %106 = arith.cmpi eq, %0, %105 : vector<9x1xi32>
    %cst_56 = arith.constant 0.000000e+00 : f32
    %107 = vector.shape_cast %106 : vector<9x1xi1> to vector<9x1xi1>
    %108 = vector.broadcast %107 : vector<9x1xi1> to vector<9x128xi1>
    %109 = vector.broadcast %cst_56 : f32 to vector<9x128xf32>
    %110 = arith.select %108, %26, %109 : vector<9x128xi1>, vector<9x128xf32>
    %cst_57 = arith.constant dense<0.000000e+00> : vector<128xf32>
    %111 = vector.multi_reduction <add>, %110, %cst_57 [0] : vector<9x128xf32> to vector<128xf32>
    %112 = vector.shape_cast %111 : vector<128xf32> to vector<1x128xf32>
    %c6 = arith.constant 6 : index
    %c0_58 = arith.constant 0 : index
    %c0_59 = arith.constant 0 : index
    %113 = vector.load %arg5[%c6, %c0_58, %c0_59] : memref<9x128x128xf32, #tpu.memory_space<vmem>>, vector<1x128x128xf32>
    %114 = vector.shape_cast %113 : vector<1x128x128xf32> to vector<128x128xf32>
    %cst_60 = arith.constant dense<0.000000e+00> : vector<1x128xf32>
    %115 = tpu.matmul %112, %114, %cst_60 {dimension_numbers = #tpu.dot_dimension_numbers<[1], [0], [0], [1], [0, 0, 1, 1], [], []>} : vector<1x128xf32>, vector<128x128xf32>, vector<1x128xf32> -> vector<1x128xf32>
    %116 = arith.addf %104, %115 : vector<1x128xf32>
    %c7_i32 = arith.constant 7 : i32
    %117 = vector.broadcast %c7_i32 : i32 to vector<9x1xi32>
    %118 = arith.cmpi eq, %0, %117 : vector<9x1xi32>
    %cst_61 = arith.constant 0.000000e+00 : f32
    %119 = vector.shape_cast %118 : vector<9x1xi1> to vector<9x1xi1>
    %120 = vector.broadcast %119 : vector<9x1xi1> to vector<9x128xi1>
    %121 = vector.broadcast %cst_61 : f32 to vector<9x128xf32>
    %122 = arith.select %120, %26, %121 : vector<9x128xi1>, vector<9x128xf32>
    %cst_62 = arith.constant dense<0.000000e+00> : vector<128xf32>
    %123 = vector.multi_reduction <add>, %122, %cst_62 [0] : vector<9x128xf32> to vector<128xf32>
    %124 = vector.shape_cast %123 : vector<128xf32> to vector<1x128xf32>
    %c7 = arith.constant 7 : index
    %c0_63 = arith.constant 0 : index
    %c0_64 = arith.constant 0 : index
    %125 = vector.load %arg5[%c7, %c0_63, %c0_64] : memref<9x128x128xf32, #tpu.memory_space<vmem>>, vector<1x128x128xf32>
    %126 = vector.shape_cast %125 : vector<1x128x128xf32> to vector<128x128xf32>
    %cst_65 = arith.constant dense<0.000000e+00> : vector<1x128xf32>
    %127 = tpu.matmul %124, %126, %cst_65 {dimension_numbers = #tpu.dot_dimension_numbers<[1], [0], [0], [1], [0, 0, 1, 1], [], []>} : vector<1x128xf32>, vector<128x128xf32>, vector<1x128xf32> -> vector<1x128xf32>
    %128 = arith.addf %116, %127 : vector<1x128xf32>
    %c8_i32 = arith.constant 8 : i32
    %129 = vector.broadcast %c8_i32 : i32 to vector<9x1xi32>
    %130 = arith.cmpi eq, %0, %129 : vector<9x1xi32>
    %cst_66 = arith.constant 0.000000e+00 : f32
    %131 = vector.shape_cast %130 : vector<9x1xi1> to vector<9x1xi1>
    %132 = vector.broadcast %131 : vector<9x1xi1> to vector<9x128xi1>
    %133 = vector.broadcast %cst_66 : f32 to vector<9x128xf32>
    %134 = arith.select %132, %26, %133 : vector<9x128xi1>, vector<9x128xf32>
    %cst_67 = arith.constant dense<0.000000e+00> : vector<128xf32>
    %135 = vector.multi_reduction <add>, %134, %cst_67 [0] : vector<9x128xf32> to vector<128xf32>
    %136 = vector.shape_cast %135 : vector<128xf32> to vector<1x128xf32>
    %c8 = arith.constant 8 : index
    %c0_68 = arith.constant 0 : index
    %c0_69 = arith.constant 0 : index
    %137 = vector.load %arg5[%c8, %c0_68, %c0_69] : memref<9x128x128xf32, #tpu.memory_space<vmem>>, vector<1x128x128xf32>
    %138 = vector.shape_cast %137 : vector<1x128x128xf32> to vector<128x128xf32>
    %cst_70 = arith.constant dense<0.000000e+00> : vector<1x128xf32>
    %139 = tpu.matmul %136, %138, %cst_70 {dimension_numbers = #tpu.dot_dimension_numbers<[1], [0], [0], [1], [0, 0, 1, 1], [], []>} : vector<1x128xf32>, vector<128x128xf32>, vector<1x128xf32> -> vector<1x128xf32>
    %140 = arith.addf %128, %139 : vector<1x128xf32>
    %c0_71 = arith.constant 0 : index
    %c0_72 = arith.constant 0 : index
    %c0_73 = arith.constant 0 : index
    %141 = vector.load %arg7[%c0_71, %c0_72, %c0_73] : memref<2x1x128xf32, #tpu.memory_space<vmem>>, vector<1x1x128xf32>
    %142 = vector.shape_cast %141 : vector<1x1x128xf32> to vector<1x128xf32>
    %143 = vector.shape_cast %140 : vector<1x128xf32> to vector<1x1x128xf32>
    tpu.vector_store %arg7[%c0_71, %c0_72, %c0_73], %143 {strides = array<i32>} : memref<2x1x128xf32, #tpu.memory_space<vmem>>, vector<1x1x128xf32>,
    %c1_74 = arith.constant 1 : index
    %c0_75 = arith.constant 0 : index
    %c0_76 = arith.constant 0 : index
    %144 = vector.load %arg0[%c1_74, %c0_75, %c0_76] : memref<2x9x64xf32, #tpu.memory_space<vmem>>, vector<1x9x64xf32>
    %145 = vector.shape_cast %144 : vector<1x9x64xf32> to vector<9x64xf32>
    %cst_77 = arith.constant dense<0.000000e+00> : vector<64xf32>
    %146 = vector.multi_reduction <add>, %145, %cst_77 [0] : vector<9x64xf32> to vector<64xf32>
    %147 = vector.shape_cast %146 : vector<64xf32> to vector<1x64xf32>
    %cst_78 = arith.constant 9.000000e+00 : f32
    %148 = vector.broadcast %cst_78 : f32 to vector<1x64xf32>
    %149 = arith.divf %147, %148 : vector<1x64xf32>
    %cst_79 = arith.constant dense<0xFF800000> : vector<64xf32>
    %150 = vector.multi_reduction <maximumf>, %145, %cst_79 [0] : vector<9x64xf32> to vector<64xf32>
    %151 = vector.shape_cast %150 : vector<64xf32> to vector<1x64xf32>
    %c0_80 = arith.constant 0 : index
    %c0_81 = arith.constant 0 : index
    %152 = vector.load %arg1[%c0_80, %c0_81] : memref<64x128xf32, #tpu.memory_space<vmem>>, vector<64x128xf32>
    %cst_82 = arith.constant dense<0.000000e+00> : vector<1x128xf32>
    %153 = tpu.matmul %149, %152, %cst_82 {dimension_numbers = #tpu.dot_dimension_numbers<[1], [0], [0], [1], [0, 0, 1, 1], [], []>} : vector<1x64xf32>, vector<64x128xf32>, vector<1x128xf32> -> vector<1x128xf32>
    %c0_83 = arith.constant 0 : index
    %c0_84 = arith.constant 0 : index
    %154 = vector.load %arg2[%c0_83, %c0_84] : memref<64x128xf32, #tpu.memory_space<vmem>>, vector<64x128xf32>
    %cst_85 = arith.constant dense<0.000000e+00> : vector<1x128xf32>
    %155 = tpu.matmul %151, %154, %cst_85 {dimension_numbers = #tpu.dot_dimension_numbers<[1], [0], [0], [1], [0, 0, 1, 1], [], []>} : vector<1x64xf32>, vector<64x128xf32>, vector<1x128xf32> -> vector<1x128xf32>
    %156 = arith.addf %153, %155 : vector<1x128xf32>
    %c1_86 = arith.constant 1 : index
    %c0_87 = arith.constant 0 : index
    %c0_88 = arith.constant 0 : index
    %157 = vector.load %arg6[%c1_86, %c0_87, %c0_88] : memref<2x1x128xf32, #tpu.memory_space<vmem>>, vector<1x1x128xf32>
    %158 = vector.shape_cast %157 : vector<1x1x128xf32> to vector<1x128xf32>
    %159 = vector.shape_cast %156 : vector<1x128xf32> to vector<1x1x128xf32>
    tpu.vector_store %arg6[%c1_86, %c0_87, %c0_88], %159 {strides = array<i32>} : memref<2x1x128xf32, #tpu.memory_space<vmem>>, vector<1x1x128xf32>,
    %c0_89 = arith.constant 0 : index
    %c0_90 = arith.constant 0 : index
    %160 = vector.load %arg3[%c0_89, %c0_90] : memref<64x128xf32, #tpu.memory_space<vmem>>, vector<64x128xf32>
    %cst_91 = arith.constant dense<0.000000e+00> : vector<9x128xf32>
    %161 = tpu.matmul %145, %160, %cst_91 {dimension_numbers = #tpu.dot_dimension_numbers<[1], [0], [0], [1], [0, 0, 1, 1], [], []>} : vector<9x64xf32>, vector<64x128xf32>, vector<9x128xf32> -> vector<9x128xf32>
    %c0_92 = arith.constant 0 : index
    %c0_93 = arith.constant 0 : index
    %162 = vector.load %arg4[%c0_92, %c0_93] : memref<1x128xf32, #tpu.memory_space<vmem>>, vector<1x128xf32>
    %163 = vector.broadcast %162 : vector<1x128xf32> to vector<9x128xf32>
    %164 = arith.addf %161, %163 : vector<9x128xf32>
    %cst_94 = arith.constant 0.000000e+00 : f32
    %165 = vector.broadcast %cst_94 : f32 to vector<9x128xf32>
    %166 = arith.cmpf oge, %164, %165 : vector<9x128xf32>
    %cst_95 = arith.constant 2.000000e-01 : f32
    %167 = vector.broadcast %cst_95 : f32 to vector<9x128xf32>
    %168 = arith.mulf %164, %167 : vector<9x128xf32>
    %169 = arith.select %166, %164, %168 : vector<9x128xi1>, vector<9x128xf32>
    %cst_96 = arith.constant dense<0.000000e+00> : vector<9xf32>
    %170 = vector.multi_reduction <add>, %169, %cst_96 [1] : vector<9x128xf32> to vector<9xf32>
    %171 = vector.shape_cast %170 : vector<9xf32> to vector<9x1xf32>
    %c1_97 = arith.constant 1 : index
    %c0_98 = arith.constant 0 : index
    %c0_99 = arith.constant 0 : index
    %172 = vector.load %arg8[%c1_97, %c0_98, %c0_99] : memref<2x9x1xf32, #tpu.memory_space<vmem>>, vector<1x9x1xf32>
    %173 = vector.shape_cast %172 : vector<1x9x1xf32> to vector<9x1xf32>
    %174 = vector.shape_cast %171 : vector<9x1xf32> to vector<1x9x1xf32>
    tpu.vector_store %arg8[%c1_97, %c0_98, %c0_99], %174 {strides = array<i32>} : memref<2x9x1xf32, #tpu.memory_space<vmem>>, vector<1x9x1xf32>,
    %cst_100 = arith.constant 0.000000e+00 : f32
    %175 = vector.broadcast %cst_100 : f32 to vector<1x128xf32>
    %c0_i32_101 = arith.constant 0 : i32
    %176 = vector.broadcast %c0_i32_101 : i32 to vector<9x1xi32>
    %177 = arith.cmpi eq, %0, %176 : vector<9x1xi32>
    %cst_102 = arith.constant 0.000000e+00 : f32
    %178 = vector.shape_cast %177 : vector<9x1xi1> to vector<9x1xi1>
    %179 = vector.broadcast %178 : vector<9x1xi1> to vector<9x128xi1>
    %180 = vector.broadcast %cst_102 : f32 to vector<9x128xf32>
    %181 = arith.select %179, %169, %180 : vector<9x128xi1>, vector<9x128xf32>
    %cst_103 = arith.constant dense<0.000000e+00> : vector<128xf32>
    %182 = vector.multi_reduction <add>, %181, %cst_103 [0] : vector<9x128xf32> to vector<128xf32>
    %183 = vector.shape_cast %182 : vector<128xf32> to vector<1x128xf32>
    %c0_104 = arith.constant 0 : index
    %c0_105 = arith.constant 0 : index
    %c0_106 = arith.constant 0 : index
    %184 = vector.load %arg5[%c0_104, %c0_105, %c0_106] : memref<9x128x128xf32, #tpu.memory_space<vmem>>, vector<1x128x128xf32>
    %185 = vector.shape_cast %184 : vector<1x128x128xf32> to vector<128x128xf32>
    %cst_107 = arith.constant dense<0.000000e+00> : vector<1x128xf32>
    %186 = tpu.matmul %183, %185, %cst_107 {dimension_numbers = #tpu.dot_dimension_numbers<[1], [0], [0], [1], [0, 0, 1, 1], [], []>} : vector<1x128xf32>, vector<128x128xf32>, vector<1x128xf32> -> vector<1x128xf32>
    %187 = arith.addf %175, %186 : vector<1x128xf32>
    %c1_i32_108 = arith.constant 1 : i32
    %188 = vector.broadcast %c1_i32_108 : i32 to vector<9x1xi32>
    %189 = arith.cmpi eq, %0, %188 : vector<9x1xi32>
    %cst_109 = arith.constant 0.000000e+00 : f32
    %190 = vector.shape_cast %189 : vector<9x1xi1> to vector<9x1xi1>
    %191 = vector.broadcast %190 : vector<9x1xi1> to vector<9x128xi1>
    %192 = vector.broadcast %cst_109 : f32 to vector<9x128xf32>
    %193 = arith.select %191, %169, %192 : vector<9x128xi1>, vector<9x128xf32>
    %cst_110 = arith.constant dense<0.000000e+00> : vector<128xf32>
    %194 = vector.multi_reduction <add>, %193, %cst_110 [0] : vector<9x128xf32> to vector<128xf32>
    %195 = vector.shape_cast %194 : vector<128xf32> to vector<1x128xf32>
    %c1_111 = arith.constant 1 : index
    %c0_112 = arith.constant 0 : index
    %c0_113 = arith.constant 0 : index
    %196 = vector.load %arg5[%c1_111, %c0_112, %c0_113] : memref<9x128x128xf32, #tpu.memory_space<vmem>>, vector<1x128x128xf32>
    %197 = vector.shape_cast %196 : vector<1x128x128xf32> to vector<128x128xf32>
    %cst_114 = arith.constant dense<0.000000e+00> : vector<1x128xf32>
    %198 = tpu.matmul %195, %197, %cst_114 {dimension_numbers = #tpu.dot_dimension_numbers<[1], [0], [0], [1], [0, 0, 1, 1], [], []>} : vector<1x128xf32>, vector<128x128xf32>, vector<1x128xf32> -> vector<1x128xf32>
    %199 = arith.addf %187, %198 : vector<1x128xf32>
    %c2_i32_115 = arith.constant 2 : i32
    %200 = vector.broadcast %c2_i32_115 : i32 to vector<9x1xi32>
    %201 = arith.cmpi eq, %0, %200 : vector<9x1xi32>
    %cst_116 = arith.constant 0.000000e+00 : f32
    %202 = vector.shape_cast %201 : vector<9x1xi1> to vector<9x1xi1>
    %203 = vector.broadcast %202 : vector<9x1xi1> to vector<9x128xi1>
    %204 = vector.broadcast %cst_116 : f32 to vector<9x128xf32>
    %205 = arith.select %203, %169, %204 : vector<9x128xi1>, vector<9x128xf32>
    %cst_117 = arith.constant dense<0.000000e+00> : vector<128xf32>
    %206 = vector.multi_reduction <add>, %205, %cst_117 [0] : vector<9x128xf32> to vector<128xf32>
    %207 = vector.shape_cast %206 : vector<128xf32> to vector<1x128xf32>
    %c2_118 = arith.constant 2 : index
    %c0_119 = arith.constant 0 : index
    %c0_120 = arith.constant 0 : index
    %208 = vector.load %arg5[%c2_118, %c0_119, %c0_120] : memref<9x128x128xf32, #tpu.memory_space<vmem>>, vector<1x128x128xf32>
    %209 = vector.shape_cast %208 : vector<1x128x128xf32> to vector<128x128xf32>
    %cst_121 = arith.constant dense<0.000000e+00> : vector<1x128xf32>
    %210 = tpu.matmul %207, %209, %cst_121 {dimension_numbers = #tpu.dot_dimension_numbers<[1], [0], [0], [1], [0, 0, 1, 1], [], []>} : vector<1x128xf32>, vector<128x128xf32>, vector<1x128xf32> -> vector<1x128xf32>
    %211 = arith.addf %199, %210 : vector<1x128xf32>
    %c3_i32_122 = arith.constant 3 : i32
    %212 = vector.broadcast %c3_i32_122 : i32 to vector<9x1xi32>
    %213 = arith.cmpi eq, %0, %212 : vector<9x1xi32>
    %cst_123 = arith.constant 0.000000e+00 : f32
    %214 = vector.shape_cast %213 : vector<9x1xi1> to vector<9x1xi1>
    %215 = vector.broadcast %214 : vector<9x1xi1> to vector<9x128xi1>
    %216 = vector.broadcast %cst_123 : f32 to vector<9x128xf32>
    %217 = arith.select %215, %169, %216 : vector<9x128xi1>, vector<9x128xf32>
    %cst_124 = arith.constant dense<0.000000e+00> : vector<128xf32>
    %218 = vector.multi_reduction <add>, %217, %cst_124 [0] : vector<9x128xf32> to vector<128xf32>
    %219 = vector.shape_cast %218 : vector<128xf32> to vector<1x128xf32>
    %c3_125 = arith.constant 3 : index
    %c0_126 = arith.constant 0 : index
    %c0_127 = arith.constant 0 : index
    %220 = vector.load %arg5[%c3_125, %c0_126, %c0_127] : memref<9x128x128xf32, #tpu.memory_space<vmem>>, vector<1x128x128xf32>
    %221 = vector.shape_cast %220 : vector<1x128x128xf32> to vector<128x128xf32>
    %cst_128 = arith.constant dense<0.000000e+00> : vector<1x128xf32>
    %222 = tpu.matmul %219, %221, %cst_128 {dimension_numbers = #tpu.dot_dimension_numbers<[1], [0], [0], [1], [0, 0, 1, 1], [], []>} : vector<1x128xf32>, vector<128x128xf32>, vector<1x128xf32> -> vector<1x128xf32>
    %223 = arith.addf %211, %222 : vector<1x128xf32>
    %c4_i32_129 = arith.constant 4 : i32
    %224 = vector.broadcast %c4_i32_129 : i32 to vector<9x1xi32>
    %225 = arith.cmpi eq, %0, %224 : vector<9x1xi32>
    %cst_130 = arith.constant 0.000000e+00 : f32
    %226 = vector.shape_cast %225 : vector<9x1xi1> to vector<9x1xi1>
    %227 = vector.broadcast %226 : vector<9x1xi1> to vector<9x128xi1>
    %228 = vector.broadcast %cst_130 : f32 to vector<9x128xf32>
    %229 = arith.select %227, %169, %228 : vector<9x128xi1>, vector<9x128xf32>
    %cst_131 = arith.constant dense<0.000000e+00> : vector<128xf32>
    %230 = vector.multi_reduction <add>, %229, %cst_131 [0] : vector<9x128xf32> to vector<128xf32>
    %231 = vector.shape_cast %230 : vector<128xf32> to vector<1x128xf32>
    %c4_132 = arith.constant 4 : index
    %c0_133 = arith.constant 0 : index
    %c0_134 = arith.constant 0 : index
    %232 = vector.load %arg5[%c4_132, %c0_133, %c0_134] : memref<9x128x128xf32, #tpu.memory_space<vmem>>, vector<1x128x128xf32>
    %233 = vector.shape_cast %232 : vector<1x128x128xf32> to vector<128x128xf32>
    %cst_135 = arith.constant dense<0.000000e+00> : vector<1x128xf32>
    %234 = tpu.matmul %231, %233, %cst_135 {dimension_numbers = #tpu.dot_dimension_numbers<[1], [0], [0], [1], [0, 0, 1, 1], [], []>} : vector<1x128xf32>, vector<128x128xf32>, vector<1x128xf32> -> vector<1x128xf32>
    %235 = arith.addf %223, %234 : vector<1x128xf32>
    %c5_i32_136 = arith.constant 5 : i32
    %236 = vector.broadcast %c5_i32_136 : i32 to vector<9x1xi32>
    %237 = arith.cmpi eq, %0, %236 : vector<9x1xi32>
    %cst_137 = arith.constant 0.000000e+00 : f32
    %238 = vector.shape_cast %237 : vector<9x1xi1> to vector<9x1xi1>
    %239 = vector.broadcast %238 : vector<9x1xi1> to vector<9x128xi1>
    %240 = vector.broadcast %cst_137 : f32 to vector<9x128xf32>
    %241 = arith.select %239, %169, %240 : vector<9x128xi1>, vector<9x128xf32>
    %cst_138 = arith.constant dense<0.000000e+00> : vector<128xf32>
    %242 = vector.multi_reduction <add>, %241, %cst_138 [0] : vector<9x128xf32> to vector<128xf32>
    %243 = vector.shape_cast %242 : vector<128xf32> to vector<1x128xf32>
    %c5_139 = arith.constant 5 : index
    %c0_140 = arith.constant 0 : index
    %c0_141 = arith.constant 0 : index
    %244 = vector.load %arg5[%c5_139, %c0_140, %c0_141] : memref<9x128x128xf32, #tpu.memory_space<vmem>>, vector<1x128x128xf32>
    %245 = vector.shape_cast %244 : vector<1x128x128xf32> to vector<128x128xf32>
    %cst_142 = arith.constant dense<0.000000e+00> : vector<1x128xf32>
    %246 = tpu.matmul %243, %245, %cst_142 {dimension_numbers = #tpu.dot_dimension_numbers<[1], [0], [0], [1], [0, 0, 1, 1], [], []>} : vector<1x128xf32>, vector<128x128xf32>, vector<1x128xf32> -> vector<1x128xf32>
    %247 = arith.addf %235, %246 : vector<1x128xf32>
    %c6_i32_143 = arith.constant 6 : i32
    %248 = vector.broadcast %c6_i32_143 : i32 to vector<9x1xi32>
    %249 = arith.cmpi eq, %0, %248 : vector<9x1xi32>
    %cst_144 = arith.constant 0.000000e+00 : f32
    %250 = vector.shape_cast %249 : vector<9x1xi1> to vector<9x1xi1>
    %251 = vector.broadcast %250 : vector<9x1xi1> to vector<9x128xi1>
    %252 = vector.broadcast %cst_144 : f32 to vector<9x128xf32>
    %253 = arith.select %251, %169, %252 : vector<9x128xi1>, vector<9x128xf32>
    %cst_145 = arith.constant dense<0.000000e+00> : vector<128xf32>
    %254 = vector.multi_reduction <add>, %253, %cst_145 [0] : vector<9x128xf32> to vector<128xf32>
    %255 = vector.shape_cast %254 : vector<128xf32> to vector<1x128xf32>
    %c6_146 = arith.constant 6 : index
    %c0_147 = arith.constant 0 : index
    %c0_148 = arith.constant 0 : index
    %256 = vector.load %arg5[%c6_146, %c0_147, %c0_148] : memref<9x128x128xf32, #tpu.memory_space<vmem>>, vector<1x128x128xf32>
    %257 = vector.shape_cast %256 : vector<1x128x128xf32> to vector<128x128xf32>
    %cst_149 = arith.constant dense<0.000000e+00> : vector<1x128xf32>
    %258 = tpu.matmul %255, %257, %cst_149 {dimension_numbers = #tpu.dot_dimension_numbers<[1], [0], [0], [1], [0, 0, 1, 1], [], []>} : vector<1x128xf32>, vector<128x128xf32>, vector<1x128xf32> -> vector<1x128xf32>
    %259 = arith.addf %247, %258 : vector<1x128xf32>
    %c7_i32_150 = arith.constant 7 : i32
    %260 = vector.broadcast %c7_i32_150 : i32 to vector<9x1xi32>
    %261 = arith.cmpi eq, %0, %260 : vector<9x1xi32>
    %cst_151 = arith.constant 0.000000e+00 : f32
    %262 = vector.shape_cast %261 : vector<9x1xi1> to vector<9x1xi1>
    %263 = vector.broadcast %262 : vector<9x1xi1> to vector<9x128xi1>
    %264 = vector.broadcast %cst_151 : f32 to vector<9x128xf32>
    %265 = arith.select %263, %169, %264 : vector<9x128xi1>, vector<9x128xf32>
    %cst_152 = arith.constant dense<0.000000e+00> : vector<128xf32>
    %266 = vector.multi_reduction <add>, %265, %cst_152 [0] : vector<9x128xf32> to vector<128xf32>
    %267 = vector.shape_cast %266 : vector<128xf32> to vector<1x128xf32>
    %c7_153 = arith.constant 7 : index
    %c0_154 = arith.constant 0 : index
    %c0_155 = arith.constant 0 : index
    %268 = vector.load %arg5[%c7_153, %c0_154, %c0_155] : memref<9x128x128xf32, #tpu.memory_space<vmem>>, vector<1x128x128xf32>
    %269 = vector.shape_cast %268 : vector<1x128x128xf32> to vector<128x128xf32>
    %cst_156 = arith.constant dense<0.000000e+00> : vector<1x128xf32>
    %270 = tpu.matmul %267, %269, %cst_156 {dimension_numbers = #tpu.dot_dimension_numbers<[1], [0], [0], [1], [0, 0, 1, 1], [], []>} : vector<1x128xf32>, vector<128x128xf32>, vector<1x128xf32> -> vector<1x128xf32>
    %271 = arith.addf %259, %270 : vector<1x128xf32>
    %c8_i32_157 = arith.constant 8 : i32
    %272 = vector.broadcast %c8_i32_157 : i32 to vector<9x1xi32>
    %273 = arith.cmpi eq, %0, %272 : vector<9x1xi32>
    %cst_158 = arith.constant 0.000000e+00 : f32
    %274 = vector.shape_cast %273 : vector<9x1xi1> to vector<9x1xi1>
    %275 = vector.broadcast %274 : vector<9x1xi1> to vector<9x128xi1>
    %276 = vector.broadcast %cst_158 : f32 to vector<9x128xf32>
    %277 = arith.select %275, %169, %276 : vector<9x128xi1>, vector<9x128xf32>
    %cst_159 = arith.constant dense<0.000000e+00> : vector<128xf32>
    %278 = vector.multi_reduction <add>, %277, %cst_159 [0] : vector<9x128xf32> to vector<128xf32>
    %279 = vector.shape_cast %278 : vector<128xf32> to vector<1x128xf32>
    %c8_160 = arith.constant 8 : index
    %c0_161 = arith.constant 0 : index
    %c0_162 = arith.constant 0 : index
    %280 = vector.load %arg5[%c8_160, %c0_161, %c0_162] : memref<9x128x128xf32, #tpu.memory_space<vmem>>, vector<1x128x128xf32>
    %281 = vector.shape_cast %280 : vector<1x128x128xf32> to vector<128x128xf32>
    %cst_163 = arith.constant dense<0.000000e+00> : vector<1x128xf32>
    %282 = tpu.matmul %279, %281, %cst_163 {dimension_numbers = #tpu.dot_dimension_numbers<[1], [0], [0], [1], [0, 0, 1, 1], [], []>} : vector<1x128xf32>, vector<128x128xf32>, vector<1x128xf32> -> vector<1x128xf32>
    %283 = arith.addf %271, %282 : vector<1x128xf32>
    %c1_164 = arith.constant 1 : index
    %c0_165 = arith.constant 0 : index
    %c0_166 = arith.constant 0 : index
    %284 = vector.load %arg7[%c1_164, %c0_165, %c0_166] : memref<2x1x128xf32, #tpu.memory_space<vmem>>, vector<1x1x128xf32>
    %285 = vector.shape_cast %284 : vector<1x1x128xf32> to vector<1x128xf32>
    %286 = vector.shape_cast %283 : vector<1x128xf32> to vector<1x1x128xf32>
    tpu.vector_store %arg7[%c1_164, %c0_165, %c0_166], %286 {strides = array<i32>} : memref<2x1x128xf32, #tpu.memory_space<vmem>>, vector<1x1x128xf32>,
    return
  }
}

</mosaic_0001>

<llo_original>
// kernel: _lambda_.5
$region0: #{_lambda_.5}
  #allocation0 [shape = 'u32[]', space=smem, size = 0x4, offset = 0x4, fixed_abs, tag = 'smem constant byte address 0x4 - core index']
  #allocation1 [shape = 'u32[72,128]{1,0:T(1,128)}', space=vmem, size = 0x9000, scoped, tag = 'internal scratch']
  %s0 = inlined_call_operand.vmem [shape: bf16[512,128], index: 0, kind: input, shape index: {}]
  %s1 = inlined_call_operand.vmem [shape: bf16[128,128], index: 1, kind: input, shape index: {}]
  %s2 = inlined_call_operand.vmem [shape: f32[1,128], index: 2, kind: input, shape index: {}]
  %s3 = inlined_call_operand.vmem [shape: bf16[512,128], index: 3, kind: output, shape index: {}]
  %s4 = sld [smem:[#allocation0]]
  $region45: #{_lambda_.5} parent=0
    _
  %s6 = ssub.s32 1, %s4
  %s7 = scalar_select 0, %s6, %s4
  loop: start=0, step=1, limit=4
  $region2: #{_lambda_.5} parent=0 // loop_pre_header
    _
  $region3: #{_lambda_.5} parent=0 // loop_header
    %s9 = sphi 0, %s13
    %p10 = scmp.ge.s32.totalorder %s9, 4
    %s16 = sphi 0, %s28
    %s17 = sphi 0, %s24
    %s18 = sphi 0, %s16
    %s19 = sphi 0, %s17
    %s20 = sphi 0, %s18
    %s21 = sphi 0, %s19
    %s31 = sphi 0, %s33
    %s34 = sphi 0, %s31
    %s35 = sphi 0, %s34
    %s51 = sphi 0, %s35
    %s57 = sphi 0, %s59
    %s60 = sphi 0, %s57
    %s61 = sphi 0, %s60
    %s77 = sphi 0, %s61
    %s83 = sphi 0, %s85
    %s86 = sphi 0, %s83
    %s87 = sphi 0, %s86
    %s103 = sphi 0, %s87
    %s111 = sphi 0, %s113
    %s114 = sphi 0, %s111
    %s115 = sphi 0, %s114
    %s131 = sphi 0, %s115
  $region4: #{_lambda_.5} parent=0 // loop_header_branch
    %12 = sbr.rel (%p10) target = $region8
  $region5: #{_lambda_.5} parent=0 // loop_body
    %s14 = ssub.s32 %s9, 1
    %s15 = ssub.s32 %s9, 2
    %s22 = sadd.s32 1, %s17
    %p23 = scmp.ge.s32.totalorder %s22, 1
    %s24 = scalar_select %p23, 0, %s22
    %s25 = sadd.s32 1, %s16
    %s26 = scalar_select %p23, %s25, %s16
    %p27 = scmp.ge.s32.totalorder %s26, 2
    %s28 = scalar_select %p27, 0, %s26
    %s29 = ssub.s32 %s16, %s28
    %p30 = scmp.eq.s32.totalorder %s29, 0
    %s32 = sadd.s32 %s31, 1
    %s33 = scalar_select %p30, %s31, %s32
    %p36 = pneg %p30
    %p37 = scmp.eq.s32.totalorder %s9, 1
    %p38 = por %p36, %p37
    %p39 = scmp.ne.s32.totalorder %s31, %s34
    %p40 = scmp.eq.s32.totalorder %s9, 0
    %p41 = por %p39, %p40
    %p42 = scmp.ne.s32.totalorder %s31, %s34
    %p43 = scmp.eq.s32.totalorder %s14, 1
    %p44 = por %p42, %p43
    %p45 = scmp.ne.s32.totalorder %s34, %s35
    %p46 = scmp.eq.s32.totalorder %s14, 0
    %p47 = por %p45, %p46
    %p48 = scmp.ne.s32.totalorder %s34, %s35
    %p49 = scmp.eq.s32.totalorder %s15, 1
    %p50 = por %p48, %p49
    %p52 = scmp.ne.s32.totalorder %s35, %s51
    %p53 = scmp.eq.s32.totalorder %s15, 0
    %p54 = por %p52, %p53
    %s55 = ssub.s32 %s17, %s24
    %p56 = scmp.eq.s32.totalorder %s55, 0
    %s58 = sadd.s32 %s57, 1
    %s59 = scalar_select %p56, %s57, %s58
    %p62 = pneg %p56
    %p63 = scmp.eq.s32.totalorder %s9, 1
    %p64 = por %p62, %p63
    %p65 = scmp.ne.s32.totalorder %s57, %s60
    %p66 = scmp.eq.s32.totalorder %s9, 0
    %p67 = por %p65, %p66
    %p68 = scmp.ne.s32.totalorder %s57, %s60
    %p69 = scmp.eq.s32.totalorder %s14, 1
    %p70 = por %p68, %p69
    %p71 = scmp.ne.s32.totalorder %s60, %s61
    %p72 = scmp.eq.s32.totalorder %s14, 0
    %p73 = por %p71, %p72
    %p74 = scmp.ne.s32.totalorder %s60, %s61
    %p75 = scmp.eq.s32.totalorder %s15, 1
    %p76 = por %p74, %p75
    %p78 = scmp.ne.s32.totalorder %s61, %s77
    %p79 = scmp.eq.s32.totalorder %s15, 0
    %p80 = por %p78, %p79
    %s81 = ssub.s32 %s17, %s24
    %p82 = scmp.eq.s32.totalorder %s81, 0
    %s84 = sadd.s32 %s83, 1
    %s85 = scalar_select %p82, %s83, %s84
    %p88 = pneg %p82
    %p89 = scmp.eq.s32.totalorder %s9, 1
    %p90 = por %p88, %p89
    %p91 = scmp.ne.s32.totalorder %s83, %s86
    %p92 = scmp.eq.s32.totalorder %s9, 0
    %p93 = por %p91, %p92
    %p94 = scmp.ne.s32.totalorder %s83, %s86
    %p95 = scmp.eq.s32.totalorder %s14, 1
    %p96 = por %p94, %p95
    %p97 = scmp.ne.s32.totalorder %s86, %s87
    %p98 = scmp.eq.s32.totalorder %s14, 0
    %p99 = por %p97, %p98
    %p100 = scmp.ne.s32.totalorder %s86, %s87
    %p101 = scmp.eq.s32.totalorder %s15, 1
    %p102 = por %p100, %p101
    %p104 = scmp.ne.s32.totalorder %s87, %s103
    %p105 = scmp.eq.s32.totalorder %s15, 0
    %p106 = por %p104, %p105
    %s107 = ssub.s32 %s16, %s28
    %s108 = ssub.s32 %s17, %s24
    %s109 = sor.u32 %s107, %s108
    %p110 = scmp.eq.s32.totalorder %s109, 0
    %s112 = sadd.s32 %s111, 1
    %s113 = scalar_select %p110, %s111, %s112
    %p116 = pneg %p110
    %p117 = scmp.eq.s32.totalorder %s9, 1
    %p118 = por %p116, %p117
    %p119 = scmp.ne.s32.totalorder %s111, %s114
    %p120 = scmp.eq.s32.totalorder %s9, 0
    %p121 = por %p119, %p120
    %p122 = scmp.ne.s32.totalorder %s111, %s114
    %p123 = scmp.eq.s32.totalorder %s14, 1
    %p124 = por %p122, %p123
    %p125 = scmp.ne.s32.totalorder %s114, %s115
    %p126 = scmp.eq.s32.totalorder %s14, 0
    %p127 = por %p125, %p126
    %p128 = scmp.ne.s32.totalorder %s114, %s115
    %p129 = scmp.eq.s32.totalorder %s15, 1
    %p130 = por %p128, %p129
    %p132 = scmp.ne.s32.totalorder %s115, %s131
    %p133 = scmp.eq.s32.totalorder %s15, 0
    %p134 = por %p132, %p133
    %p135 = scmp.le.s32.totalorder 1, %s9
    %p136 = scmp.lt.s32.totalorder %s9, 3
    %p137 = pnand %p135, %p136
    %p138 = pneg %p137
    // Predicated region
    $region9: #{_lambda_.5} parent=5 // pred_check
      _
    $region10: #{_lambda_.5} parent=5 // pred_check_branch
      %140 = sbr.rel (%p137) target = $region12
    $region11: #{_lambda_.5} parent=5 // pred_region
      %s141 = ssub.s32 %s9, 1
      // Predicated region
      $region13: #{_lambda_.5} parent=11 // pred_check
        %p142 = pneg %p73
      $region14: #{_lambda_.5} parent=11 // pred_check_branch
        %144 = sbr.rel (%p142) target = $region16
      $region15: #{_lambda_.5} parent=11 // pred_region
        %p145 = scmp.lt.s32.totalorder %s19, 0
        %s146 = scalar_select %p145, %s19, 0
        %s147 = smul.addr %s146, 4
        %s148 = scalar_lea.vmem %s1, %s147
      $region16: #{_lambda_.5} parent=11 // pred_fallthru
        _
      // Predicated region
      $region17: #{_lambda_.5} parent=11 // pred_check
        %p149 = pneg %p99
      $region18: #{_lambda_.5} parent=11 // pred_check_branch
        %151 = sbr.rel (%p149) target = $region20
      $region19: #{_lambda_.5} parent=11 // pred_region
        %p152 = scmp.lt.s32.totalorder %s19, 0
        %s153 = scalar_select %p152, %s19, 0
        %s154 = scalar_lea.vmem %s2, %s153
      $region20: #{_lambda_.5} parent=11 // pred_fallthru
        _
    $region12: #{_lambda_.5} parent=5 // pred_fallthru
      _
    %p155 = scmp.lt.s32.totalorder %s9, 2
    // Predicated region
    $region21: #{_lambda_.5} parent=5 // pred_check
      %p156 = pneg %p155
    $region22: #{_lambda_.5} parent=5 // pred_check_branch
      %158 = sbr.rel (%p156) target = $region24
    $region23: #{_lambda_.5} parent=5 // pred_region
      // Predicated region
      $region25: #{_lambda_.5} parent=23 // pred_check
        %p159 = pneg %p41
      $region26: #{_lambda_.5} parent=23 // pred_check_branch
        %161 = sbr.rel (%p159) target = $region28
      $region27: #{_lambda_.5} parent=23 // pred_region
        %s162 = smul.u32 32, %s16
        %p163 = scmp.lt.s32.totalorder %s162, 63
        %s164 = scalar_select %p163, %s162, 63
        %s165 = smul.addr %s164, 4
        %s166 = scalar_lea.vmem %s0, %s165
        %s167 = smul.u32 32, %s16
      $region28: #{_lambda_.5} parent=23 // pred_fallthru
        _
    $region24: #{_lambda_.5} parent=5 // pred_fallthru
      _
    %p168 = scmp.le.s32.totalorder 1, %s9
    %p169 = scmp.lt.s32.totalorder %s9, 3
    %p170 = pnand %p168, %p169
    %p171 = pneg %p170
    // Predicated region
    $region29: #{_lambda_.5} parent=5 // pred_check
      _
    $region30: #{_lambda_.5} parent=5 // pred_check_branch
      %173 = sbr.rel (%p170) target = $region32
    $region31: #{_lambda_.5} parent=5 // pred_region
      %s174 = ssub.s32 %s9, 1
      %s175 = smul.u32 32, %s18
      %p176 = scmp.lt.s32.totalorder %s175, 63
      %s177 = scalar_select %p176, %s175, 63
      %s178 = smul.addr %s177, 4
      %s179 = scalar_lea.vmem %s0, %s178
      %p180 = pneg %p47
      %p181 = pneg %p44
      %p182 = scmp.lt.s32.totalorder %s19, 0
      %s183 = scalar_select %p182, %s19, 0
      %s184 = smul.addr %s183, 4
      %s185 = scalar_lea.vmem %s1, %s184
      %p186 = pneg %p73
      %p187 = pneg %p70
      %p188 = scmp.lt.s32.totalorder %s19, 0
      %s189 = scalar_select %p188, %s19, 0
      %s190 = scalar_lea.vmem %s2, %s189
      %p191 = pneg %p99
      %p192 = pneg %p96
      %p193 = pneg %p127
      %p194 = pneg %p124
      %s195 = smul.u32 32, %s18
      %p196 = scmp.lt.s32.totalorder %s195, 63
      %s197 = scalar_select %p196, %s195, 63
      %p198 = scmp.lt.s32.totalorder %s19, 0
      %s199 = scalar_select %p198, %s19, 0
      %s200 = sadd.s32 %s199, %s197
      %s201 = smul.addr %s200, 4
      %s202 = scalar_lea.vmem %s3, %s201
      %s203 = smul.u32 32, %s18
      %p204 = scmp.lt.s32.totalorder %s203, 63
      %s205 = scalar_select %p204, %s203, 63
      %s206 = smul.addr %s205, 4
      %s207 = scalar_lea.vmem %s0, %s206
      %s208 = smul.u32 32, %s18
      %p209 = scmp.lt.s32.totalorder %s19, 0
      %s210 = scalar_select %p209, %s19, 0
      %s211 = smul.addr %s210, 4
      %s212 = scalar_lea.vmem %s1, %s211
      %p213 = scmp.lt.s32.totalorder %s19, 0
      %s214 = scalar_select %p213, %s19, 0
      %s215 = scalar_lea.vmem %s2, %s214
      %s216 = smul.u32 32, %s18
      %p217 = scmp.lt.s32.totalorder %s216, 63
      %s218 = scalar_select %p217, %s216, 63
      %p219 = scmp.lt.s32.totalorder %s19, 0
      %s220 = scalar_select %p219, %s19, 0
      %s221 = sadd.s32 %s220, %s218
      %s222 = smul.addr %s221, 4
      %s223 = scalar_lea.vmem %s3, %s222
      %s224 = smul.u32 32, %s18
      %v225 = vld [vmem:[%s207] sm:$0xf]
      %v226 = vld [vmem:[%s207 + $0x4] sm:$0xf]
      %v227 = vld [vmem:[%s207 + $0x8] sm:$0xf]
      %v228 = vld [vmem:[%s207 + $0xc] sm:$0xf]
      %v229 = vld [vmem:[%s207 + $0x10] sm:$0xf]
      %v230 = vld [vmem:[%s207 + $0x14] sm:$0xf]
      %v231 = vld [vmem:[%s207 + $0x18] sm:$0xf]
      %v232 = vld [vmem:[%s207 + $0x1c] sm:$0xf]
      %v233 = vld [vmem:[%s207 + $0x20] sm:$0xf]
      %v234 = vld [vmem:[%s207 + $0x24] sm:$0xf]
      %v235 = vld [vmem:[%s207 + $0x28] sm:$0xf]
      %v236 = vld [vmem:[%s207 + $0x2c] sm:$0xf]
      %v237 = vld [vmem:[%s207 + $0x30] sm:$0xf]
      %v238 = vld [vmem:[%s207 + $0x34] sm:$0xf]
      %v239 = vld [vmem:[%s207 + $0x38] sm:$0xf]
      %v240 = vld [vmem:[%s207 + $0x3c] sm:$0xf]
      %v241 = vld [vmem:[%s207 + $0x40] sm:$0xf]
      %v242 = vld [vmem:[%s207 + $0x44] sm:$0xf]
      %v243 = vld [vmem:[%s207 + $0x48] sm:$0xf]
      %v244 = vld [vmem:[%s207 + $0x4c] sm:$0xf]
      %v245 = vld [vmem:[%s207 + $0x50] sm:$0xf]
      %v246 = vld [vmem:[%s207 + $0x54] sm:$0xf]
      %v247 = vld [vmem:[%s207 + $0x58] sm:$0xf]
      %v248 = vld [vmem:[%s207 + $0x5c] sm:$0xf]
      %v249 = vld [vmem:[%s207 + $0x60] sm:$0xf]
      %v250 = vld [vmem:[%s207 + $0x64] sm:$0xf]
      %v251 = vld [vmem:[%s207 + $0x68] sm:$0xf]
      %v252 = vld [vmem:[%s207 + $0x6c] sm:$0xf]
      %v253 = vld [vmem:[%s207 + $0x70] sm:$0xf]
      %v254 = vld [vmem:[%s207 + $0x74] sm:$0xf]
      %v255 = vld [vmem:[%s207 + $0x78] sm:$0xf]
      %v256 = vld [vmem:[%s207 + $0x7c] sm:$0xf]
      %v257 = vld [vmem:[%s212] sm:$0xf]
      %v258 = vld [vmem:[%s212 + $0x4] sm:$0xf]
      %v259 = vld [vmem:[%s212 + $0x8] sm:$0xf]
      %v260 = vld [vmem:[%s212 + $0xc] sm:$0xf]
      %v261 = vld [vmem:[%s212 + $0x10] sm:$0xf]
      %v262 = vld [vmem:[%s212 + $0x14] sm:$0xf]
      %v263 = vld [vmem:[%s212 + $0x18] sm:$0xf]
      %v264 = vld [vmem:[%s212 + $0x1c] sm:$0xf]
      %v265 = vld [vmem:[%s212 + $0x20] sm:$0xf]
      %v266 = vld [vmem:[%s212 + $0x24] sm:$0xf]
      %v267 = vld [vmem:[%s212 + $0x28] sm:$0xf]
      %v268 = vld [vmem:[%s212 + $0x2c] sm:$0xf]
      %v269 = vld [vmem:[%s212 + $0x30] sm:$0xf]
      %v270 = vld [vmem:[%s212 + $0x34] sm:$0xf]
      %v271 = vld [vmem:[%s212 + $0x38] sm:$0xf]
      %v272 = vld [vmem:[%s212 + $0x3c] sm:$0xf]
      %v273 = vld [vmem:[%s215] sm:$0x1]
      %v275 = vperm.slane %v273, 0
      %v309 = vunpack.c.l.b16 %v225
      %v310 = vunpack.c.l.b16 %v226
      %v311 = vunpack.c.l.b16 %v227
      %v312 = vunpack.c.l.b16 %v228
      %v313 = vunpack.c.l.b16 %v229
      %v314 = vunpack.c.l.b16 %v230
      %v315 = vunpack.c.l.b16 %v231
      %v316 = vunpack.c.l.b16 %v232
      %v317 = vunpack.c.l.b16 %v233
      %v318 = vunpack.c.l.b16 %v234
      %v319 = vunpack.c.l.b16 %v235
      %v320 = vunpack.c.l.b16 %v236
      %v321 = vunpack.c.l.b16 %v237
      %v322 = vunpack.c.l.b16 %v238
      %v323 = vunpack.c.l.b16 %v239
      %v324 = vunpack.c.l.b16 %v240
      %v325 = vunpack.c.l.b16 %v241
      %v326 = vunpack.c.l.b16 %v242
      %v327 = vunpack.c.l.b16 %v243
      %v328 = vunpack.c.l.b16 %v244
      %v329 = vunpack.c.l.b16 %v245
      %v330 = vunpack.c.l.b16 %v246
      %v331 = vunpack.c.l.b16 %v247
      %v332 = vunpack.c.l.b16 %v248
      %v333 = vunpack.c.l.b16 %v249
      %v334 = vunpack.c.l.b16 %v250
      %v335 = vunpack.c.l.b16 %v251
      %v336 = vunpack.c.l.b16 %v252
      %v337 = vunpack.c.l.b16 %v253
      %v338 = vunpack.c.l.b16 %v254
      %v339 = vunpack.c.l.b16 %v255
      %v340 = vunpack.c.l.b16 %v256
      %v341 = vpack.c.b16 %v310, %v309
      %v342 = vpack.c.b16 %v312, %v311
      %v343 = vpack.c.b16 %v314, %v313
      %v344 = vpack.c.b16 %v316, %v315
      %v345 = vpack.c.b16 %v318, %v317
      %v346 = vpack.c.b16 %v320, %v319
      %v347 = vpack.c.b16 %v322, %v321
      %v348 = vpack.c.b16 %v324, %v323
      %v349 = vpack.c.b16 %v326, %v325
      %v350 = vpack.c.b16 %v328, %v327
      %v351 = vpack.c.b16 %v330, %v329
      %v352 = vpack.c.b16 %v332, %v331
      %v353 = vpack.c.b16 %v334, %v333
      %v354 = vpack.c.b16 %v336, %v335
      %v355 = vpack.c.b16 %v338, %v337
      %v356 = vpack.c.b16 %v340, %v339
      %v389 = vunpack.c.l.b16 %v257
      %v390 = vunpack.c.l.b16 %v258
      %v391 = vunpack.c.l.b16 %v259
      %v392 = vunpack.c.l.b16 %v260
      %v393 = vunpack.c.l.b16 %v261
      %v394 = vunpack.c.l.b16 %v262
      %v395 = vunpack.c.l.b16 %v263
      %v396 = vunpack.c.l.b16 %v264
      %v397 = vunpack.c.l.b16 %v265
      %v398 = vunpack.c.l.b16 %v266
      %v399 = vunpack.c.l.b16 %v267
      %v400 = vunpack.c.l.b16 %v268
      %v401 = vunpack.c.l.b16 %v269
      %v402 = vunpack.c.l.b16 %v270
      %v403 = vunpack.c.l.b16 %v271
      %v404 = vunpack.c.l.b16 %v272
      %v405 = vpack.c.b16 %v390, %v389
      %v406 = vpack.c.b16 %v392, %v391
      %v407 = vpack.c.b16 %v394, %v393
      %v408 = vpack.c.b16 %v396, %v395
      %v409 = vpack.c.b16 %v398, %v397
      %v410 = vpack.c.b16 %v400, %v399
      %v411 = vpack.c.b16 %v402, %v401
      %v412 = vpack.c.b16 %v404, %v403
      %421 = vmatpush.bf16.msra.mxu0 %v412
      %422 = vmatpush.bf16.msra.mxu0 %v411
      %423 = vmatpush.bf16.msra.mxu0 %v410
      %424 = vmatpush.bf16.msra.mxu0 %v409
      %425 = vmatpush.bf16.msra.mxu0 %v408
      %426 = vmatpush.bf16.msra.mxu0 %v407
      %427 = vmatpush.bf16.msra.mxu0 %v406
      %428 = vmatpush.bf16.msra.mxu0 %v405
      %429 = vmatmul.bf16.gmra.mxu0 %v341
      %v430 = vpop.f32.mrf.mxu0
      %v431 = vadd.f32 %v275, %v430
      %v432 = vpop.f32.mrf.mxu0
      %v433 = vadd.f32 %v275, %v432
      %434 = vmatmul.bf16.gmra.mxu0 %v342
      %v435 = vpop.f32.mrf.mxu0
      %v436 = vadd.f32 %v275, %v435
      %v437 = vpop.f32.mrf.mxu0
      %v438 = vadd.f32 %v275, %v437
      %439 = vmatmul.bf16.gmra.mxu0 %v343
      %v440 = vpop.f32.mrf.mxu0
      %v441 = vadd.f32 %v275, %v440
      %v442 = vpop.f32.mrf.mxu0
      %v443 = vadd.f32 %v275, %v442
      %444 = vmatmul.bf16.gmra.mxu0 %v344
      %v445 = vpop.f32.mrf.mxu0
      %v446 = vadd.f32 %v275, %v445
      %v447 = vpop.f32.mrf.mxu0
      %v448 = vadd.f32 %v275, %v447
      %449 = vmatmul.bf16.gmra.mxu0 %v345
      %v450 = vpop.f32.mrf.mxu0
      %v451 = vadd.f32 %v275, %v450
      %v452 = vpop.f32.mrf.mxu0
      %v453 = vadd.f32 %v275, %v452
      %454 = vmatmul.bf16.gmra.mxu0 %v346
      %v455 = vpop.f32.mrf.mxu0
      %v456 = vadd.f32 %v275, %v455
      %v457 = vpop.f32.mrf.mxu0
      %v458 = vadd.f32 %v275, %v457
      %459 = vmatmul.bf16.gmra.mxu0 %v347
      %v460 = vpop.f32.mrf.mxu0
      %v461 = vadd.f32 %v275, %v460
      %v462 = vpop.f32.mrf.mxu0
      %v463 = vadd.f32 %v275, %v462
      %464 = vmatmul.bf16.gmra.mxu0 %v348
      %v465 = vpop.f32.mrf.mxu0
      %v466 = vadd.f32 %v275, %v465
      %v467 = vpop.f32.mrf.mxu0
      %v468 = vadd.f32 %v275, %v467
      %469 = vmatmul.bf16.gmra.mxu0 %v349
      %v470 = vpop.f32.mrf.mxu0
      %v471 = vadd.f32 %v275, %v470
      %v472 = vpop.f32.mrf.mxu0
      %v473 = vadd.f32 %v275, %v472
      %474 = vmatmul.bf16.gmra.mxu0 %v350
      %v475 = vpop.f32.mrf.mxu0
      %v476 = vadd.f32 %v275, %v475
      %v477 = vpop.f32.mrf.mxu0
      %v478 = vadd.f32 %v275, %v477
      %479 = vmatmul.bf16.gmra.mxu0 %v351
      %v480 = vpop.f32.mrf.mxu0
      %v481 = vadd.f32 %v275, %v480
      %v482 = vpop.f32.mrf.mxu0
      %v483 = vadd.f32 %v275, %v482
      %484 = vmatmul.bf16.gmra.mxu0 %v352
      %v485 = vpop.f32.mrf.mxu0
      %v486 = vadd.f32 %v275, %v485
      %v487 = vpop.f32.mrf.mxu0
      %v488 = vadd.f32 %v275, %v487
      %489 = vmatmul.bf16.gmra.mxu0 %v353
      %v490 = vpop.f32.mrf.mxu0
      %v491 = vadd.f32 %v275, %v490
      %v492 = vpop.f32.mrf.mxu0
      %v493 = vadd.f32 %v275, %v492
      %494 = vmatmul.bf16.gmra.mxu0 %v354
      %v495 = vpop.f32.mrf.mxu0
      %v496 = vadd.f32 %v275, %v495
      %v497 = vpop.f32.mrf.mxu0
      %v498 = vadd.f32 %v275, %v497
      %499 = vmatmul.bf16.gmra.mxu0 %v355
      %v500 = vpop.f32.mrf.mxu0
      %v501 = vadd.f32 %v275, %v500
      %v502 = vpop.f32.mrf.mxu0
      %v503 = vadd.f32 %v275, %v502
      %504 = vmatmul.bf16.gmra.mxu0 %v356
      %v505 = vpop.f32.mrf.mxu0
      %v506 = vadd.f32 %v275, %v505
      %v507 = vpop.f32.mrf.mxu0
      %v508 = vadd.f32 %v275, %v507
      %509 = vdwg.mxu0
      %vm510 = vcmp.ge.f32.partialorder %v431, 0.0
      %vm511 = vcmp.ge.f32.partialorder %v433, 0.0
      %vm512 = vcmp.ge.f32.partialorder %v436, 0.0
      %vm513 = vcmp.ge.f32.partialorder %v438, 0.0
      %vm514 = vcmp.ge.f32.partialorder %v441, 0.0
      %vm515 = vcmp.ge.f32.partialorder %v443, 0.0
      %vm516 = vcmp.ge.f32.partialorder %v446, 0.0
      %vm517 = vcmp.ge.f32.partialorder %v448, 0.0
      %vm518 = vcmp.ge.f32.partialorder %v451, 0.0
      %vm519 = vcmp.ge.f32.partialorder %v453, 0.0
      %vm520 = vcmp.ge.f32.partialorder %v456, 0.0
      %vm521 = vcmp.ge.f32.partialorder %v458, 0.0
      %vm522 = vcmp.ge.f32.partialorder %v461, 0.0
      %vm523 = vcmp.ge.f32.partialorder %v463, 0.0
      %vm524 = vcmp.ge.f32.partialorder %v466, 0.0
      %vm525 = vcmp.ge.f32.partialorder %v468, 0.0
      %vm526 = vcmp.ge.f32.partialorder %v471, 0.0
      %vm527 = vcmp.ge.f32.partialorder %v473, 0.0
      %vm528 = vcmp.ge.f32.partialorder %v476, 0.0
      %vm529 = vcmp.ge.f32.partialorder %v478, 0.0
      %vm530 = vcmp.ge.f32.partialorder %v481, 0.0
      %vm531 = vcmp.ge.f32.partialorder %v483, 0.0
      %vm532 = vcmp.ge.f32.partialorder %v486, 0.0
      %vm533 = vcmp.ge.f32.partialorder %v488, 0.0
      %vm534 = vcmp.ge.f32.partialorder %v491, 0.0
      %vm535 = vcmp.ge.f32.partialorder %v493, 0.0
      %vm536 = vcmp.ge.f32.partialorder %v496, 0.0
      %vm537 = vcmp.ge.f32.partialorder %v498, 0.0
      %vm538 = vcmp.ge.f32.partialorder %v501, 0.0
      %vm539 = vcmp.ge.f32.partialorder %v503, 0.0
      %vm540 = vcmp.ge.f32.partialorder %v506, 0.0
      %vm541 = vcmp.ge.f32.partialorder %v508, 0.0
      %v542 = vmul.f32 %v431, 0.2
      %v543 = vmul.f32 %v433, 0.2
      %v544 = vmul.f32 %v436, 0.2
      %v545 = vmul.f32 %v438, 0.2
      %v546 = vmul.f32 %v441, 0.2
      %v547 = vmul.f32 %v443, 0.2
      %v548 = vmul.f32 %v446, 0.2
      %v549 = vmul.f32 %v448, 0.2
      %v550 = vmul.f32 %v451, 0.2
      %v551 = vmul.f32 %v453, 0.2
      %v552 = vmul.f32 %v456, 0.2
      %v553 = vmul.f32 %v458, 0.2
      %v554 = vmul.f32 %v461, 0.2
      %v555 = vmul.f32 %v463, 0.2
      %v556 = vmul.f32 %v466, 0.2
      %v557 = vmul.f32 %v468, 0.2
      %v558 = vmul.f32 %v471, 0.2
      %v559 = vmul.f32 %v473, 0.2
      %v560 = vmul.f32 %v476, 0.2
      %v561 = vmul.f32 %v478, 0.2
      %v562 = vmul.f32 %v481, 0.2
      %v563 = vmul.f32 %v483, 0.2
      %v564 = vmul.f32 %v486, 0.2
      %v565 = vmul.f32 %v488, 0.2
      %v566 = vmul.f32 %v491, 0.2
      %v567 = vmul.f32 %v493, 0.2
      %v568 = vmul.f32 %v496, 0.2
      %v569 = vmul.f32 %v498, 0.2
      %v570 = vmul.f32 %v501, 0.2
      %v571 = vmul.f32 %v503, 0.2
      %v572 = vmul.f32 %v506, 0.2
      %v573 = vmul.f32 %v508, 0.2
      %v574 = vsel %vm510, %v431, %v542
      %v575 = vsel %vm511, %v433, %v543
      %v576 = vsel %vm512, %v436, %v544
      %v577 = vsel %vm513, %v438, %v545
      %v578 = vsel %vm514, %v441, %v546
      %v579 = vsel %vm515, %v443, %v547
      %v580 = vsel %vm516, %v446, %v548
      %v581 = vsel %vm517, %v448, %v549
      %v582 = vsel %vm518, %v451, %v550
      %v583 = vsel %vm519, %v453, %v551
      %v584 = vsel %vm520, %v456, %v552
      %v585 = vsel %vm521, %v458, %v553
      %v586 = vsel %vm522, %v461, %v554
      %v587 = vsel %vm523, %v463, %v555
      %v588 = vsel %vm524, %v466, %v556
      %v589 = vsel %vm525, %v468, %v557
      %v590 = vsel %vm526, %v471, %v558
      %v591 = vsel %vm527, %v473, %v559
      %v592 = vsel %vm528, %v476, %v560
      %v593 = vsel %vm529, %v478, %v561
      %v594 = vsel %vm530, %v481, %v562
      %v595 = vsel %vm531, %v483, %v563
      %v596 = vsel %vm532, %v486, %v564
      %v597 = vsel %vm533, %v488, %v565
      %v598 = vsel %vm534, %v491, %v566
      %v599 = vsel %vm535, %v493, %v567
      %v600 = vsel %vm536, %v496, %v568
      %v601 = vsel %vm537, %v498, %v569
      %v602 = vsel %vm538, %v501, %v570
      %v603 = vsel %vm539, %v503, %v571
      %v604 = vsel %vm540, %v506, %v572
      %v605 = vsel %vm541, %v508, %v573
      %v606 = vpack.c.bf16 %v574, %v574
      %v607 = vpack.c.bf16 %v575, %v575
      %v608 = vpack.c.bf16 %v576, %v576
      %v609 = vpack.c.bf16 %v577, %v577
      %v610 = vpack.c.bf16 %v578, %v578
      %v611 = vpack.c.bf16 %v579, %v579
      %v612 = vpack.c.bf16 %v580, %v580
      %v613 = vpack.c.bf16 %v581, %v581
      %v614 = vpack.c.bf16 %v582, %v582
      %v615 = vpack.c.bf16 %v583, %v583
      %v616 = vpack.c.bf16 %v584, %v584
      %v617 = vpack.c.bf16 %v585, %v585
      %v618 = vpack.c.bf16 %v586, %v586
      %v619 = vpack.c.bf16 %v587, %v587
      %v620 = vpack.c.bf16 %v588, %v588
      %v621 = vpack.c.bf16 %v589, %v589
      %v622 = vpack.c.bf16 %v590, %v590
      %v623 = vpack.c.bf16 %v591, %v591
      %v624 = vpack.c.bf16 %v592, %v592
      %v625 = vpack.c.bf16 %v593, %v593
      %v626 = vpack.c.bf16 %v594, %v594
      %v627 = vpack.c.bf16 %v595, %v595
      %v628 = vpack.c.bf16 %v596, %v596
      %v629 = vpack.c.bf16 %v597, %v597
      %v630 = vpack.c.bf16 %v598, %v598
      %v631 = vpack.c.bf16 %v599, %v599
      %v632 = vpack.c.bf16 %v600, %v600
      %v633 = vpack.c.bf16 %v601, %v601
      %v634 = vpack.c.bf16 %v602, %v602
      %v635 = vpack.c.bf16 %v603, %v603
      %v636 = vpack.c.bf16 %v604, %v604
      %v637 = vpack.c.bf16 %v605, %v605
      %638 = vst [vmem:[%s223] sm:$0xf] %v606
      %639 = vst [vmem:[%s223 + $0x4] sm:$0xf] %v607
      %640 = vst [vmem:[%s223 + $0x8] sm:$0xf] %v608
      %641 = vst [vmem:[%s223 + $0xc] sm:$0xf] %v609
      %642 = vst [vmem:[%s223 + $0x10] sm:$0xf] %v610
      %643 = vst [vmem:[%s223 + $0x14] sm:$0xf] %v611
      %644 = vst [vmem:[%s223 + $0x18] sm:$0xf] %v612
      %645 = vst [vmem:[%s223 + $0x1c] sm:$0xf] %v613
      %646 = vst [vmem:[%s223 + $0x20] sm:$0xf] %v614
      %647 = vst [vmem:[%s223 + $0x24] sm:$0xf] %v615
      %648 = vst [vmem:[%s223 + $0x28] sm:$0xf] %v616
      %649 = vst [vmem:[%s223 + $0x2c] sm:$0xf] %v617
      %650 = vst [vmem:[%s223 + $0x30] sm:$0xf] %v618
      %651 = vst [vmem:[%s223 + $0x34] sm:$0xf] %v619
      %652 = vst [vmem:[%s223 + $0x38] sm:$0xf] %v620
      %653 = vst [vmem:[%s223 + $0x3c] sm:$0xf] %v621
      %654 = vst [vmem:[%s223 + $0x40] sm:$0xf] %v622
      %655 = vst [vmem:[%s223 + $0x44] sm:$0xf] %v623
      %656 = vst [vmem:[%s223 + $0x48] sm:$0xf] %v624
      %657 = vst [vmem:[%s223 + $0x4c] sm:$0xf] %v625
      %658 = vst [vmem:[%s223 + $0x50] sm:$0xf] %v626
      %659 = vst [vmem:[%s223 + $0x54] sm:$0xf] %v627
      %660 = vst [vmem:[%s223 + $0x58] sm:$0xf] %v628
      %661 = vst [vmem:[%s223 + $0x5c] sm:$0xf] %v629
      %662 = vst [vmem:[%s223 + $0x60] sm:$0xf] %v630
      %663 = vst [vmem:[%s223 + $0x64] sm:$0xf] %v631
      %664 = vst [vmem:[%s223 + $0x68] sm:$0xf] %v632
      %665 = vst [vmem:[%s223 + $0x6c] sm:$0xf] %v633
      %666 = vst [vmem:[%s223 + $0x70] sm:$0xf] %v634
      %667 = vst [vmem:[%s223 + $0x74] sm:$0xf] %v635
      %668 = vst [vmem:[%s223 + $0x78] sm:$0xf] %v636
      %669 = vst [vmem:[%s223 + $0x7c] sm:$0xf] %v637
      %s670 = smul.u32 32, %s18
      %p671 = scmp.lt.s32.totalorder %s670, 63
      %s672 = scalar_select %p671, %s670, 63
      %p673 = scmp.lt.s32.totalorder %s19, 0
      %s674 = scalar_select %p673, %s19, 0
      %s675 = sadd.s32 %s674, %s672
      %s676 = smul.addr %s675, 4
      %s677 = scalar_lea.vmem %s3, %s676
      // Predicated region
      $region33: #{_lambda_.5} parent=31 // pred_check
        %p678 = pneg %p124
      $region34: #{_lambda_.5} parent=31 // pred_check_branch
        %680 = sbr.rel (%p678) target = $region36
      $region35: #{_lambda_.5} parent=31 // pred_region
        %s681 = smul.u32 32, %s18
      $region36: #{_lambda_.5} parent=31 // pred_fallthru
        _
    $region32: #{_lambda_.5} parent=5 // pred_fallthru
      _
    %p682 = scmp.le.s32.totalorder 2, %s9
    // Predicated region
    $region37: #{_lambda_.5} parent=5 // pred_check
      %p683 = pneg %p682
    $region38: #{_lambda_.5} parent=5 // pred_check_branch
      %685 = sbr.rel (%p683) target = $region40
    $region39: #{_lambda_.5} parent=5 // pred_region
      %s686 = ssub.s32 %s9, 2
      // Predicated region
      $region41: #{_lambda_.5} parent=39 // pred_check
        %p687 = pneg %p130
      $region42: #{_lambda_.5} parent=39 // pred_check_branch
        %689 = sbr.rel (%p687) target = $region44
      $region43: #{_lambda_.5} parent=39 // pred_region
        %s690 = smul.u32 32, %s20
        %p691 = scmp.lt.s32.totalorder %s690, 63
        %s692 = scalar_select %p691, %s690, 63
        %p693 = scmp.lt.s32.totalorder %s21, 0
        %s694 = scalar_select %p693, %s21, 0
        %s695 = sadd.s32 %s694, %s692
        %s696 = smul.addr %s695, 4
        %s697 = scalar_lea.vmem %s3, %s696
      $region44: #{_lambda_.5} parent=39 // pred_fallthru
        _
    $region40: #{_lambda_.5} parent=5 // pred_fallthru
      _
  $region6: #{_lambda_.5} parent=0 // loop_footer
    %s13 = sadd.s32 1, %s9
  $region7: #{_lambda_.5} parent=0 // loop_footer_branch
    %8 = sbr.rel target = $region3
  $region8: #{_lambda_.5} parent=0 // loop_exit
    _

// kernel: _lambda_.6
$region0: #{_lambda_.6}
  #allocation0 [shape = 'u32[]', space=smem, size = 0x4, offset = 0x4, fixed_abs, tag = 'smem constant byte address 0x4 - core index']
  #allocation1 [shape = 'u32[72,128]{1,0:T(1,128)}', space=vmem, size = 0x9000, scoped, tag = 'internal scratch']
  %s0 = inlined_call_operand.vmem [shape: bf16[128,128], index: 0, kind: input, shape index: {}]
  %s1 = inlined_call_operand.vmem [shape: bf16[128,128], index: 1, kind: input, shape index: {}]
  %s2 = inlined_call_operand.vmem [shape: f32[1,128], index: 2, kind: input, shape index: {}]
  %s3 = inlined_call_operand.vmem [shape: bf16[128,128], index: 3, kind: output, shape index: {}]
  %s4 = sld [smem:[#allocation0]]
  $region45: #{_lambda_.6} parent=0
    _
  %s6 = ssub.s32 1, %s4
  %s7 = scalar_select 0, %s6, %s4
  loop: start=0, step=1, limit=4
  $region2: #{_lambda_.6} parent=0 // loop_pre_header
    _
  $region3: #{_lambda_.6} parent=0 // loop_header
    %s9 = sphi 0, %s13
    %p10 = scmp.ge.s32.totalorder %s9, 4
    %s16 = sphi 0, %s28
    %s17 = sphi 0, %s24
    %s18 = sphi 0, %s16
    %s19 = sphi 0, %s17
    %s20 = sphi 0, %s18
    %s21 = sphi 0, %s19
    %s31 = sphi 0, %s33
    %s34 = sphi 0, %s31
    %s35 = sphi 0, %s34
    %s51 = sphi 0, %s35
    %s57 = sphi 0, %s59
    %s60 = sphi 0, %s57
    %s61 = sphi 0, %s60
    %s77 = sphi 0, %s61
    %s83 = sphi 0, %s85
    %s86 = sphi 0, %s83
    %s87 = sphi 0, %s86
    %s103 = sphi 0, %s87
    %s111 = sphi 0, %s113
    %s114 = sphi 0, %s111
    %s115 = sphi 0, %s114
    %s131 = sphi 0, %s115
  $region4: #{_lambda_.6} parent=0 // loop_header_branch
    %12 = sbr.rel (%p10) target = $region8
  $region5: #{_lambda_.6} parent=0 // loop_body
    %s14 = ssub.s32 %s9, 1
    %s15 = ssub.s32 %s9, 2
    %s22 = sadd.s32 1, %s17
    %p23 = scmp.ge.s32.totalorder %s22, 1
    %s24 = scalar_select %p23, 0, %s22
    %s25 = sadd.s32 1, %s16
    %s26 = scalar_select %p23, %s25, %s16
    %p27 = scmp.ge.s32.totalorder %s26, 2
    %s28 = scalar_select %p27, 0, %s26
    %s29 = ssub.s32 %s16, %s28
    %p30 = scmp.eq.s32.totalorder %s29, 0
    %s32 = sadd.s32 %s31, 1
    %s33 = scalar_select %p30, %s31, %s32
    %p36 = pneg %p30
    %p37 = scmp.eq.s32.totalorder %s9, 1
    %p38 = por %p36, %p37
    %p39 = scmp.ne.s32.totalorder %s31, %s34
    %p40 = scmp.eq.s32.totalorder %s9, 0
    %p41 = por %p39, %p40
    %p42 = scmp.ne.s32.totalorder %s31, %s34
    %p43 = scmp.eq.s32.totalorder %s14, 1
    %p44 = por %p42, %p43
    %p45 = scmp.ne.s32.totalorder %s34, %s35
    %p46 = scmp.eq.s32.totalorder %s14, 0
    %p47 = por %p45, %p46
    %p48 = scmp.ne.s32.totalorder %s34, %s35
    %p49 = scmp.eq.s32.totalorder %s15, 1
    %p50 = por %p48, %p49
    %p52 = scmp.ne.s32.totalorder %s35, %s51
    %p53 = scmp.eq.s32.totalorder %s15, 0
    %p54 = por %p52, %p53
    %s55 = ssub.s32 %s17, %s24
    %p56 = scmp.eq.s32.totalorder %s55, 0
    %s58 = sadd.s32 %s57, 1
    %s59 = scalar_select %p56, %s57, %s58
    %p62 = pneg %p56
    %p63 = scmp.eq.s32.totalorder %s9, 1
    %p64 = por %p62, %p63
    %p65 = scmp.ne.s32.totalorder %s57, %s60
    %p66 = scmp.eq.s32.totalorder %s9, 0
    %p67 = por %p65, %p66
    %p68 = scmp.ne.s32.totalorder %s57, %s60
    %p69 = scmp.eq.s32.totalorder %s14, 1
    %p70 = por %p68, %p69
    %p71 = scmp.ne.s32.totalorder %s60, %s61
    %p72 = scmp.eq.s32.totalorder %s14, 0
    %p73 = por %p71, %p72
    %p74 = scmp.ne.s32.totalorder %s60, %s61
    %p75 = scmp.eq.s32.totalorder %s15, 1
    %p76 = por %p74, %p75
    %p78 = scmp.ne.s32.totalorder %s61, %s77
    %p79 = scmp.eq.s32.totalorder %s15, 0
    %p80 = por %p78, %p79
    %s81 = ssub.s32 %s17, %s24
    %p82 = scmp.eq.s32.totalorder %s81, 0
    %s84 = sadd.s32 %s83, 1
    %s85 = scalar_select %p82, %s83, %s84
    %p88 = pneg %p82
    %p89 = scmp.eq.s32.totalorder %s9, 1
    %p90 = por %p88, %p89
    %p91 = scmp.ne.s32.totalorder %s83, %s86
    %p92 = scmp.eq.s32.totalorder %s9, 0
    %p93 = por %p91, %p92
    %p94 = scmp.ne.s32.totalorder %s83, %s86
    %p95 = scmp.eq.s32.totalorder %s14, 1
    %p96 = por %p94, %p95
    %p97 = scmp.ne.s32.totalorder %s86, %s87
    %p98 = scmp.eq.s32.totalorder %s14, 0
    %p99 = por %p97, %p98
    %p100 = scmp.ne.s32.totalorder %s86, %s87
    %p101 = scmp.eq.s32.totalorder %s15, 1
    %p102 = por %p100, %p101
    %p104 = scmp.ne.s32.totalorder %s87, %s103
    %p105 = scmp.eq.s32.totalorder %s15, 0
    %p106 = por %p104, %p105
    %s107 = ssub.s32 %s16, %s28
    %s108 = ssub.s32 %s17, %s24
    %s109 = sor.u32 %s107, %s108
    %p110 = scmp.eq.s32.totalorder %s109, 0
    %s112 = sadd.s32 %s111, 1
    %s113 = scalar_select %p110, %s111, %s112
    %p116 = pneg %p110
    %p117 = scmp.eq.s32.totalorder %s9, 1
    %p118 = por %p116, %p117
    %p119 = scmp.ne.s32.totalorder %s111, %s114
    %p120 = scmp.eq.s32.totalorder %s9, 0
    %p121 = por %p119, %p120
    %p122 = scmp.ne.s32.totalorder %s111, %s114
    %p123 = scmp.eq.s32.totalorder %s14, 1
    %p124 = por %p122, %p123
    %p125 = scmp.ne.s32.totalorder %s114, %s115
    %p126 = scmp.eq.s32.totalorder %s14, 0
    %p127 = por %p125, %p126
    %p128 = scmp.ne.s32.totalorder %s114, %s115
    %p129 = scmp.eq.s32.totalorder %s15, 1
    %p130 = por %p128, %p129
    %p132 = scmp.ne.s32.totalorder %s115, %s131
    %p133 = scmp.eq.s32.totalorder %s15, 0
    %p134 = por %p132, %p133
    %p135 = scmp.le.s32.totalorder 1, %s9
    %p136 = scmp.lt.s32.totalorder %s9, 3
    %p137 = pnand %p135, %p136
    %p138 = pneg %p137
    // Predicated region
    $region9: #{_lambda_.6} parent=5 // pred_check
      _
    $region10: #{_lambda_.6} parent=5 // pred_check_branch
      %140 = sbr.rel (%p137) target = $region12
    $region11: #{_lambda_.6} parent=5 // pred_region
      %s141 = ssub.s32 %s9, 1
      // Predicated region
      $region13: #{_lambda_.6} parent=11 // pred_check
        %p142 = pneg %p73
      $region14: #{_lambda_.6} parent=11 // pred_check_branch
        %144 = sbr.rel (%p142) target = $region16
      $region15: #{_lambda_.6} parent=11 // pred_region
        %p145 = scmp.lt.s32.totalorder %s19, 0
        %s146 = scalar_select %p145, %s19, 0
        %s147 = smul.addr %s146, 4
        %s148 = scalar_lea.vmem %s1, %s147
      $region16: #{_lambda_.6} parent=11 // pred_fallthru
        _
      // Predicated region
      $region17: #{_lambda_.6} parent=11 // pred_check
        %p149 = pneg %p99
      $region18: #{_lambda_.6} parent=11 // pred_check_branch
        %151 = sbr.rel (%p149) target = $region20
      $region19: #{_lambda_.6} parent=11 // pred_region
        %p152 = scmp.lt.s32.totalorder %s19, 0
        %s153 = scalar_select %p152, %s19, 0
        %s154 = scalar_lea.vmem %s2, %s153
      $region20: #{_lambda_.6} parent=11 // pred_fallthru
        _
    $region12: #{_lambda_.6} parent=5 // pred_fallthru
      _
    %p155 = scmp.lt.s32.totalorder %s9, 2
    // Predicated region
    $region21: #{_lambda_.6} parent=5 // pred_check
      %p156 = pneg %p155
    $region22: #{_lambda_.6} parent=5 // pred_check_branch
      %158 = sbr.rel (%p156) target = $region24
    $region23: #{_lambda_.6} parent=5 // pred_region
      // Predicated region
      $region25: #{_lambda_.6} parent=23 // pred_check
        %p159 = pneg %p41
      $region26: #{_lambda_.6} parent=23 // pred_check_branch
        %161 = sbr.rel (%p159) target = $region28
      $region27: #{_lambda_.6} parent=23 // pred_region
        %s162 = smul.u32 8, %s16
        %p163 = scmp.lt.s32.totalorder %s162, 15
        %s164 = scalar_select %p163, %s162, 15
        %s165 = smul.addr %s164, 4
        %s166 = scalar_lea.vmem %s0, %s165
        %s167 = smul.u32 8, %s16
      $region28: #{_lambda_.6} parent=23 // pred_fallthru
        _
    $region24: #{_lambda_.6} parent=5 // pred_fallthru
      _
    %p168 = scmp.le.s32.totalorder 1, %s9
    %p169 = scmp.lt.s32.totalorder %s9, 3
    %p170 = pnand %p168, %p169
    %p171 = pneg %p170
    // Predicated region
    $region29: #{_lambda_.6} parent=5 // pred_check
      _
    $region30: #{_lambda_.6} parent=5 // pred_check_branch
      %173 = sbr.rel (%p170) target = $region32
    $region31: #{_lambda_.6} parent=5 // pred_region
      %s174 = ssub.s32 %s9, 1
      %s175 = smul.u32 8, %s18
      %p176 = scmp.lt.s32.totalorder %s175, 15
      %s177 = scalar_select %p176, %s175, 15
      %s178 = smul.addr %s177, 4
      %s179 = scalar_lea.vmem %s0, %s178
      %p180 = pneg %p47
      %p181 = pneg %p44
      %p182 = scmp.lt.s32.totalorder %s19, 0
      %s183 = scalar_select %p182, %s19, 0
      %s184 = smul.addr %s183, 4
      %s185 = scalar_lea.vmem %s1, %s184
      %p186 = pneg %p73
      %p187 = pneg %p70
      %p188 = scmp.lt.s32.totalorder %s19, 0
      %s189 = scalar_select %p188, %s19, 0
      %s190 = scalar_lea.vmem %s2, %s189
      %p191 = pneg %p99
      %p192 = pneg %p96
      %p193 = pneg %p127
      %p194 = pneg %p124
      %s195 = smul.u32 8, %s18
      %p196 = scmp.lt.s32.totalorder %s195, 15
      %s197 = scalar_select %p196, %s195, 15
      %p198 = scmp.lt.s32.totalorder %s19, 0
      %s199 = scalar_select %p198, %s19, 0
      %s200 = sadd.s32 %s199, %s197
      %s201 = smul.addr %s200, 4
      %s202 = scalar_lea.vmem %s3, %s201
      %s203 = smul.u32 8, %s18
      %p204 = scmp.lt.s32.totalorder %s203, 15
      %s205 = scalar_select %p204, %s203, 15
      %s206 = smul.addr %s205, 4
      %s207 = scalar_lea.vmem %s0, %s206
      %s208 = smul.u32 8, %s18
      %p209 = scmp.lt.s32.totalorder %s19, 0
      %s210 = scalar_select %p209, %s19, 0
      %s211 = smul.addr %s210, 4
      %s212 = scalar_lea.vmem %s1, %s211
      %p213 = scmp.lt.s32.totalorder %s19, 0
      %s214 = scalar_select %p213, %s19, 0
      %s215 = scalar_lea.vmem %s2, %s214
      %s216 = smul.u32 8, %s18
      %p217 = scmp.lt.s32.totalorder %s216, 15
      %s218 = scalar_select %p217, %s216, 15
      %p219 = scmp.lt.s32.totalorder %s19, 0
      %s220 = scalar_select %p219, %s19, 0
      %s221 = sadd.s32 %s220, %s218
      %s222 = smul.addr %s221, 4
      %s223 = scalar_lea.vmem %s3, %s222
      %s224 = smul.u32 8, %s18
      %v225 = vld [vmem:[%s207] sm:$0xf]
      %v226 = vld [vmem:[%s207 + $0x4] sm:$0xf]
      %v227 = vld [vmem:[%s207 + $0x8] sm:$0xf]
      %v228 = vld [vmem:[%s207 + $0xc] sm:$0xf]
      %v229 = vld [vmem:[%s207 + $0x10] sm:$0xf]
      %v230 = vld [vmem:[%s207 + $0x14] sm:$0xf]
      %v231 = vld [vmem:[%s207 + $0x18] sm:$0xf]
      %v232 = vld [vmem:[%s207 + $0x1c] sm:$0xf]
      %v233 = vld [vmem:[%s212] sm:$0xf]
      %v234 = vld [vmem:[%s212 + $0x4] sm:$0xf]
      %v235 = vld [vmem:[%s212 + $0x8] sm:$0xf]
      %v236 = vld [vmem:[%s212 + $0xc] sm:$0xf]
      %v237 = vld [vmem:[%s212 + $0x10] sm:$0xf]
      %v238 = vld [vmem:[%s212 + $0x14] sm:$0xf]
      %v239 = vld [vmem:[%s212 + $0x18] sm:$0xf]
      %v240 = vld [vmem:[%s212 + $0x1c] sm:$0xf]
      %v241 = vld [vmem:[%s212 + $0x20] sm:$0xf]
      %v242 = vld [vmem:[%s212 + $0x24] sm:$0xf]
      %v243 = vld [vmem:[%s212 + $0x28] sm:$0xf]
      %v244 = vld [vmem:[%s212 + $0x2c] sm:$0xf]
      %v245 = vld [vmem:[%s212 + $0x30] sm:$0xf]
      %v246 = vld [vmem:[%s212 + $0x34] sm:$0xf]
      %v247 = vld [vmem:[%s212 + $0x38] sm:$0xf]
      %v248 = vld [vmem:[%s212 + $0x3c] sm:$0xf]
      %v249 = vld [vmem:[%s215] sm:$0x1]
      %v251 = vperm.slane %v249, 0
      %v261 = vunpack.c.l.b16 %v225
      %v262 = vunpack.c.l.b16 %v226
      %v263 = vunpack.c.l.b16 %v227
      %v264 = vunpack.c.l.b16 %v228
      %v265 = vunpack.c.l.b16 %v229
      %v266 = vunpack.c.l.b16 %v230
      %v267 = vunpack.c.l.b16 %v231
      %v268 = vunpack.c.l.b16 %v232
      %v269 = vpack.c.b16 %v262, %v261
      %v270 = vpack.c.b16 %v264, %v263
      %v271 = vpack.c.b16 %v266, %v265
      %v272 = vpack.c.b16 %v268, %v267
      %v293 = vunpack.c.l.b16 %v233
      %v294 = vunpack.c.l.b16 %v234
      %v295 = vunpack.c.l.b16 %v235
      %v296 = vunpack.c.l.b16 %v236
      %v297 = vunpack.c.l.b16 %v237
      %v298 = vunpack.c.l.b16 %v238
      %v299 = vunpack.c.l.b16 %v239
      %v300 = vunpack.c.l.b16 %v240
      %v301 = vunpack.c.l.b16 %v241
      %v302 = vunpack.c.l.b16 %v242
      %v303 = vunpack.c.l.b16 %v243
      %v304 = vunpack.c.l.b16 %v244
      %v305 = vunpack.c.l.b16 %v245
      %v306 = vunpack.c.l.b16 %v246
      %v307 = vunpack.c.l.b16 %v247
      %v308 = vunpack.c.l.b16 %v248
      %v309 = vpack.c.b16 %v294, %v293
      %v310 = vpack.c.b16 %v296, %v295
      %v311 = vpack.c.b16 %v298, %v297
      %v312 = vpack.c.b16 %v300, %v299
      %v313 = vpack.c.b16 %v302, %v301
      %v314 = vpack.c.b16 %v304, %v303
      %v315 = vpack.c.b16 %v306, %v305
      %v316 = vpack.c.b16 %v308, %v307
      %325 = vmatpush.bf16.msra.mxu0 %v316
      %326 = vmatpush.bf16.msra.mxu0 %v315
      %327 = vmatpush.bf16.msra.mxu0 %v314
      %328 = vmatpush.bf16.msra.mxu0 %v313
      %329 = vmatpush.bf16.msra.mxu0 %v312
      %330 = vmatpush.bf16.msra.mxu0 %v311
      %331 = vmatpush.bf16.msra.mxu0 %v310
      %332 = vmatpush.bf16.msra.mxu0 %v309
      %333 = vmatmul.bf16.gmra.mxu0 %v269
      %v334 = vpop.f32.mrf.mxu0
      %v335 = vadd.f32 %v251, %v334
      %v336 = vpop.f32.mrf.mxu0
      %v337 = vadd.f32 %v251, %v336
      %338 = vmatmul.bf16.gmra.mxu0 %v270
      %v339 = vpop.f32.mrf.mxu0
      %v340 = vadd.f32 %v251, %v339
      %v341 = vpop.f32.mrf.mxu0
      %v342 = vadd.f32 %v251, %v341
      %343 = vmatmul.bf16.gmra.mxu0 %v271
      %v344 = vpop.f32.mrf.mxu0
      %v345 = vadd.f32 %v251, %v344
      %v346 = vpop.f32.mrf.mxu0
      %v347 = vadd.f32 %v251, %v346
      %348 = vmatmul.bf16.gmra.mxu0 %v272
      %v349 = vpop.f32.mrf.mxu0
      %v350 = vadd.f32 %v251, %v349
      %v351 = vpop.f32.mrf.mxu0
      %v352 = vadd.f32 %v251, %v351
      %353 = vdwg.mxu0
      %vm354 = vcmp.ge.f32.partialorder %v335, 0.0
      %vm355 = vcmp.ge.f32.partialorder %v337, 0.0
      %vm356 = vcmp.ge.f32.partialorder %v340, 0.0
      %vm357 = vcmp.ge.f32.partialorder %v342, 0.0
      %vm358 = vcmp.ge.f32.partialorder %v345, 0.0
      %vm359 = vcmp.ge.f32.partialorder %v347, 0.0
      %vm360 = vcmp.ge.f32.partialorder %v350, 0.0
      %vm361 = vcmp.ge.f32.partialorder %v352, 0.0
      %v362 = vmul.f32 %v335, 0.2
      %v363 = vmul.f32 %v337, 0.2
      %v364 = vmul.f32 %v340, 0.2
      %v365 = vmul.f32 %v342, 0.2
      %v366 = vmul.f32 %v345, 0.2
      %v367 = vmul.f32 %v347, 0.2
      %v368 = vmul.f32 %v350, 0.2
      %v369 = vmul.f32 %v352, 0.2
      %v370 = vsel %vm354, %v335, %v362
      %v371 = vsel %vm355, %v337, %v363
      %v372 = vsel %vm356, %v340, %v364
      %v373 = vsel %vm357, %v342, %v365
      %v374 = vsel %vm358, %v345, %v366
      %v375 = vsel %vm359, %v347, %v367
      %v376 = vsel %vm360, %v350, %v368
      %v377 = vsel %vm361, %v352, %v369
      %v378 = vpack.c.bf16 %v370, %v370
      %v379 = vpack.c.bf16 %v371, %v371
      %v380 = vpack.c.bf16 %v372, %v372
      %v381 = vpack.c.bf16 %v373, %v373
      %v382 = vpack.c.bf16 %v374, %v374
      %v383 = vpack.c.bf16 %v375, %v375
      %v384 = vpack.c.bf16 %v376, %v376
      %v385 = vpack.c.bf16 %v377, %v377
      %386 = vst [vmem:[%s223] sm:$0xf] %v378
      %387 = vst [vmem:[%s223 + $0x4] sm:$0xf] %v379
      %388 = vst [vmem:[%s223 + $0x8] sm:$0xf] %v380
      %389 = vst [vmem:[%s223 + $0xc] sm:$0xf] %v381
      %390 = vst [vmem:[%s223 + $0x10] sm:$0xf] %v382
      %391 = vst [vmem:[%s223 + $0x14] sm:$0xf] %v383
      %392 = vst [vmem:[%s223 + $0x18] sm:$0xf] %v384
      %393 = vst [vmem:[%s223 + $0x1c] sm:$0xf] %v385
      %s394 = smul.u32 8, %s18
      %p395 = scmp.lt.s32.totalorder %s394, 15
      %s396 = scalar_select %p395, %s394, 15
      %p397 = scmp.lt.s32.totalorder %s19, 0
      %s398 = scalar_select %p397, %s19, 0
      %s399 = sadd.s32 %s398, %s396
      %s400 = smul.addr %s399, 4
      %s401 = scalar_lea.vmem %s3, %s400
      // Predicated region
      $region33: #{_lambda_.6} parent=31 // pred_check
        %p402 = pneg %p124
      $region34: #{_lambda_.6} parent=31 // pred_check_branch
        %404 = sbr.rel (%p402) target = $region36
      $region35: #{_lambda_.6} parent=31 // pred_region
        %s405 = smul.u32 8, %s18
      $region36: #{_lambda_.6} parent=31 // pred_fallthru
        _
    $region32: #{_lambda_.6} parent=5 // pred_fallthru
      _
    %p406 = scmp.le.s32.totalorder 2, %s9
    // Predicated region
    $region37: #{_lambda_.6} parent=5 // pred_check
      %p407 = pneg %p406
    $region38: #{_lambda_.6} parent=5 // pred_check_branch
      %409 = sbr.rel (%p407) target = $region40
    $region39: #{_lambda_.6} parent=5 // pred_region
      %s410 = ssub.s32 %s9, 2
      // Predicated region
      $region41: #{_lambda_.6} parent=39 // pred_check
        %p411 = pneg %p130
      $region42: #{_lambda_.6} parent=39 // pred_check_branch
        %413 = sbr.rel (%p411) target = $region44
      $region43: #{_lambda_.6} parent=39 // pred_region
        %s414 = smul.u32 8, %s20
        %p415 = scmp.lt.s32.totalorder %s414, 15
        %s416 = scalar_select %p415, %s414, 15
        %p417 = scmp.lt.s32.totalorder %s21, 0
        %s418 = scalar_select %p417, %s21, 0
        %s419 = sadd.s32 %s418, %s416
        %s420 = smul.addr %s419, 4
        %s421 = scalar_lea.vmem %s3, %s420
      $region44: #{_lambda_.6} parent=39 // pred_fallthru
        _
    $region40: #{_lambda_.6} parent=5 // pred_fallthru
      _
  $region6: #{_lambda_.6} parent=0 // loop_footer
    %s13 = sadd.s32 1, %s9
  $region7: #{_lambda_.6} parent=0 // loop_footer_branch
    %8 = sbr.rel target = $region3
  $region8: #{_lambda_.6} parent=0 // loop_exit
    _

// kernel: _lambda_.7
$region0: #{_lambda_.7}
  #allocation0 [shape = 'u32[]', space=smem, size = 0x4, offset = 0x4, fixed_abs, tag = 'smem constant byte address 0x4 - core index']
  #allocation1 [shape = 'u32[72,128]{1,0:T(1,128)}', space=vmem, size = 0x9000, scoped, tag = 'internal scratch']
  %s0 = inlined_call_operand.vmem [shape: bf16[32,256], index: 0, kind: input, shape index: {}]
  %s1 = inlined_call_operand.vmem [shape: bf16[256,128], index: 1, kind: input, shape index: {}]
  %s2 = inlined_call_operand.vmem [shape: f32[1,128], index: 2, kind: input, shape index: {}]
  %s3 = inlined_call_operand.vmem [shape: bf16[32,128], index: 3, kind: output, shape index: {}]
  %s4 = sld [smem:[#allocation0]]
  $region45: #{_lambda_.7} parent=0
    _
  %s6 = ssub.s32 1, %s4
  %s7 = scalar_select 0, %s6, %s4
  loop: start=0, step=1, limit=4
  $region2: #{_lambda_.7} parent=0 // loop_pre_header
    _
  $region3: #{_lambda_.7} parent=0 // loop_header
    %s9 = sphi 0, %s13
    %p10 = scmp.ge.s32.totalorder %s9, 4
    %s16 = sphi 0, %s28
    %s17 = sphi 0, %s24
    %s18 = sphi 0, %s16
    %s19 = sphi 0, %s17
    %s20 = sphi 0, %s18
    %s21 = sphi 0, %s19
    %s31 = sphi 0, %s33
    %s34 = sphi 0, %s31
    %s35 = sphi 0, %s34
    %s51 = sphi 0, %s35
    %s57 = sphi 0, %s59
    %s60 = sphi 0, %s57
    %s61 = sphi 0, %s60
    %s77 = sphi 0, %s61
    %s83 = sphi 0, %s85
    %s86 = sphi 0, %s83
    %s87 = sphi 0, %s86
    %s103 = sphi 0, %s87
    %s111 = sphi 0, %s113
    %s114 = sphi 0, %s111
    %s115 = sphi 0, %s114
    %s131 = sphi 0, %s115
  $region4: #{_lambda_.7} parent=0 // loop_header_branch
    %12 = sbr.rel (%p10) target = $region8
  $region5: #{_lambda_.7} parent=0 // loop_body
    %s14 = ssub.s32 %s9, 1
    %s15 = ssub.s32 %s9, 2
    %s22 = sadd.s32 1, %s17
    %p23 = scmp.ge.s32.totalorder %s22, 1
    %s24 = scalar_select %p23, 0, %s22
    %s25 = sadd.s32 1, %s16
    %s26 = scalar_select %p23, %s25, %s16
    %p27 = scmp.ge.s32.totalorder %s26, 2
    %s28 = scalar_select %p27, 0, %s26
    %s29 = ssub.s32 %s16, %s28
    %p30 = scmp.eq.s32.totalorder %s29, 0
    %s32 = sadd.s32 %s31, 1
    %s33 = scalar_select %p30, %s31, %s32
    %p36 = pneg %p30
    %p37 = scmp.eq.s32.totalorder %s9, 1
    %p38 = por %p36, %p37
    %p39 = scmp.ne.s32.totalorder %s31, %s34
    %p40 = scmp.eq.s32.totalorder %s9, 0
    %p41 = por %p39, %p40
    %p42 = scmp.ne.s32.totalorder %s31, %s34
    %p43 = scmp.eq.s32.totalorder %s14, 1
    %p44 = por %p42, %p43
    %p45 = scmp.ne.s32.totalorder %s34, %s35
    %p46 = scmp.eq.s32.totalorder %s14, 0
    %p47 = por %p45, %p46
    %p48 = scmp.ne.s32.totalorder %s34, %s35
    %p49 = scmp.eq.s32.totalorder %s15, 1
    %p50 = por %p48, %p49
    %p52 = scmp.ne.s32.totalorder %s35, %s51
    %p53 = scmp.eq.s32.totalorder %s15, 0
    %p54 = por %p52, %p53
    %s55 = ssub.s32 %s17, %s24
    %p56 = scmp.eq.s32.totalorder %s55, 0
    %s58 = sadd.s32 %s57, 1
    %s59 = scalar_select %p56, %s57, %s58
    %p62 = pneg %p56
    %p63 = scmp.eq.s32.totalorder %s9, 1
    %p64 = por %p62, %p63
    %p65 = scmp.ne.s32.totalorder %s57, %s60
    %p66 = scmp.eq.s32.totalorder %s9, 0
    %p67 = por %p65, %p66
    %p68 = scmp.ne.s32.totalorder %s57, %s60
    %p69 = scmp.eq.s32.totalorder %s14, 1
    %p70 = por %p68, %p69
    %p71 = scmp.ne.s32.totalorder %s60, %s61
    %p72 = scmp.eq.s32.totalorder %s14, 0
    %p73 = por %p71, %p72
    %p74 = scmp.ne.s32.totalorder %s60, %s61
    %p75 = scmp.eq.s32.totalorder %s15, 1
    %p76 = por %p74, %p75
    %p78 = scmp.ne.s32.totalorder %s61, %s77
    %p79 = scmp.eq.s32.totalorder %s15, 0
    %p80 = por %p78, %p79
    %s81 = ssub.s32 %s17, %s24
    %p82 = scmp.eq.s32.totalorder %s81, 0
    %s84 = sadd.s32 %s83, 1
    %s85 = scalar_select %p82, %s83, %s84
    %p88 = pneg %p82
    %p89 = scmp.eq.s32.totalorder %s9, 1
    %p90 = por %p88, %p89
    %p91 = scmp.ne.s32.totalorder %s83, %s86
    %p92 = scmp.eq.s32.totalorder %s9, 0
    %p93 = por %p91, %p92
    %p94 = scmp.ne.s32.totalorder %s83, %s86
    %p95 = scmp.eq.s32.totalorder %s14, 1
    %p96 = por %p94, %p95
    %p97 = scmp.ne.s32.totalorder %s86, %s87
    %p98 = scmp.eq.s32.totalorder %s14, 0
    %p99 = por %p97, %p98
    %p100 = scmp.ne.s32.totalorder %s86, %s87
    %p101 = scmp.eq.s32.totalorder %s15, 1
    %p102 = por %p100, %p101
    %p104 = scmp.ne.s32.totalorder %s87, %s103
    %p105 = scmp.eq.s32.totalorder %s15, 0
    %p106 = por %p104, %p105
    %s107 = ssub.s32 %s16, %s28
    %s108 = ssub.s32 %s17, %s24
    %s109 = sor.u32 %s107, %s108
    %p110 = scmp.eq.s32.totalorder %s109, 0
    %s112 = sadd.s32 %s111, 1
    %s113 = scalar_select %p110, %s111, %s112
    %p116 = pneg %p110
    %p117 = scmp.eq.s32.totalorder %s9, 1
    %p118 = por %p116, %p117
    %p119 = scmp.ne.s32.totalorder %s111, %s114
    %p120 = scmp.eq.s32.totalorder %s9, 0
    %p121 = por %p119, %p120
    %p122 = scmp.ne.s32.totalorder %s111, %s114
    %p123 = scmp.eq.s32.totalorder %s14, 1
    %p124 = por %p122, %p123
    %p125 = scmp.ne.s32.totalorder %s114, %s115
    %p126 = scmp.eq.s32.totalorder %s14, 0
    %p127 = por %p125, %p126
    %p128 = scmp.ne.s32.totalorder %s114, %s115
    %p129 = scmp.eq.s32.totalorder %s15, 1
    %p130 = por %p128, %p129
    %p132 = scmp.ne.s32.totalorder %s115, %s131
    %p133 = scmp.eq.s32.totalorder %s15, 0
    %p134 = por %p132, %p133
    %p135 = scmp.le.s32.totalorder 1, %s9
    %p136 = scmp.lt.s32.totalorder %s9, 3
    %p137 = pnand %p135, %p136
    %p138 = pneg %p137
    // Predicated region
    $region9: #{_lambda_.7} parent=5 // pred_check
      _
    $region10: #{_lambda_.7} parent=5 // pred_check_branch
      %140 = sbr.rel (%p137) target = $region12
    $region11: #{_lambda_.7} parent=5 // pred_region
      %s141 = ssub.s32 %s9, 1
      // Predicated region
      $region13: #{_lambda_.7} parent=11 // pred_check
        %p142 = pneg %p73
      $region14: #{_lambda_.7} parent=11 // pred_check_branch
        %144 = sbr.rel (%p142) target = $region16
      $region15: #{_lambda_.7} parent=11 // pred_region
        %p145 = scmp.lt.s32.totalorder %s19, 0
        %s146 = scalar_select %p145, %s19, 0
        %s147 = smul.addr %s146, 4
        %s148 = scalar_lea.vmem %s1, %s147
      $region16: #{_lambda_.7} parent=11 // pred_fallthru
        _
      // Predicated region
      $region17: #{_lambda_.7} parent=11 // pred_check
        %p149 = pneg %p99
      $region18: #{_lambda_.7} parent=11 // pred_check_branch
        %151 = sbr.rel (%p149) target = $region20
      $region19: #{_lambda_.7} parent=11 // pred_region
        %p152 = scmp.lt.s32.totalorder %s19, 0
        %s153 = scalar_select %p152, %s19, 0
        %s154 = scalar_lea.vmem %s2, %s153
      $region20: #{_lambda_.7} parent=11 // pred_fallthru
        _
    $region12: #{_lambda_.7} parent=5 // pred_fallthru
      _
    %p155 = scmp.lt.s32.totalorder %s9, 2
    // Predicated region
    $region21: #{_lambda_.7} parent=5 // pred_check
      %p156 = pneg %p155
    $region22: #{_lambda_.7} parent=5 // pred_check_branch
      %158 = sbr.rel (%p156) target = $region24
    $region23: #{_lambda_.7} parent=5 // pred_region
      // Predicated region
      $region25: #{_lambda_.7} parent=23 // pred_check
        %p159 = pneg %p41
      $region26: #{_lambda_.7} parent=23 // pred_check_branch
        %161 = sbr.rel (%p159) target = $region28
      $region27: #{_lambda_.7} parent=23 // pred_region
        %s162 = smul.u32 2, %s16
        %p163 = scmp.lt.s32.totalorder %s162, 3
        %s164 = scalar_select %p163, %s162, 3
        %s165 = smul.addr %s164, 2
        %s166 = smul.addr %s165, 4
        %s167 = scalar_lea.vmem %s0, %s166
        %s168 = smul.u32 2, %s16
      $region28: #{_lambda_.7} parent=23 // pred_fallthru
        _
    $region24: #{_lambda_.7} parent=5 // pred_fallthru
      _
    %p169 = scmp.le.s32.totalorder 1, %s9
    %p170 = scmp.lt.s32.totalorder %s9, 3
    %p171 = pnand %p169, %p170
    %p172 = pneg %p171
    // Predicated region
    $region29: #{_lambda_.7} parent=5 // pred_check
      _
    $region30: #{_lambda_.7} parent=5 // pred_check_branch
      %174 = sbr.rel (%p171) target = $region32
    $region31: #{_lambda_.7} parent=5 // pred_region
      %s175 = ssub.s32 %s9, 1
      %s176 = smul.u32 2, %s18
      %p177 = scmp.lt.s32.totalorder %s176, 3
      %s178 = scalar_select %p177, %s176, 3
      %s179 = smul.addr %s178, 2
      %s180 = smul.addr %s179, 4
      %s181 = scalar_lea.vmem %s0, %s180
      %p182 = pneg %p47
      %p183 = pneg %p44
      %p184 = scmp.lt.s32.totalorder %s19, 0
      %s185 = scalar_select %p184, %s19, 0
      %s186 = smul.addr %s185, 4
      %s187 = scalar_lea.vmem %s1, %s186
      %p188 = pneg %p73
      %p189 = pneg %p70
      %p190 = scmp.lt.s32.totalorder %s19, 0
      %s191 = scalar_select %p190, %s19, 0
      %s192 = scalar_lea.vmem %s2, %s191
      %p193 = pneg %p99
      %p194 = pneg %p96
      %p195 = pneg %p127
      %p196 = pneg %p124
      %s197 = smul.u32 2, %s18
      %p198 = scmp.lt.s32.totalorder %s197, 3
      %s199 = scalar_select %p198, %s197, 3
      %p200 = scmp.lt.s32.totalorder %s19, 0
      %s201 = scalar_select %p200, %s19, 0
      %s202 = sadd.s32 %s201, %s199
      %s203 = smul.addr %s202, 4
      %s204 = scalar_lea.vmem %s3, %s203
      %s205 = smul.u32 2, %s18
      %p206 = scmp.lt.s32.totalorder %s205, 3
      %s207 = scalar_select %p206, %s205, 3
      %s208 = smul.addr %s207, 2
      %s209 = smul.addr %s208, 4
      %s210 = scalar_lea.vmem %s0, %s209
      %s211 = smul.u32 2, %s18
      %p212 = scmp.lt.s32.totalorder %s19, 0
      %s213 = scalar_select %p212, %s19, 0
      %s214 = smul.addr %s213, 4
      %s215 = scalar_lea.vmem %s1, %s214
      %p216 = scmp.lt.s32.totalorder %s19, 0
      %s217 = scalar_select %p216, %s19, 0
      %s218 = scalar_lea.vmem %s2, %s217
      %s219 = smul.u32 2, %s18
      %p220 = scmp.lt.s32.totalorder %s219, 3
      %s221 = scalar_select %p220, %s219, 3
      %p222 = scmp.lt.s32.totalorder %s19, 0
      %s223 = scalar_select %p222, %s19, 0
      %s224 = sadd.s32 %s223, %s221
      %s225 = smul.addr %s224, 4
      %s226 = scalar_lea.vmem %s3, %s225
      %s227 = smul.u32 2, %s18
      %v228 = vld [vmem:[%s210] sm:$0xff]
      %v229 = vld [vmem:[%s210 + $0x8] sm:$0xff]
      %v230 = vld [vmem:[%s215] sm:$0xf]
      %v231 = vld [vmem:[%s215 + $0x4] sm:$0xf]
      %v232 = vld [vmem:[%s215 + $0x8] sm:$0xf]
      %v233 = vld [vmem:[%s215 + $0xc] sm:$0xf]
      %v234 = vld [vmem:[%s215 + $0x10] sm:$0xf]
      %v235 = vld [vmem:[%s215 + $0x14] sm:$0xf]
      %v236 = vld [vmem:[%s215 + $0x18] sm:$0xf]
      %v237 = vld [vmem:[%s215 + $0x1c] sm:$0xf]
      %v238 = vld [vmem:[%s215 + $0x20] sm:$0xf]
      %v239 = vld [vmem:[%s215 + $0x24] sm:$0xf]
      %v240 = vld [vmem:[%s215 + $0x28] sm:$0xf]
      %v241 = vld [vmem:[%s215 + $0x2c] sm:$0xf]
      %v242 = vld [vmem:[%s215 + $0x30] sm:$0xf]
      %v243 = vld [vmem:[%s215 + $0x34] sm:$0xf]
      %v244 = vld [vmem:[%s215 + $0x38] sm:$0xf]
      %v245 = vld [vmem:[%s215 + $0x3c] sm:$0xf]
      %v246 = vld [vmem:[%s215 + $0x40] sm:$0xf]
      %v247 = vld [vmem:[%s215 + $0x44] sm:$0xf]
      %v248 = vld [vmem:[%s215 + $0x48] sm:$0xf]
      %v249 = vld [vmem:[%s215 + $0x4c] sm:$0xf]
      %v250 = vld [vmem:[%s215 + $0x50] sm:$0xf]
      %v251 = vld [vmem:[%s215 + $0x54] sm:$0xf]
      %v252 = vld [vmem:[%s215 + $0x58] sm:$0xf]
      %v253 = vld [vmem:[%s215 + $0x5c] sm:$0xf]
      %v254 = vld [vmem:[%s215 + $0x60] sm:$0xf]
      %v255 = vld [vmem:[%s215 + $0x64] sm:$0xf]
      %v256 = vld [vmem:[%s215 + $0x68] sm:$0xf]
      %v257 = vld [vmem:[%s215 + $0x6c] sm:$0xf]
      %v258 = vld [vmem:[%s215 + $0x70] sm:$0xf]
      %v259 = vld [vmem:[%s215 + $0x74] sm:$0xf]
      %v260 = vld [vmem:[%s215 + $0x78] sm:$0xf]
      %v261 = vld [vmem:[%s215 + $0x7c] sm:$0xf]
      %v262 = vld [vmem:[%s218] sm:$0x1]
      %v264 = vperm.slane %v262, 0
      %v268 = vunpack.c.l.b16 %v228
      %v269 = vunpack.c.h.b16 %v228
      %v270 = vunpack.c.l.b16 %v229
      %v271 = vunpack.c.h.b16 %v229
      %v272 = vpack.c.b16 %v270, %v268
      %v273 = vpack.c.b16 %v271, %v269
      %v308 = vunpack.c.l.b16 %v230
      %v309 = vunpack.c.l.b16 %v231
      %v310 = vunpack.c.l.b16 %v232
      %v311 = vunpack.c.l.b16 %v233
      %v312 = vunpack.c.l.b16 %v234
      %v313 = vunpack.c.l.b16 %v235
      %v314 = vunpack.c.l.b16 %v236
      %v315 = vunpack.c.l.b16 %v237
      %v316 = vunpack.c.l.b16 %v238
      %v317 = vunpack.c.l.b16 %v239
      %v318 = vunpack.c.l.b16 %v240
      %v319 = vunpack.c.l.b16 %v241
      %v320 = vunpack.c.l.b16 %v242
      %v321 = vunpack.c.l.b16 %v243
      %v322 = vunpack.c.l.b16 %v244
      %v323 = vunpack.c.l.b16 %v245
      %v324 = vunpack.c.l.b16 %v246
      %v325 = vunpack.c.l.b16 %v247
      %v326 = vunpack.c.l.b16 %v248
      %v327 = vunpack.c.l.b16 %v249
      %v328 = vunpack.c.l.b16 %v250
      %v329 = vunpack.c.l.b16 %v251
      %v330 = vunpack.c.l.b16 %v252
      %v331 = vunpack.c.l.b16 %v253
      %v332 = vunpack.c.l.b16 %v254
      %v333 = vunpack.c.l.b16 %v255
      %v334 = vunpack.c.l.b16 %v256
      %v335 = vunpack.c.l.b16 %v257
      %v336 = vunpack.c.l.b16 %v258
      %v337 = vunpack.c.l.b16 %v259
      %v338 = vunpack.c.l.b16 %v260
      %v339 = vunpack.c.l.b16 %v261
      %v340 = vpack.c.b16 %v309, %v308
      %v341 = vpack.c.b16 %v311, %v310
      %v342 = vpack.c.b16 %v313, %v312
      %v343 = vpack.c.b16 %v315, %v314
      %v344 = vpack.c.b16 %v317, %v316
      %v345 = vpack.c.b16 %v319, %v318
      %v346 = vpack.c.b16 %v321, %v320
      %v347 = vpack.c.b16 %v323, %v322
      %v348 = vpack.c.b16 %v325, %v324
      %v349 = vpack.c.b16 %v327, %v326
      %v350 = vpack.c.b16 %v329, %v328
      %v351 = vpack.c.b16 %v331, %v330
      %v352 = vpack.c.b16 %v333, %v332
      %v353 = vpack.c.b16 %v335, %v334
      %v354 = vpack.c.b16 %v337, %v336
      %v355 = vpack.c.b16 %v339, %v338
      %372 = vmatpush.bf16.msra.mxu0 %v347
      %373 = vmatpush.bf16.msra.mxu0 %v346
      %374 = vmatpush.bf16.msra.mxu0 %v345
      %375 = vmatpush.bf16.msra.mxu0 %v344
      %376 = vmatpush.bf16.msra.mxu0 %v343
      %377 = vmatpush.bf16.msra.mxu0 %v342
      %378 = vmatpush.bf16.msra.mxu0 %v341
      %379 = vmatpush.bf16.msra.mxu0 %v340
      %380 = vmatmul.bf16.gmra.mxu0 %v272
      %v381 = vpop.f32.mrf.mxu0
      %v382 = vadd.f32 %v264, %v381
      %v383 = vpop.f32.mrf.mxu0
      %v384 = vadd.f32 %v264, %v383
      %385 = vdwg.mxu0
      %386 = vmatpush.bf16.msra.mxu0 %v355
      %387 = vmatpush.bf16.msra.mxu0 %v354
      %388 = vmatpush.bf16.msra.mxu0 %v353
      %389 = vmatpush.bf16.msra.mxu0 %v352
      %390 = vmatpush.bf16.msra.mxu0 %v351
      %391 = vmatpush.bf16.msra.mxu0 %v350
      %392 = vmatpush.bf16.msra.mxu0 %v349
      %393 = vmatpush.bf16.msra.mxu0 %v348
      %394 = vmatmul.bf16.gmra.mxu0 %v273
      %v395 = vpop.f32.mrf.mxu0
      %v396 = vadd.f32 %v382, %v395
      %v397 = vpop.f32.mrf.mxu0
      %v398 = vadd.f32 %v384, %v397
      %399 = vdwg.mxu0
      %vm400 = vcmp.ge.f32.partialorder %v396, 0.0
      %vm401 = vcmp.ge.f32.partialorder %v398, 0.0
      %v402 = vmul.f32 %v396, 0.2
      %v403 = vmul.f32 %v398, 0.2
      %v404 = vsel %vm400, %v396, %v402
      %v405 = vsel %vm401, %v398, %v403
      %v406 = vpack.c.bf16 %v404, %v404
      %v407 = vpack.c.bf16 %v405, %v405
      %408 = vst [vmem:[%s226] sm:$0xf] %v406
      %409 = vst [vmem:[%s226 + $0x4] sm:$0xf] %v407
      %s410 = smul.u32 2, %s18
      %p411 = scmp.lt.s32.totalorder %s410, 3
      %s412 = scalar_select %p411, %s410, 3
      %p413 = scmp.lt.s32.totalorder %s19, 0
      %s414 = scalar_select %p413, %s19, 0
      %s415 = sadd.s32 %s414, %s412
      %s416 = smul.addr %s415, 4
      %s417 = scalar_lea.vmem %s3, %s416
      // Predicated region
      $region33: #{_lambda_.7} parent=31 // pred_check
        %p418 = pneg %p124
      $region34: #{_lambda_.7} parent=31 // pred_check_branch
        %420 = sbr.rel (%p418) target = $region36
      $region35: #{_lambda_.7} parent=31 // pred_region
        %s421 = smul.u32 2, %s18
      $region36: #{_lambda_.7} parent=31 // pred_fallthru
        _
    $region32: #{_lambda_.7} parent=5 // pred_fallthru
      _
    %p422 = scmp.le.s32.totalorder 2, %s9
    // Predicated region
    $region37: #{_lambda_.7} parent=5 // pred_check
      %p423 = pneg %p422
    $region38: #{_lambda_.7} parent=5 // pred_check_branch
      %425 = sbr.rel (%p423) target = $region40
    $region39: #{_lambda_.7} parent=5 // pred_region
      %s426 = ssub.s32 %s9, 2
      // Predicated region
      $region41: #{_lambda_.7} parent=39 // pred_check
        %p427 = pneg %p130
      $region42: #{_lambda_.7} parent=39 // pred_check_branch
        %429 = sbr.rel (%p427) target = $region44
      $region43: #{_lambda_.7} parent=39 // pred_region
        %s430 = smul.u32 2, %s20
        %p431 = scmp.lt.s32.totalorder %s430, 3
        %s432 = scalar_select %p431, %s430, 3
        %p433 = scmp.lt.s32.totalorder %s21, 0
        %s434 = scalar_select %p433, %s21, 0
        %s435 = sadd.s32 %s434, %s432
        %s436 = smul.addr %s435, 4
        %s437 = scalar_lea.vmem %s3, %s436
      $region44: #{_lambda_.7} parent=39 // pred_fallthru
        _
    $region40: #{_lambda_.7} parent=5 // pred_fallthru
      _
  $region6: #{_lambda_.7} parent=0 // loop_footer
    %s13 = sadd.s32 1, %s9
  $region7: #{_lambda_.7} parent=0 // loop_footer_branch
    %8 = sbr.rel target = $region3
  $region8: #{_lambda_.7} parent=0 // loop_exit
    _

// kernel: squeeze.0
$region0: #{squeeze.0}
  %s0 = inlined_call_operand.vmem [shape: f32[2,9], index: 0, kind: input, shape index: {}]
  %s1 = inlined_call_operand.hbm [shape: f32[2,1,3,3], index: 1, kind: output, shape index: {}]
  $region1: #{squeeze.0} parent=0
    #allocation0 [shape = 'u8[3072]{0}', space=vmem, size = 0xc00, scoped, tag = 'operand span for operand 1']
    #allocation1 [shape = 's32[1]{0}', space=sflag, size = 0x4, scoped, tag = 'scoped memory for squeeze.0']
    #allocation2 [shape = 'u8[24576]{0}', space=vmem, size = 0x6000, scoped, tag = 'scoped mem for output reshape']
    #allocation3 [shape = 'u8[4096]{0}', space=vmem, size = 0x1000, scoped, tag = 'scoped mem for input reshape']
    %2 = vsyncpa [#allocation1], 0
    %s4 = ssub.s32 4, 1
    %v5 = vld [vmem:[%s0] sm:%s4]
    %6 = vst [vmem:[#allocation3] sm:%s4] %v5
    %v7 = vld [vmem:[#allocation3] sm:$0x3]
    %vm8 = vcmask 23552
    %9 = vst.msk [vmem:[#allocation2] ss:$24 sm:$0x3] %vm8, %v7
    %s10 = scalar_lea.vmem [#allocation3], 1
    %s11 = smov 3
    %v12 = vld [vmem:[%s10] ss:$-1 sm:%s11]
    %13 = vrot.lane.b32.xlu0 %v12, 125
    %v14 = vpop.permute.xlu0 %13
    %vm15 = vcmask 23552
    %s16 = scalar_lea.vmem [#allocation2], 32
    %17 = vst.msk [vmem:[%s16] ss:$-24 sm:$0x3] %vm15, %v14
    %s18 = scalar_lea.vmem [#allocation3], 1
    %s19 = smov 3
    %v20 = vld [vmem:[%s18] ss:$-1 sm:%s19]
    %21 = vrot.lane.b32.xlu0 %v20, 122
    %v22 = vpop.permute.xlu0 %21
    %vm23 = vcmask 23552
    %s24 = scalar_lea.vmem [#allocation2], 40
    %25 = vst.msk [vmem:[%s24] ss:$-24 sm:$0x3] %vm23, %v22
    %s27 = ssub.s32 2, 1
    %v28 = vld [vmem:[#allocation2] sm:%s27]
    %s30 = ssub.s32 2, 1
    %31 = vst [vmem:[#allocation0] sm:%s30] %v28
    %s32 = scalar_lea.vmem [#allocation2], 8
    %v33 = vld [vmem:[%s32] sm:%s27]
    %s35 = ssub.s32 2, 1
    %s36 = scalar_lea.vmem [#allocation0], 1
    %37 = vst [vmem:[%s36] sm:%s35] %v33
    %s38 = scalar_lea.vmem [#allocation2], 16
    %v39 = vld [vmem:[%s38] sm:%s27]
    %s41 = ssub.s32 2, 1
    %s42 = scalar_lea.vmem [#allocation0], 2
    %43 = vst [vmem:[%s42] sm:%s41] %v39
    %s44 = scalar_lea.vmem [#allocation2], 24
    %v45 = vld [vmem:[%s44] sm:%s27]
    %s47 = ssub.s32 2, 1
    %s48 = scalar_lea.vmem [#allocation0], 3
    %49 = vst [vmem:[%s48] sm:%s47] %v45
    %s50 = scalar_lea.vmem [#allocation2], 32
    %v51 = vld [vmem:[%s50] sm:%s27]
    %s53 = ssub.s32 2, 1
    %s54 = scalar_lea.vmem [#allocation0], 4
    %55 = vst [vmem:[%s54] sm:%s53] %v51
    %s56 = scalar_lea.vmem [#allocation2], 40
    %v57 = vld [vmem:[%s56] sm:%s27]
    %s59 = ssub.s32 2, 1
    %s60 = scalar_lea.vmem [#allocation0], 5
    %61 = vst [vmem:[%s60] sm:%s59] %v57
    %63 = vsyncadd [#allocation1], 0
    %s65 = sshll.u32 [#allocation0], 4
    %s66 = int_to_ptr.vmem [resolvable:$true] %s65
    %s67 = sshll.u32 %s1, 4
    %s68 = int_to_ptr.hbm [resolvable:$true] %s67
    %70 = dma.vmem_to_hbm [thread:$0]  %s66, 96, %s68, [#allocation1]
    %72 = dma.done [#allocation1], 96
    %73 = vsyncpa [#allocation1], 1

// kernel: squeeze.4
$region0: #{squeeze.4}
  %s0 = inlined_call_operand.vmem [shape: f32[2,4], index: 0, kind: input, shape index: {}]
  %s1 = inlined_call_operand.hbm [shape: f32[2,1,2,2], index: 1, kind: output, shape index: {}]
  $region1: #{squeeze.4} parent=0
    #allocation0 [shape = 'u8[2048]{0}', space=vmem, size = 0x800, scoped, tag = 'operand span for operand 1']
    #allocation1 [shape = 's32[1]{0}', space=sflag, size = 0x4, scoped, tag = 'scoped memory for squeeze.4']
    #allocation2 [shape = 'u8[8192]{0}', space=vmem, size = 0x2000, scoped, tag = 'scoped mem for output reshape']
    #allocation3 [shape = 'u8[4096]{0}', space=vmem, size = 0x1000, scoped, tag = 'scoped mem for input reshape']
    %2 = vsyncpa [#allocation1], 0
    %s4 = ssub.s32 4, 1
    %v5 = vld [vmem:[%s0] sm:%s4]
    %6 = vst [vmem:[#allocation3] sm:%s4] %v5
    %v7 = vld [vmem:[#allocation3] sm:$0x3]
    %vm8 = vcmask 15360
    %9 = vst.msk [vmem:[#allocation2] ss:$8 sm:$0x3] %vm8, %v7
    %v10 = vld [vmem:[#allocation3] sm:$0x3]
    %11 = vrot.lane.b32.xlu0 %v10, 126
    %v12 = vpop.permute.xlu0 %11
    %vm13 = vcmask 15360
    %s14 = scalar_lea.vmem [#allocation2], 1
    %15 = vst.msk [vmem:[%s14] ss:$8 sm:$0x3] %vm13, %v12
    %s17 = ssub.s32 4, 1
    %v18 = vld [vmem:[#allocation2] sm:%s17]
    %s20 = ssub.s32 4, 1
    %21 = vst [vmem:[#allocation0] sm:%s20] %v18
    %s22 = scalar_lea.vmem [#allocation2], 8
    %v23 = vld [vmem:[%s22] sm:%s17]
    %s25 = ssub.s32 4, 1
    %s26 = scalar_lea.vmem [#allocation0], 2
    %27 = vst [vmem:[%s26] sm:%s25] %v23
    %29 = vsyncadd [#allocation1], 0
    %s31 = sshll.u32 [#allocation0], 4
    %s32 = int_to_ptr.vmem [resolvable:$true] %s31
    %s33 = sshll.u32 %s1, 4
    %s34 = int_to_ptr.hbm [resolvable:$true] %s33
    %36 = dma.vmem_to_hbm [thread:$0]  %s32, 64, %s34, [#allocation1]
    %38 = dma.done [#allocation1], 64
    %39 = vsyncpa [#allocation1], 1

// kernel: _lambda_.8
$region0: #{_lambda_.8}
  #allocation0 [shape = 'u32[]', space=smem, size = 0x4, offset = 0x4, fixed_abs, tag = 'smem constant byte address 0x4 - core index']
  #allocation1 [shape = 'u32[72,128]{1,0:T(1,128)}', space=vmem, size = 0x9000, scoped, tag = 'internal scratch']
  %s0 = inlined_call_operand.vmem [shape: bf16[32,512], index: 0, kind: input, shape index: {}]
  %s1 = inlined_call_operand.vmem [shape: bf16[512,128], index: 1, kind: input, shape index: {}]
  %s2 = inlined_call_operand.vmem [shape: f32[1,128], index: 2, kind: input, shape index: {}]
  %s3 = inlined_call_operand.vmem [shape: f32[32,128], index: 3, kind: output, shape index: {}]
  %s4 = sld [smem:[#allocation0]]
  $region45: #{_lambda_.8} parent=0
    _
  %s6 = ssub.s32 1, %s4
  %s7 = scalar_select 0, %s6, %s4
  loop: start=0, step=1, limit=4
  $region2: #{_lambda_.8} parent=0 // loop_pre_header
    _
  $region3: #{_lambda_.8} parent=0 // loop_header
    %s9 = sphi 0, %s13
    %p10 = scmp.ge.s32.totalorder %s9, 4
    %s16 = sphi 0, %s28
    %s17 = sphi 0, %s24
    %s18 = sphi 0, %s16
    %s19 = sphi 0, %s17
    %s20 = sphi 0, %s18
    %s21 = sphi 0, %s19
    %s31 = sphi 0, %s33
    %s34 = sphi 0, %s31
    %s35 = sphi 0, %s34
    %s51 = sphi 0, %s35
    %s57 = sphi 0, %s59
    %s60 = sphi 0, %s57
    %s61 = sphi 0, %s60
    %s77 = sphi 0, %s61
    %s83 = sphi 0, %s85
    %s86 = sphi 0, %s83
    %s87 = sphi 0, %s86
    %s103 = sphi 0, %s87
    %s111 = sphi 0, %s113
    %s114 = sphi 0, %s111
    %s115 = sphi 0, %s114
    %s131 = sphi 0, %s115
  $region4: #{_lambda_.8} parent=0 // loop_header_branch
    %12 = sbr.rel (%p10) target = $region8
  $region5: #{_lambda_.8} parent=0 // loop_body
    %s14 = ssub.s32 %s9, 1
    %s15 = ssub.s32 %s9, 2
    %s22 = sadd.s32 1, %s17
    %p23 = scmp.ge.s32.totalorder %s22, 1
    %s24 = scalar_select %p23, 0, %s22
    %s25 = sadd.s32 1, %s16
    %s26 = scalar_select %p23, %s25, %s16
    %p27 = scmp.ge.s32.totalorder %s26, 2
    %s28 = scalar_select %p27, 0, %s26
    %s29 = ssub.s32 %s16, %s28
    %p30 = scmp.eq.s32.totalorder %s29, 0
    %s32 = sadd.s32 %s31, 1
    %s33 = scalar_select %p30, %s31, %s32
    %p36 = pneg %p30
    %p37 = scmp.eq.s32.totalorder %s9, 1
    %p38 = por %p36, %p37
    %p39 = scmp.ne.s32.totalorder %s31, %s34
    %p40 = scmp.eq.s32.totalorder %s9, 0
    %p41 = por %p39, %p40
    %p42 = scmp.ne.s32.totalorder %s31, %s34
    %p43 = scmp.eq.s32.totalorder %s14, 1
    %p44 = por %p42, %p43
    %p45 = scmp.ne.s32.totalorder %s34, %s35
    %p46 = scmp.eq.s32.totalorder %s14, 0
    %p47 = por %p45, %p46
    %p48 = scmp.ne.s32.totalorder %s34, %s35
    %p49 = scmp.eq.s32.totalorder %s15, 1
    %p50 = por %p48, %p49
    %p52 = scmp.ne.s32.totalorder %s35, %s51
    %p53 = scmp.eq.s32.totalorder %s15, 0
    %p54 = por %p52, %p53
    %s55 = ssub.s32 %s17, %s24
    %p56 = scmp.eq.s32.totalorder %s55, 0
    %s58 = sadd.s32 %s57, 1
    %s59 = scalar_select %p56, %s57, %s58
    %p62 = pneg %p56
    %p63 = scmp.eq.s32.totalorder %s9, 1
    %p64 = por %p62, %p63
    %p65 = scmp.ne.s32.totalorder %s57, %s60
    %p66 = scmp.eq.s32.totalorder %s9, 0
    %p67 = por %p65, %p66
    %p68 = scmp.ne.s32.totalorder %s57, %s60
    %p69 = scmp.eq.s32.totalorder %s14, 1
    %p70 = por %p68, %p69
    %p71 = scmp.ne.s32.totalorder %s60, %s61
    %p72 = scmp.eq.s32.totalorder %s14, 0
    %p73 = por %p71, %p72
    %p74 = scmp.ne.s32.totalorder %s60, %s61
    %p75 = scmp.eq.s32.totalorder %s15, 1
    %p76 = por %p74, %p75
    %p78 = scmp.ne.s32.totalorder %s61, %s77
    %p79 = scmp.eq.s32.totalorder %s15, 0
    %p80 = por %p78, %p79
    %s81 = ssub.s32 %s17, %s24
    %p82 = scmp.eq.s32.totalorder %s81, 0
    %s84 = sadd.s32 %s83, 1
    %s85 = scalar_select %p82, %s83, %s84
    %p88 = pneg %p82
    %p89 = scmp.eq.s32.totalorder %s9, 1
    %p90 = por %p88, %p89
    %p91 = scmp.ne.s32.totalorder %s83, %s86
    %p92 = scmp.eq.s32.totalorder %s9, 0
    %p93 = por %p91, %p92
    %p94 = scmp.ne.s32.totalorder %s83, %s86
    %p95 = scmp.eq.s32.totalorder %s14, 1
    %p96 = por %p94, %p95
    %p97 = scmp.ne.s32.totalorder %s86, %s87
    %p98 = scmp.eq.s32.totalorder %s14, 0
    %p99 = por %p97, %p98
    %p100 = scmp.ne.s32.totalorder %s86, %s87
    %p101 = scmp.eq.s32.totalorder %s15, 1
    %p102 = por %p100, %p101
    %p104 = scmp.ne.s32.totalorder %s87, %s103
    %p105 = scmp.eq.s32.totalorder %s15, 0
    %p106 = por %p104, %p105
    %s107 = ssub.s32 %s16, %s28
    %s108 = ssub.s32 %s17, %s24
    %s109 = sor.u32 %s107, %s108
    %p110 = scmp.eq.s32.totalorder %s109, 0
    %s112 = sadd.s32 %s111, 1
    %s113 = scalar_select %p110, %s111, %s112
    %p116 = pneg %p110
    %p117 = scmp.eq.s32.totalorder %s9, 1
    %p118 = por %p116, %p117
    %p119 = scmp.ne.s32.totalorder %s111, %s114
    %p120 = scmp.eq.s32.totalorder %s9, 0
    %p121 = por %p119, %p120
    %p122 = scmp.ne.s32.totalorder %s111, %s114
    %p123 = scmp.eq.s32.totalorder %s14, 1
    %p124 = por %p122, %p123
    %p125 = scmp.ne.s32.totalorder %s114, %s115
    %p126 = scmp.eq.s32.totalorder %s14, 0
    %p127 = por %p125, %p126
    %p128 = scmp.ne.s32.totalorder %s114, %s115
    %p129 = scmp.eq.s32.totalorder %s15, 1
    %p130 = por %p128, %p129
    %p132 = scmp.ne.s32.totalorder %s115, %s131
    %p133 = scmp.eq.s32.totalorder %s15, 0
    %p134 = por %p132, %p133
    %p135 = scmp.le.s32.totalorder 1, %s9
    %p136 = scmp.lt.s32.totalorder %s9, 3
    %p137 = pnand %p135, %p136
    %p138 = pneg %p137
    // Predicated region
    $region9: #{_lambda_.8} parent=5 // pred_check
      _
    $region10: #{_lambda_.8} parent=5 // pred_check_branch
      %140 = sbr.rel (%p137) target = $region12
    $region11: #{_lambda_.8} parent=5 // pred_region
      %s141 = ssub.s32 %s9, 1
      // Predicated region
      $region13: #{_lambda_.8} parent=11 // pred_check
        %p142 = pneg %p73
      $region14: #{_lambda_.8} parent=11 // pred_check_branch
        %144 = sbr.rel (%p142) target = $region16
      $region15: #{_lambda_.8} parent=11 // pred_region
        %p145 = scmp.lt.s32.totalorder %s19, 0
        %s146 = scalar_select %p145, %s19, 0
        %s147 = smul.addr %s146, 4
        %s148 = scalar_lea.vmem %s1, %s147
      $region16: #{_lambda_.8} parent=11 // pred_fallthru
        _
      // Predicated region
      $region17: #{_lambda_.8} parent=11 // pred_check
        %p149 = pneg %p99
      $region18: #{_lambda_.8} parent=11 // pred_check_branch
        %151 = sbr.rel (%p149) target = $region20
      $region19: #{_lambda_.8} parent=11 // pred_region
        %p152 = scmp.lt.s32.totalorder %s19, 0
        %s153 = scalar_select %p152, %s19, 0
        %s154 = scalar_lea.vmem %s2, %s153
      $region20: #{_lambda_.8} parent=11 // pred_fallthru
        _
    $region12: #{_lambda_.8} parent=5 // pred_fallthru
      _
    %p155 = scmp.lt.s32.totalorder %s9, 2
    // Predicated region
    $region21: #{_lambda_.8} parent=5 // pred_check
      %p156 = pneg %p155
    $region22: #{_lambda_.8} parent=5 // pred_check_branch
      %158 = sbr.rel (%p156) target = $region24
    $region23: #{_lambda_.8} parent=5 // pred_region
      // Predicated region
      $region25: #{_lambda_.8} parent=23 // pred_check
        %p159 = pneg %p41
      $region26: #{_lambda_.8} parent=23 // pred_check_branch
        %161 = sbr.rel (%p159) target = $region28
      $region27: #{_lambda_.8} parent=23 // pred_region
        %s162 = smul.u32 2, %s16
        %p163 = scmp.lt.s32.totalorder %s162, 3
        %s164 = scalar_select %p163, %s162, 3
        %s165 = smul.addr %s164, 4
        %s166 = smul.addr %s165, 4
        %s167 = scalar_lea.vmem %s0, %s166
        %s168 = smul.u32 2, %s16
      $region28: #{_lambda_.8} parent=23 // pred_fallthru
        _
    $region24: #{_lambda_.8} parent=5 // pred_fallthru
      _
    %p169 = scmp.le.s32.totalorder 1, %s9
    %p170 = scmp.lt.s32.totalorder %s9, 3
    %p171 = pnand %p169, %p170
    %p172 = pneg %p171
    // Predicated region
    $region29: #{_lambda_.8} parent=5 // pred_check
      _
    $region30: #{_lambda_.8} parent=5 // pred_check_branch
      %174 = sbr.rel (%p171) target = $region32
    $region31: #{_lambda_.8} parent=5 // pred_region
      %s175 = ssub.s32 %s9, 1
      %s176 = smul.u32 2, %s18
      %p177 = scmp.lt.s32.totalorder %s176, 3
      %s178 = scalar_select %p177, %s176, 3
      %s179 = smul.addr %s178, 4
      %s180 = smul.addr %s179, 4
      %s181 = scalar_lea.vmem %s0, %s180
      %p182 = pneg %p47
      %p183 = pneg %p44
      %p184 = scmp.lt.s32.totalorder %s19, 0
      %s185 = scalar_select %p184, %s19, 0
      %s186 = smul.addr %s185, 4
      %s187 = scalar_lea.vmem %s1, %s186
      %p188 = pneg %p73
      %p189 = pneg %p70
      %p190 = scmp.lt.s32.totalorder %s19, 0
      %s191 = scalar_select %p190, %s19, 0
      %s192 = scalar_lea.vmem %s2, %s191
      %p193 = pneg %p99
      %p194 = pneg %p96
      %p195 = pneg %p127
      %p196 = pneg %p124
      %s197 = smul.u32 2, %s18
      %p198 = scmp.lt.s32.totalorder %s197, 3
      %s199 = scalar_select %p198, %s197, 3
      %p200 = scmp.lt.s32.totalorder %s19, 0
      %s201 = scalar_select %p200, %s19, 0
      %s202 = sadd.s32 %s201, %s199
      %s203 = smul.addr %s202, 8
      %s204 = scalar_lea.vmem %s3, %s203
      %s205 = smul.u32 2, %s18
      %p206 = scmp.lt.s32.totalorder %s205, 3
      %s207 = scalar_select %p206, %s205, 3
      %s208 = smul.addr %s207, 4
      %s209 = smul.addr %s208, 4
      %s210 = scalar_lea.vmem %s0, %s209
      %s211 = smul.u32 2, %s18
      %p212 = scmp.lt.s32.totalorder %s19, 0
      %s213 = scalar_select %p212, %s19, 0
      %s214 = smul.addr %s213, 4
      %s215 = scalar_lea.vmem %s1, %s214
      %p216 = scmp.lt.s32.totalorder %s19, 0
      %s217 = scalar_select %p216, %s19, 0
      %s218 = scalar_lea.vmem %s2, %s217
      %s219 = smul.u32 2, %s18
      %p220 = scmp.lt.s32.totalorder %s219, 3
      %s221 = scalar_select %p220, %s219, 3
      %p222 = scmp.lt.s32.totalorder %s19, 0
      %s223 = scalar_select %p222, %s19, 0
      %s224 = sadd.s32 %s223, %s221
      %s225 = smul.addr %s224, 8
      %s226 = scalar_lea.vmem %s3, %s225
      %s227 = smul.u32 2, %s18
      %v228 = vld [vmem:[%s210] sm:$0xff]
      %v229 = vld [vmem:[%s210 + $0x8] sm:$0xff]
      %v230 = vld [vmem:[%s210 + $0x10] sm:$0xff]
      %v231 = vld [vmem:[%s210 + $0x18] sm:$0xff]
      %v232 = vld [vmem:[%s215] sm:$0xf]
      %v233 = vld [vmem:[%s215 + $0x4] sm:$0xf]
      %v234 = vld [vmem:[%s215 + $0x8] sm:$0xf]
      %v235 = vld [vmem:[%s215 + $0xc] sm:$0xf]
      %v236 = vld [vmem:[%s215 + $0x10] sm:$0xf]
      %v237 = vld [vmem:[%s215 + $0x14] sm:$0xf]
      %v238 = vld [vmem:[%s215 + $0x18] sm:$0xf]
      %v239 = vld [vmem:[%s215 + $0x1c] sm:$0xf]
      %v240 = vld [vmem:[%s215 + $0x20] sm:$0xf]
      %v241 = vld [vmem:[%s215 + $0x24] sm:$0xf]
      %v242 = vld [vmem:[%s215 + $0x28] sm:$0xf]
      %v243 = vld [vmem:[%s215 + $0x2c] sm:$0xf]
      %v244 = vld [vmem:[%s215 + $0x30] sm:$0xf]
      %v245 = vld [vmem:[%s215 + $0x34] sm:$0xf]
      %v246 = vld [vmem:[%s215 + $0x38] sm:$0xf]
      %v247 = vld [vmem:[%s215 + $0x3c] sm:$0xf]
      %v248 = vld [vmem:[%s215 + $0x40] sm:$0xf]
      %v249 = vld [vmem:[%s215 + $0x44] sm:$0xf]
      %v250 = vld [vmem:[%s215 + $0x48] sm:$0xf]
      %v251 = vld [vmem:[%s215 + $0x4c] sm:$0xf]
      %v252 = vld [vmem:[%s215 + $0x50] sm:$0xf]
      %v253 = vld [vmem:[%s215 + $0x54] sm:$0xf]
      %v254 = vld [vmem:[%s215 + $0x58] sm:$0xf]
      %v255 = vld [vmem:[%s215 + $0x5c] sm:$0xf]
      %v256 = vld [vmem:[%s215 + $0x60] sm:$0xf]
      %v257 = vld [vmem:[%s215 + $0x64] sm:$0xf]
      %v258 = vld [vmem:[%s215 + $0x68] sm:$0xf]
      %v259 = vld [vmem:[%s215 + $0x6c] sm:$0xf]
      %v260 = vld [vmem:[%s215 + $0x70] sm:$0xf]
      %v261 = vld [vmem:[%s215 + $0x74] sm:$0xf]
      %v262 = vld [vmem:[%s215 + $0x78] sm:$0xf]
      %v263 = vld [vmem:[%s215 + $0x7c] sm:$0xf]
      %v264 = vld [vmem:[%s215 + $0x80] sm:$0xf]
      %v265 = vld [vmem:[%s215 + $0x84] sm:$0xf]
      %v266 = vld [vmem:[%s215 + $0x88] sm:$0xf]
      %v267 = vld [vmem:[%s215 + $0x8c] sm:$0xf]
      %v268 = vld [vmem:[%s215 + $0x90] sm:$0xf]
      %v269 = vld [vmem:[%s215 + $0x94] sm:$0xf]
      %v270 = vld [vmem:[%s215 + $0x98] sm:$0xf]
      %v271 = vld [vmem:[%s215 + $0x9c] sm:$0xf]
      %v272 = vld [vmem:[%s215 + $0xa0] sm:$0xf]
      %v273 = vld [vmem:[%s215 + $0xa4] sm:$0xf]
      %v274 = vld [vmem:[%s215 + $0xa8] sm:$0xf]
      %v275 = vld [vmem:[%s215 + $0xac] sm:$0xf]
      %v276 = vld [vmem:[%s215 + $0xb0] sm:$0xf]
      %v277 = vld [vmem:[%s215 + $0xb4] sm:$0xf]
      %v278 = vld [vmem:[%s215 + $0xb8] sm:$0xf]
      %v279 = vld [vmem:[%s215 + $0xbc] sm:$0xf]
      %v280 = vld [vmem:[%s215 + $0xc0] sm:$0xf]
      %v281 = vld [vmem:[%s215 + $0xc4] sm:$0xf]
      %v282 = vld [vmem:[%s215 + $0xc8] sm:$0xf]
      %v283 = vld [vmem:[%s215 + $0xcc] sm:$0xf]
      %v284 = vld [vmem:[%s215 + $0xd0] sm:$0xf]
      %v285 = vld [vmem:[%s215 + $0xd4] sm:$0xf]
      %v286 = vld [vmem:[%s215 + $0xd8] sm:$0xf]
      %v287 = vld [vmem:[%s215 + $0xdc] sm:$0xf]
      %v288 = vld [vmem:[%s215 + $0xe0] sm:$0xf]
      %v289 = vld [vmem:[%s215 + $0xe4] sm:$0xf]
      %v290 = vld [vmem:[%s215 + $0xe8] sm:$0xf]
      %v291 = vld [vmem:[%s215 + $0xec] sm:$0xf]
      %v292 = vld [vmem:[%s215 + $0xf0] sm:$0xf]
      %v293 = vld [vmem:[%s215 + $0xf4] sm:$0xf]
      %v294 = vld [vmem:[%s215 + $0xf8] sm:$0xf]
      %v295 = vld [vmem:[%s215 + $0xfc] sm:$0xf]
      %v296 = vld [vmem:[%s218] sm:$0x1]
      %v298 = vperm.slane %v296, 0
      %v304 = vunpack.c.l.b16 %v228
      %v305 = vunpack.c.h.b16 %v228
      %v306 = vunpack.c.l.b16 %v229
      %v307 = vunpack.c.h.b16 %v229
      %v308 = vunpack.c.l.b16 %v230
      %v309 = vunpack.c.h.b16 %v230
      %v310 = vunpack.c.l.b16 %v231
      %v311 = vunpack.c.h.b16 %v231
      %v312 = vpack.c.b16 %v308, %v304
      %v313 = vpack.c.b16 %v309, %v305
      %v314 = vpack.c.b16 %v310, %v306
      %v315 = vpack.c.b16 %v311, %v307
      %v384 = vunpack.c.l.b16 %v232
      %v385 = vunpack.c.l.b16 %v233
      %v386 = vunpack.c.l.b16 %v234
      %v387 = vunpack.c.l.b16 %v235
      %v388 = vunpack.c.l.b16 %v236
      %v389 = vunpack.c.l.b16 %v237
      %v390 = vunpack.c.l.b16 %v238
      %v391 = vunpack.c.l.b16 %v239
      %v392 = vunpack.c.l.b16 %v240
      %v393 = vunpack.c.l.b16 %v241
      %v394 = vunpack.c.l.b16 %v242
      %v395 = vunpack.c.l.b16 %v243
      %v396 = vunpack.c.l.b16 %v244
      %v397 = vunpack.c.l.b16 %v245
      %v398 = vunpack.c.l.b16 %v246
      %v399 = vunpack.c.l.b16 %v247
      %v400 = vunpack.c.l.b16 %v248
      %v401 = vunpack.c.l.b16 %v249
      %v402 = vunpack.c.l.b16 %v250
      %v403 = vunpack.c.l.b16 %v251
      %v404 = vunpack.c.l.b16 %v252
      %v405 = vunpack.c.l.b16 %v253
      %v406 = vunpack.c.l.b16 %v254
      %v407 = vunpack.c.l.b16 %v255
      %v408 = vunpack.c.l.b16 %v256
      %v409 = vunpack.c.l.b16 %v257
      %v410 = vunpack.c.l.b16 %v258
      %v411 = vunpack.c.l.b16 %v259
      %v412 = vunpack.c.l.b16 %v260
      %v413 = vunpack.c.l.b16 %v261
      %v414 = vunpack.c.l.b16 %v262
      %v415 = vunpack.c.l.b16 %v263
      %v416 = vunpack.c.l.b16 %v264
      %v417 = vunpack.c.l.b16 %v265
      %v418 = vunpack.c.l.b16 %v266
      %v419 = vunpack.c.l.b16 %v267
      %v420 = vunpack.c.l.b16 %v268
      %v421 = vunpack.c.l.b16 %v269
      %v422 = vunpack.c.l.b16 %v270
      %v423 = vunpack.c.l.b16 %v271
      %v424 = vunpack.c.l.b16 %v272
      %v425 = vunpack.c.l.b16 %v273
      %v426 = vunpack.c.l.b16 %v274
      %v427 = vunpack.c.l.b16 %v275
      %v428 = vunpack.c.l.b16 %v276
      %v429 = vunpack.c.l.b16 %v277
      %v430 = vunpack.c.l.b16 %v278
      %v431 = vunpack.c.l.b16 %v279
      %v432 = vunpack.c.l.b16 %v280
      %v433 = vunpack.c.l.b16 %v281
      %v434 = vunpack.c.l.b16 %v282
      %v435 = vunpack.c.l.b16 %v283
      %v436 = vunpack.c.l.b16 %v284
      %v437 = vunpack.c.l.b16 %v285
      %v438 = vunpack.c.l.b16 %v286
      %v439 = vunpack.c.l.b16 %v287
      %v440 = vunpack.c.l.b16 %v288
      %v441 = vunpack.c.l.b16 %v289
      %v442 = vunpack.c.l.b16 %v290
      %v443 = vunpack.c.l.b16 %v291
      %v444 = vunpack.c.l.b16 %v292
      %v445 = vunpack.c.l.b16 %v293
      %v446 = vunpack.c.l.b16 %v294
      %v447 = vunpack.c.l.b16 %v295
      %v448 = vpack.c.b16 %v385, %v384
      %v449 = vpack.c.b16 %v387, %v386
      %v450 = vpack.c.b16 %v389, %v388
      %v451 = vpack.c.b16 %v391, %v390
      %v452 = vpack.c.b16 %v393, %v392
      %v453 = vpack.c.b16 %v395, %v394
      %v454 = vpack.c.b16 %v397, %v396
      %v455 = vpack.c.b16 %v399, %v398
      %v456 = vpack.c.b16 %v401, %v400
      %v457 = vpack.c.b16 %v403, %v402
      %v458 = vpack.c.b16 %v405, %v404
      %v459 = vpack.c.b16 %v407, %v406
      %v460 = vpack.c.b16 %v409, %v408
      %v461 = vpack.c.b16 %v411, %v410
      %v462 = vpack.c.b16 %v413, %v412
      %v463 = vpack.c.b16 %v415, %v414
      %v464 = vpack.c.b16 %v417, %v416
      %v465 = vpack.c.b16 %v419, %v418
      %v466 = vpack.c.b16 %v421, %v420
      %v467 = vpack.c.b16 %v423, %v422
      %v468 = vpack.c.b16 %v425, %v424
      %v469 = vpack.c.b16 %v427, %v426
      %v470 = vpack.c.b16 %v429, %v428
      %v471 = vpack.c.b16 %v431, %v430
      %v472 = vpack.c.b16 %v433, %v432
      %v473 = vpack.c.b16 %v435, %v434
      %v474 = vpack.c.b16 %v437, %v436
      %v475 = vpack.c.b16 %v439, %v438
      %v476 = vpack.c.b16 %v441, %v440
      %v477 = vpack.c.b16 %v443, %v442
      %v478 = vpack.c.b16 %v445, %v444
      %v479 = vpack.c.b16 %v447, %v446
      %512 = vmatpush.bf16.msra.mxu0 %v455
      %513 = vmatpush.bf16.msra.mxu0 %v454
      %514 = vmatpush.bf16.msra.mxu0 %v453
      %515 = vmatpush.bf16.msra.mxu0 %v452
      %516 = vmatpush.bf16.msra.mxu0 %v451
      %517 = vmatpush.bf16.msra.mxu0 %v450
      %518 = vmatpush.bf16.msra.mxu0 %v449
      %519 = vmatpush.bf16.msra.mxu0 %v448
      %520 = vmatmul.bf16.gmra.mxu0 %v312
      %v521 = vpop.f32.mrf.mxu0
      %v522 = vadd.f32 %v298, %v521
      %v523 = vpop.f32.mrf.mxu0
      %v524 = vadd.f32 %v298, %v523
      %525 = vdwg.mxu0
      %526 = vmatpush.bf16.msra.mxu0 %v463
      %527 = vmatpush.bf16.msra.mxu0 %v462
      %528 = vmatpush.bf16.msra.mxu0 %v461
      %529 = vmatpush.bf16.msra.mxu0 %v460
      %530 = vmatpush.bf16.msra.mxu0 %v459
      %531 = vmatpush.bf16.msra.mxu0 %v458
      %532 = vmatpush.bf16.msra.mxu0 %v457
      %533 = vmatpush.bf16.msra.mxu0 %v456
      %534 = vmatmul.bf16.gmra.mxu0 %v313
      %v535 = vpop.f32.mrf.mxu0
      %v536 = vadd.f32 %v522, %v535
      %v537 = vpop.f32.mrf.mxu0
      %v538 = vadd.f32 %v524, %v537
      %539 = vdwg.mxu0
      %540 = vmatpush.bf16.msra.mxu0 %v471
      %541 = vmatpush.bf16.msra.mxu0 %v470
      %542 = vmatpush.bf16.msra.mxu0 %v469
      %543 = vmatpush.bf16.msra.mxu0 %v468
      %544 = vmatpush.bf16.msra.mxu0 %v467
      %545 = vmatpush.bf16.msra.mxu0 %v466
      %546 = vmatpush.bf16.msra.mxu0 %v465
      %547 = vmatpush.bf16.msra.mxu0 %v464
      %548 = vmatmul.bf16.gmra.mxu0 %v314
      %v549 = vpop.f32.mrf.mxu0
      %v550 = vadd.f32 %v536, %v549
      %v551 = vpop.f32.mrf.mxu0
      %v552 = vadd.f32 %v538, %v551
      %553 = vdwg.mxu0
      %554 = vmatpush.bf16.msra.mxu0 %v479
      %555 = vmatpush.bf16.msra.mxu0 %v478
      %556 = vmatpush.bf16.msra.mxu0 %v477
      %557 = vmatpush.bf16.msra.mxu0 %v476
      %558 = vmatpush.bf16.msra.mxu0 %v475
      %559 = vmatpush.bf16.msra.mxu0 %v474
      %560 = vmatpush.bf16.msra.mxu0 %v473
      %561 = vmatpush.bf16.msra.mxu0 %v472
      %562 = vmatmul.bf16.gmra.mxu0 %v315
      %v563 = vpop.f32.mrf.mxu0
      %v564 = vadd.f32 %v550, %v563
      %v565 = vpop.f32.mrf.mxu0
      %v566 = vadd.f32 %v552, %v565
      %567 = vdwg.mxu0
      %vm568 = vcmp.ge.f32.partialorder %v564, 0.0
      %vm569 = vcmp.ge.f32.partialorder %v566, 0.0
      %v570 = vmul.f32 %v564, 0.2
      %v571 = vmul.f32 %v566, 0.2
      %v572 = vsel %vm568, %v564, %v570
      %v573 = vsel %vm569, %v566, %v571
      %574 = vst [vmem:[%s226] sm:$0xff] %v572
      %575 = vst [vmem:[%s226 + $0x8] sm:$0xff] %v573
      %s576 = smul.u32 2, %s18
      %p577 = scmp.lt.s32.totalorder %s576, 3
      %s578 = scalar_select %p577, %s576, 3
      %p579 = scmp.lt.s32.totalorder %s19, 0
      %s580 = scalar_select %p579, %s19, 0
      %s581 = sadd.s32 %s580, %s578
      %s582 = smul.addr %s581, 8
      %s583 = scalar_lea.vmem %s3, %s582
      // Predicated region
      $region33: #{_lambda_.8} parent=31 // pred_check
        %p584 = pneg %p124
      $region34: #{_lambda_.8} parent=31 // pred_check_branch
        %586 = sbr.rel (%p584) target = $region36
      $region35: #{_lambda_.8} parent=31 // pred_region
        %s587 = smul.u32 2, %s18
      $region36: #{_lambda_.8} parent=31 // pred_fallthru
        _
    $region32: #{_lambda_.8} parent=5 // pred_fallthru
      _
    %p588 = scmp.le.s32.totalorder 2, %s9
    // Predicated region
    $region37: #{_lambda_.8} parent=5 // pred_check
      %p589 = pneg %p588
    $region38: #{_lambda_.8} parent=5 // pred_check_branch
      %591 = sbr.rel (%p589) target = $region40
    $region39: #{_lambda_.8} parent=5 // pred_region
      %s592 = ssub.s32 %s9, 2
      // Predicated region
      $region41: #{_lambda_.8} parent=39 // pred_check
        %p593 = pneg %p130
      $region42: #{_lambda_.8} parent=39 // pred_check_branch
        %595 = sbr.rel (%p593) target = $region44
      $region43: #{_lambda_.8} parent=39 // pred_region
        %s596 = smul.u32 2, %s20
        %p597 = scmp.lt.s32.totalorder %s596, 3
        %s598 = scalar_select %p597, %s596, 3
        %p599 = scmp.lt.s32.totalorder %s21, 0
        %s600 = scalar_select %p599, %s21, 0
        %s601 = sadd.s32 %s600, %s598
        %s602 = smul.addr %s601, 8
        %s603 = scalar_lea.vmem %s3, %s602
      $region44: #{_lambda_.8} parent=39 // pred_fallthru
        _
    $region40: #{_lambda_.8} parent=5 // pred_fallthru
      _
  $region6: #{_lambda_.8} parent=0 // loop_footer
    %s13 = sadd.s32 1, %s9
  $region7: #{_lambda_.8} parent=0 // loop_footer_branch
    %8 = sbr.rel target = $region3
  $region8: #{_lambda_.8} parent=0 // loop_exit
    _

// kernel: _lambda_.9
$region0: #{_lambda_.9}
  #allocation0 [shape = 'u32[]', space=smem, size = 0x4, offset = 0x4, fixed_abs, tag = 'smem constant byte address 0x4 - core index']
  #allocation1 [shape = 'u32[72,128]{1,0:T(1,128)}', space=vmem, size = 0x9000, scoped, tag = 'internal scratch']
  %s0 = inlined_call_operand.vmem [shape: f32[2,9,64], index: 0, kind: input, shape index: {}]
  %s1 = inlined_call_operand.vmem [shape: f32[64,128], index: 1, kind: input, shape index: {}]
  %s2 = inlined_call_operand.vmem [shape: f32[64,128], index: 2, kind: input, shape index: {}]
  %s3 = inlined_call_operand.vmem [shape: f32[64,128], index: 3, kind: input, shape index: {}]
  %s4 = inlined_call_operand.vmem [shape: f32[1,128], index: 4, kind: input, shape index: {}]
  %s5 = inlined_call_operand.vmem [shape: f32[9,128,128], index: 5, kind: input, shape index: {}]
  %s6 = inlined_call_operand.hbm [shape: f32[2,1,128], index: 6, kind: output, shape index: {0}]
  %s7 = inlined_call_operand.vmem [shape: f32[2,1,128], index: 7, kind: output, shape index: {1}]
  %s8 = inlined_call_operand.vmem [shape: f32[2,9,1], index: 8, kind: output, shape index: {2}]
  %9 = xla_tuple %s6, %s7, %s8
  %s10 = sld [smem:[#allocation0]]
  $region50: #{_lambda_.9} parent=0
    _
  %s12 = ssub.s32 1, %s10
  %s13 = scalar_select 0, %s12, %s10
  $region1: #{_lambda_.9} parent=0
    #allocation2 [shape = 'u8[1024]{0}', space=vmem, size = 0x400, scoped, tag = 'output window, operand 0, single buffered']
    #allocation3 [shape = 's32[1]{0}', space=sflag, size = 0x4, scoped, tag = 'scoped memory for _lambda_.9']
    %14 = vsyncpa [#allocation3], 0
    // Predicated region
    $region2: #{_lambda_.9} parent=1 // pred_check
      _
    $region3: #{_lambda_.9} parent=1 // pred_check_branch
      %16 = sbr.rel (0) target = $region5
    $region4: #{_lambda_.9} parent=1 // pred_region
      _
    $region5: #{_lambda_.9} parent=1 // pred_fallthru
      _
    // Predicated region
    $region6: #{_lambda_.9} parent=1 // pred_check
      _
    $region7: #{_lambda_.9} parent=1 // pred_check_branch
      %18 = sbr.rel (0) target = $region9
    $region8: #{_lambda_.9} parent=1 // pred_region
      _
    $region9: #{_lambda_.9} parent=1 // pred_fallthru
      _
    // Predicated region
    $region10: #{_lambda_.9} parent=1 // pred_check
      _
    $region11: #{_lambda_.9} parent=1 // pred_check_branch
      %20 = sbr.rel (0) target = $region13
    $region12: #{_lambda_.9} parent=1 // pred_region
      _
    $region13: #{_lambda_.9} parent=1 // pred_fallthru
      _
    // Predicated region
    $region14: #{_lambda_.9} parent=1 // pred_check
      _
    $region15: #{_lambda_.9} parent=1 // pred_check_branch
      %22 = sbr.rel (0) target = $region17
    $region16: #{_lambda_.9} parent=1 // pred_region
      _
    $region17: #{_lambda_.9} parent=1 // pred_fallthru
      _
    // Predicated region
    $region18: #{_lambda_.9} parent=1 // pred_check
      _
    $region19: #{_lambda_.9} parent=1 // pred_check_branch
      %24 = sbr.rel (0) target = $region21
    $region20: #{_lambda_.9} parent=1 // pred_region
      _
    $region21: #{_lambda_.9} parent=1 // pred_fallthru
      _
    // Predicated region
    $region22: #{_lambda_.9} parent=1 // pred_check
      _
    $region23: #{_lambda_.9} parent=1 // pred_check_branch
      %26 = sbr.rel (0) target = $region25
    $region24: #{_lambda_.9} parent=1 // pred_region
      _
    $region25: #{_lambda_.9} parent=1 // pred_fallthru
      _
    %v27 = vlaneseq
    %v28 = vshrl.u32 %v27, 7
    %v29 = vadd.s32 %v28, 8
    %v30 = vld [vmem:[%s0] sm:$0xff]
    %v31 = vld [vmem:[%s0 + $0x8] sm:$0x1]
    %vm32 = vcmask 523264
    %v33 = vsel %vm32, %v30, 0.0
    %vm34 = vcmask 516096
    %v35 = vsel %vm34, %v31, 0.0
    %v36 = vadd.f32 %v33, %v35
    %v37 = vrot.slane %v36, 4
    %v38 = vadd.f32 %v36, %v37
    %v39 = vrot.slane %v38, 2
    %v40 = vadd.f32 %v38, %v39
    %v41 = vrot.slane %v40, 1
    %v42 = vadd.f32 %v40, %v41
    %v43 = vrcp.pop 9.0
    %v44 = vmul.f32 9.0, %v43
    %v45 = vsub.f32 1.0, %v44
    %v46 = vmul.f32 %v43, %v45
    %v47 = vadd.f32 %v43, %v46
    %vm48 = vweird.f32 %v43
    %v49 = vsel %vm48, %v43, %v47
    %v50 = vmul.f32 %v42, %v49
    %v51 = vsel %vm32, %v30, -inf
    %v52 = vsel %vm34, %v31, -inf
    %v53 = vmax.f32 %v51, %v52
    %v54 = vrot.slane %v53, 4
    %v55 = vmax.f32 %v53, %v54
    %v56 = vrot.slane %v55, 2
    %v57 = vmax.f32 %v55, %v56
    %v58 = vrot.slane %v57, 1
    %v59 = vmax.f32 %v57, %v58
    %v60 = vld [vmem:[%s1] sm:$0xff]
    %v61 = vld [vmem:[%s1 + $0x8] sm:$0xff]
    %v62 = vld [vmem:[%s1 + $0x10] sm:$0xff]
    %v63 = vld [vmem:[%s1 + $0x18] sm:$0xff]
    %v64 = vld [vmem:[%s1 + $0x20] sm:$0xff]
    %v65 = vld [vmem:[%s1 + $0x28] sm:$0xff]
    %v66 = vld [vmem:[%s1 + $0x30] sm:$0xff]
    %v67 = vld [vmem:[%s1 + $0x38] sm:$0xff]
    %v68 = vld [vmem:[%s2] sm:$0xff]
    %v69 = vld [vmem:[%s2 + $0x8] sm:$0xff]
    %v70 = vld [vmem:[%s2 + $0x10] sm:$0xff]
    %v71 = vld [vmem:[%s2 + $0x18] sm:$0xff]
    %v72 = vld [vmem:[%s2 + $0x20] sm:$0xff]
    %v73 = vld [vmem:[%s2 + $0x28] sm:$0xff]
    %v74 = vld [vmem:[%s2 + $0x30] sm:$0xff]
    %v75 = vld [vmem:[%s2 + $0x38] sm:$0xff]
    %v77 = vsel %vm32, %v59, 0
    %79 = vmatpush.msra.mxu0 0.0
    %80 = vmatpush.msra.mxu0 0.0
    %81 = vmatpush.msra.mxu0 0.0
    %82 = vmatpush.msra.mxu0 0.0
    %83 = vmatpush.msra.mxu0 0.0
    %84 = vmatpush.msra.mxu0 0.0
    %85 = vmatpush.msra.mxu0 0.0
    %86 = vmatpush.msra.mxu0 0.0
    %87 = vmatpush.msra.mxu0 %v75
    %88 = vmatpush.msra.mxu0 %v74
    %89 = vmatpush.msra.mxu0 %v73
    %90 = vmatpush.msra.mxu0 %v72
    %91 = vmatpush.msra.mxu0 %v71
    %92 = vmatpush.msra.mxu0 %v70
    %93 = vmatpush.msra.mxu0 %v69
    %94 = vmatpush.msra.mxu0 %v68
    %95 = vmatmul.f32.gmra.mxu0 %v77
    %v96 = vpop.f32.mrf.mxu0
    %v97 = vadd.f32 0.0, %v96
    %98 = vdwg.mxu0
    %v100 = vsel %vm32, %v50, 0
    %102 = vmatpush.msra.mxu0 0.0
    %103 = vmatpush.msra.mxu0 0.0
    %104 = vmatpush.msra.mxu0 0.0
    %105 = vmatpush.msra.mxu0 0.0
    %106 = vmatpush.msra.mxu0 0.0
    %107 = vmatpush.msra.mxu0 0.0
    %108 = vmatpush.msra.mxu0 0.0
    %109 = vmatpush.msra.mxu0 0.0
    %110 = vmatpush.msra.mxu0 %v67
    %111 = vmatpush.msra.mxu0 %v66
    %112 = vmatpush.msra.mxu0 %v65
    %113 = vmatpush.msra.mxu0 %v64
    %114 = vmatpush.msra.mxu0 %v63
    %115 = vmatpush.msra.mxu0 %v62
    %116 = vmatpush.msra.mxu0 %v61
    %117 = vmatpush.msra.mxu0 %v60
    %118 = vmatmul.f32.gmra.mxu0 %v100
    %v119 = vpop.f32.mrf.mxu0
    %v120 = vadd.f32 %v97, %v119
    %121 = vdwg.mxu0
    %122 = vst [vmem:[#allocation2] sm:$0x1] %v120
    %v123 = vld [vmem:[%s3] sm:$0xff]
    %v124 = vld [vmem:[%s3 + $0x8] sm:$0xff]
    %v125 = vld [vmem:[%s3 + $0x10] sm:$0xff]
    %v126 = vld [vmem:[%s3 + $0x18] sm:$0xff]
    %v127 = vld [vmem:[%s3 + $0x20] sm:$0xff]
    %v128 = vld [vmem:[%s3 + $0x28] sm:$0xff]
    %v129 = vld [vmem:[%s3 + $0x30] sm:$0xff]
    %v130 = vld [vmem:[%s3 + $0x38] sm:$0xff]
    %v131 = vld [vmem:[%s4] sm:$0x1]
    %v133 = vperm.slane %v131, 0
    %v136 = vsel %vm32, %v30, 0
    %v139 = vsel %vm32, %v31, 0
    %141 = vmatpush.msra.mxu0 0.0
    %142 = vmatpush.msra.mxu0 0.0
    %143 = vmatpush.msra.mxu0 0.0
    %144 = vmatpush.msra.mxu0 0.0
    %145 = vmatpush.msra.mxu0 0.0
    %146 = vmatpush.msra.mxu0 0.0
    %147 = vmatpush.msra.mxu0 0.0
    %148 = vmatpush.msra.mxu0 0.0
    %149 = vmatpush.msra.mxu0 %v130
    %150 = vmatpush.msra.mxu0 %v129
    %151 = vmatpush.msra.mxu0 %v128
    %152 = vmatpush.msra.mxu0 %v127
    %153 = vmatpush.msra.mxu0 %v126
    %154 = vmatpush.msra.mxu0 %v125
    %155 = vmatpush.msra.mxu0 %v124
    %156 = vmatpush.msra.mxu0 %v123
    %157 = vmatmul.f32.gmra.mxu0 %v136
    %v158 = vpop.f32.mrf.mxu0
    %v159 = vadd.f32 %v133, %v158
    %160 = vmatmul.f32.gmra.mxu0 %v139
    %v161 = vpop.f32.mrf.mxu0
    %v162 = vadd.f32 %v133, %v161
    %163 = vdwg.mxu0
    %vm164 = vcmp.ge.f32.partialorder %v159, 0.0
    %vm165 = vcmp.ge.f32.partialorder %v162, 0.0
    %v166 = vmul.f32 %v159, 0.2
    %v167 = vmul.f32 %v162, 0.2
    %v168 = vsel %vm164, %v159, %v166
    %v169 = vsel %vm165, %v162, %v167
    %170 = vadd.xlane.f32.xlu0 %v168
    %v171 = vpop.xlane.xlu0 %170
    %vm172 = vcmask 1040384
    %v173 = vsel %vm172, %v169, 0.0
    %174 = vadd.xlane.f32.xlu0 %v173
    %v175 = vpop.xlane.xlu0 %174
    %vm176 = vcmask 7168
    %177 = vst.msk [vmem:[%s8] sm:$0xff] %vm176, %v171
    %vm178 = vcmask 0
    %179 = vst.msk [vmem:[%s8 + $0x8] sm:$0x1] %vm178, %v175
    %vm180 = vcmp.eq.s32.totalorder %v28, 0
    %vm181 = vcmp.eq.s32.totalorder %v29, 0
    %v182 = vsel %vm180, 1, 0
    %v183 = vsel %vm181, 1, 0
    %vm184 = vcmp.eq.s32.totalorder %v182, 1
    %vm185 = vcmp.eq.s32.totalorder %v183, 1
    %v186 = vsel %vm184, %v168, 0.0
    %v187 = vsel %vm185, %v169, 0.0
    %v188 = vsel %vm172, %v187, 0.0
    %v189 = vadd.f32 %v186, %v188
    %v190 = vrot.slane %v189, 4
    %v191 = vadd.f32 %v189, %v190
    %v192 = vrot.slane %v191, 2
    %v193 = vadd.f32 %v191, %v192
    %v194 = vrot.slane %v193, 1
    %v195 = vadd.f32 %v193, %v194
    %v196 = vld [vmem:[%s5] sm:$0xff]
    %v197 = vld [vmem:[%s5 + $0x8] sm:$0xff]
    %v198 = vld [vmem:[%s5 + $0x10] sm:$0xff]
    %v199 = vld [vmem:[%s5 + $0x18] sm:$0xff]
    %v200 = vld [vmem:[%s5 + $0x20] sm:$0xff]
    %v201 = vld [vmem:[%s5 + $0x28] sm:$0xff]
    %v202 = vld [vmem:[%s5 + $0x30] sm:$0xff]
    %v203 = vld [vmem:[%s5 + $0x38] sm:$0xff]
    %v204 = vld [vmem:[%s5 + $0x40] sm:$0xff]
    %v205 = vld [vmem:[%s5 + $0x48] sm:$0xff]
    %v206 = vld [vmem:[%s5 + $0x50] sm:$0xff]
    %v207 = vld [vmem:[%s5 + $0x58] sm:$0xff]
    %v208 = vld [vmem:[%s5 + $0x60] sm:$0xff]
    %v209 = vld [vmem:[%s5 + $0x68] sm:$0xff]
    %v210 = vld [vmem:[%s5 + $0x70] sm:$0xff]
    %v211 = vld [vmem:[%s5 + $0x78] sm:$0xff]
    %vm212 = vcmp.eq.s32.totalorder %v28, 1
    %vm213 = vcmp.eq.s32.totalorder %v29, 1
    %v214 = vsel %vm212, 1, 0
    %v215 = vsel %vm213, 1, 0
    %vm216 = vcmp.eq.s32.totalorder %v214, 1
    %vm217 = vcmp.eq.s32.totalorder %v215, 1
    %v218 = vsel %vm216, %v168, 0.0
    %v219 = vsel %vm217, %v169, 0.0
    %v220 = vsel %vm172, %v219, 0.0
    %v221 = vadd.f32 %v218, %v220
    %v222 = vrot.slane %v221, 4
    %v223 = vadd.f32 %v221, %v222
    %v224 = vrot.slane %v223, 2
    %v225 = vadd.f32 %v223, %v224
    %v226 = vrot.slane %v225, 1
    %v227 = vadd.f32 %v225, %v226
    %s228 = scalar_lea.vmem %s5, 128
    %v229 = vld [vmem:[%s228] sm:$0xff]
    %v230 = vld [vmem:[%s228 + $0x8] sm:$0xff]
    %v231 = vld [vmem:[%s228 + $0x10] sm:$0xff]
    %v232 = vld [vmem:[%s228 + $0x18] sm:$0xff]
    %v233 = vld [vmem:[%s228 + $0x20] sm:$0xff]
    %v234 = vld [vmem:[%s228 + $0x28] sm:$0xff]
    %v235 = vld [vmem:[%s228 + $0x30] sm:$0xff]
    %v236 = vld [vmem:[%s228 + $0x38] sm:$0xff]
    %v237 = vld [vmem:[%s228 + $0x40] sm:$0xff]
    %v238 = vld [vmem:[%s228 + $0x48] sm:$0xff]
    %v239 = vld [vmem:[%s228 + $0x50] sm:$0xff]
    %v240 = vld [vmem:[%s228 + $0x58] sm:$0xff]
    %v241 = vld [vmem:[%s228 + $0x60] sm:$0xff]
    %v242 = vld [vmem:[%s228 + $0x68] sm:$0xff]
    %v243 = vld [vmem:[%s228 + $0x70] sm:$0xff]
    %v244 = vld [vmem:[%s228 + $0x78] sm:$0xff]
    %245 = vmatpush.msra.mxu0 %v244
    %246 = vmatpush.msra.mxu0 %v243
    %247 = vmatpush.msra.mxu0 %v242
    %248 = vmatpush.msra.mxu0 %v241
    %249 = vmatpush.msra.mxu0 %v240
    %250 = vmatpush.msra.mxu0 %v239
    %251 = vmatpush.msra.mxu0 %v238
    %252 = vmatpush.msra.mxu0 %v237
    %253 = vmatpush.msra.mxu0 %v236
    %254 = vmatpush.msra.mxu0 %v235
    %255 = vmatpush.msra.mxu0 %v234
    %256 = vmatpush.msra.mxu0 %v233
    %257 = vmatpush.msra.mxu0 %v232
    %258 = vmatpush.msra.mxu0 %v231
    %259 = vmatpush.msra.mxu0 %v230
    %260 = vmatpush.msra.mxu0 %v229
    %261 = vmatmul.f32.gmra.mxu0 %v227
    %v262 = vpop.f32.mrf.mxu0
    %v263 = vadd.f32 0.0, %v262
    %264 = vdwg.mxu0
    %265 = vmatpush.msra.mxu0 %v211
    %266 = vmatpush.msra.mxu0 %v210
    %267 = vmatpush.msra.mxu0 %v209
    %268 = vmatpush.msra.mxu0 %v208
    %269 = vmatpush.msra.mxu0 %v207
    %270 = vmatpush.msra.mxu0 %v206
    %271 = vmatpush.msra.mxu0 %v205
    %272 = vmatpush.msra.mxu0 %v204
    %273 = vmatpush.msra.mxu0 %v203
    %274 = vmatpush.msra.mxu0 %v202
    %275 = vmatpush.msra.mxu0 %v201
    %276 = vmatpush.msra.mxu0 %v200
    %277 = vmatpush.msra.mxu0 %v199
    %278 = vmatpush.msra.mxu0 %v198
    %279 = vmatpush.msra.mxu0 %v197
    %280 = vmatpush.msra.mxu0 %v196
    %281 = vmatmul.f32.gmra.mxu0 %v195
    %v282 = vpop.f32.mrf.mxu0
    %v283 = vadd.f32 %v263, %v282
    %284 = vdwg.mxu0
    %vm285 = vcmp.eq.s32.totalorder %v28, 2
    %vm286 = vcmp.eq.s32.totalorder %v29, 2
    %v287 = vsel %vm285, 1, 0
    %v288 = vsel %vm286, 1, 0
    %vm289 = vcmp.eq.s32.totalorder %v287, 1
    %vm290 = vcmp.eq.s32.totalorder %v288, 1
    %v291 = vsel %vm289, %v168, 0.0
    %v292 = vsel %vm290, %v169, 0.0
    %v293 = vsel %vm172, %v292, 0.0
    %v294 = vadd.f32 %v291, %v293
    %v295 = vrot.slane %v294, 4
    %v296 = vadd.f32 %v294, %v295
    %v297 = vrot.slane %v296, 2
    %v298 = vadd.f32 %v296, %v297
    %v299 = vrot.slane %v298, 1
    %v300 = vadd.f32 %v298, %v299
    %s301 = scalar_lea.vmem %s5, 256
    %v302 = vld [vmem:[%s301] sm:$0xff]
    %v303 = vld [vmem:[%s301 + $0x8] sm:$0xff]
    %v304 = vld [vmem:[%s301 + $0x10] sm:$0xff]
    %v305 = vld [vmem:[%s301 + $0x18] sm:$0xff]
    %v306 = vld [vmem:[%s301 + $0x20] sm:$0xff]
    %v307 = vld [vmem:[%s301 + $0x28] sm:$0xff]
    %v308 = vld [vmem:[%s301 + $0x30] sm:$0xff]
    %v309 = vld [vmem:[%s301 + $0x38] sm:$0xff]
    %v310 = vld [vmem:[%s301 + $0x40] sm:$0xff]
    %v311 = vld [vmem:[%s301 + $0x48] sm:$0xff]
    %v312 = vld [vmem:[%s301 + $0x50] sm:$0xff]
    %v313 = vld [vmem:[%s301 + $0x58] sm:$0xff]
    %v314 = vld [vmem:[%s301 + $0x60] sm:$0xff]
    %v315 = vld [vmem:[%s301 + $0x68] sm:$0xff]
    %v316 = vld [vmem:[%s301 + $0x70] sm:$0xff]
    %v317 = vld [vmem:[%s301 + $0x78] sm:$0xff]
    %318 = vmatpush.msra.mxu0 %v317
    %319 = vmatpush.msra.mxu0 %v316
    %320 = vmatpush.msra.mxu0 %v315
    %321 = vmatpush.msra.mxu0 %v314
    %322 = vmatpush.msra.mxu0 %v313
    %323 = vmatpush.msra.mxu0 %v312
    %324 = vmatpush.msra.mxu0 %v311
    %325 = vmatpush.msra.mxu0 %v310
    %326 = vmatpush.msra.mxu0 %v309
    %327 = vmatpush.msra.mxu0 %v308
    %328 = vmatpush.msra.mxu0 %v307
    %329 = vmatpush.msra.mxu0 %v306
    %330 = vmatpush.msra.mxu0 %v305
    %331 = vmatpush.msra.mxu0 %v304
    %332 = vmatpush.msra.mxu0 %v303
    %333 = vmatpush.msra.mxu0 %v302
    %334 = vmatmul.f32.gmra.mxu0 %v300
    %v335 = vpop.f32.mrf.mxu0
    %v336 = vadd.f32 0.0, %v335
    %337 = vdwg.mxu0
    %v338 = vadd.f32 %v283, %v336
    %vm339 = vcmp.eq.s32.totalorder %v28, 3
    %vm340 = vcmp.eq.s32.totalorder %v29, 3
    %v341 = vsel %vm339, 1, 0
    %v342 = vsel %vm340, 1, 0
    %vm343 = vcmp.eq.s32.totalorder %v341, 1
    %vm344 = vcmp.eq.s32.totalorder %v342, 1
    %v345 = vsel %vm343, %v168, 0.0
    %v346 = vsel %vm344, %v169, 0.0
    %v347 = vsel %vm172, %v346, 0.0
    %v348 = vadd.f32 %v345, %v347
    %v349 = vrot.slane %v348, 4
    %v350 = vadd.f32 %v348, %v349
    %v351 = vrot.slane %v350, 2
    %v352 = vadd.f32 %v350, %v351
    %v353 = vrot.slane %v352, 1
    %v354 = vadd.f32 %v352, %v353
    %s355 = scalar_lea.vmem %s5, 384
    %v356 = vld [vmem:[%s355] sm:$0xff]
    %v357 = vld [vmem:[%s355 + $0x8] sm:$0xff]
    %v358 = vld [vmem:[%s355 + $0x10] sm:$0xff]
    %v359 = vld [vmem:[%s355 + $0x18] sm:$0xff]
    %v360 = vld [vmem:[%s355 + $0x20] sm:$0xff]
    %v361 = vld [vmem:[%s355 + $0x28] sm:$0xff]
    %v362 = vld [vmem:[%s355 + $0x30] sm:$0xff]
    %v363 = vld [vmem:[%s355 + $0x38] sm:$0xff]
    %v364 = vld [vmem:[%s355 + $0x40] sm:$0xff]
    %v365 = vld [vmem:[%s355 + $0x48] sm:$0xff]
    %v366 = vld [vmem:[%s355 + $0x50] sm:$0xff]
    %v367 = vld [vmem:[%s355 + $0x58] sm:$0xff]
    %v368 = vld [vmem:[%s355 + $0x60] sm:$0xff]
    %v369 = vld [vmem:[%s355 + $0x68] sm:$0xff]
    %v370 = vld [vmem:[%s355 + $0x70] sm:$0xff]
    %v371 = vld [vmem:[%s355 + $0x78] sm:$0xff]
    %372 = vmatpush.msra.mxu0 %v371
    %373 = vmatpush.msra.mxu0 %v370
    %374 = vmatpush.msra.mxu0 %v369
    %375 = vmatpush.msra.mxu0 %v368
    %376 = vmatpush.msra.mxu0 %v367
    %377 = vmatpush.msra.mxu0 %v366
    %378 = vmatpush.msra.mxu0 %v365
    %379 = vmatpush.msra.mxu0 %v364
    %380 = vmatpush.msra.mxu0 %v363
    %381 = vmatpush.msra.mxu0 %v362
    %382 = vmatpush.msra.mxu0 %v361
    %383 = vmatpush.msra.mxu0 %v360
    %384 = vmatpush.msra.mxu0 %v359
    %385 = vmatpush.msra.mxu0 %v358
    %386 = vmatpush.msra.mxu0 %v357
    %387 = vmatpush.msra.mxu0 %v356
    %388 = vmatmul.f32.gmra.mxu0 %v354
    %v389 = vpop.f32.mrf.mxu0
    %v390 = vadd.f32 0.0, %v389
    %391 = vdwg.mxu0
    %v392 = vadd.f32 %v338, %v390
    %vm393 = vcmp.eq.s32.totalorder %v28, 4
    %vm394 = vcmp.eq.s32.totalorder %v29, 4
    %v395 = vsel %vm393, 1, 0
    %v396 = vsel %vm394, 1, 0
    %vm397 = vcmp.eq.s32.totalorder %v395, 1
    %vm398 = vcmp.eq.s32.totalorder %v396, 1
    %v399 = vsel %vm397, %v168, 0.0
    %v400 = vsel %vm398, %v169, 0.0
    %v401 = vsel %vm172, %v400, 0.0
    %v402 = vadd.f32 %v399, %v401
    %v403 = vrot.slane %v402, 4
    %v404 = vadd.f32 %v402, %v403
    %v405 = vrot.slane %v404, 2
    %v406 = vadd.f32 %v404, %v405
    %v407 = vrot.slane %v406, 1
    %v408 = vadd.f32 %v406, %v407
    %s409 = scalar_lea.vmem %s5, 512
    %v410 = vld [vmem:[%s409] sm:$0xff]
    %v411 = vld [vmem:[%s409 + $0x8] sm:$0xff]
    %v412 = vld [vmem:[%s409 + $0x10] sm:$0xff]
    %v413 = vld [vmem:[%s409 + $0x18] sm:$0xff]
    %v414 = vld [vmem:[%s409 + $0x20] sm:$0xff]
    %v415 = vld [vmem:[%s409 + $0x28] sm:$0xff]
    %v416 = vld [vmem:[%s409 + $0x30] sm:$0xff]
    %v417 = vld [vmem:[%s409 + $0x38] sm:$0xff]
    %v418 = vld [vmem:[%s409 + $0x40] sm:$0xff]
    %v419 = vld [vmem:[%s409 + $0x48] sm:$0xff]
    %v420 = vld [vmem:[%s409 + $0x50] sm:$0xff]
    %v421 = vld [vmem:[%s409 + $0x58] sm:$0xff]
    %v422 = vld [vmem:[%s409 + $0x60] sm:$0xff]
    %v423 = vld [vmem:[%s409 + $0x68] sm:$0xff]
    %v424 = vld [vmem:[%s409 + $0x70] sm:$0xff]
    %v425 = vld [vmem:[%s409 + $0x78] sm:$0xff]
    %426 = vmatpush.msra.mxu0 %v425
    %427 = vmatpush.msra.mxu0 %v424
    %428 = vmatpush.msra.mxu0 %v423
    %429 = vmatpush.msra.mxu0 %v422
    %430 = vmatpush.msra.mxu0 %v421
    %431 = vmatpush.msra.mxu0 %v420
    %432 = vmatpush.msra.mxu0 %v419
    %433 = vmatpush.msra.mxu0 %v418
    %434 = vmatpush.msra.mxu0 %v417
    %435 = vmatpush.msra.mxu0 %v416
    %436 = vmatpush.msra.mxu0 %v415
    %437 = vmatpush.msra.mxu0 %v414
    %438 = vmatpush.msra.mxu0 %v413
    %439 = vmatpush.msra.mxu0 %v412
    %440 = vmatpush.msra.mxu0 %v411
    %441 = vmatpush.msra.mxu0 %v410
    %442 = vmatmul.f32.gmra.mxu0 %v408
    %v443 = vpop.f32.mrf.mxu0
    %v444 = vadd.f32 0.0, %v443
    %445 = vdwg.mxu0
    %v446 = vadd.f32 %v392, %v444
    %vm447 = vcmp.eq.s32.totalorder %v28, 5
    %vm448 = vcmp.eq.s32.totalorder %v29, 5
    %v449 = vsel %vm447, 1, 0
    %v450 = vsel %vm448, 1, 0
    %vm451 = vcmp.eq.s32.totalorder %v449, 1
    %vm452 = vcmp.eq.s32.totalorder %v450, 1
    %v453 = vsel %vm451, %v168, 0.0
    %v454 = vsel %vm452, %v169, 0.0
    %v455 = vsel %vm172, %v454, 0.0
    %v456 = vadd.f32 %v453, %v455
    %v457 = vrot.slane %v456, 4
    %v458 = vadd.f32 %v456, %v457
    %v459 = vrot.slane %v458, 2
    %v460 = vadd.f32 %v458, %v459
    %v461 = vrot.slane %v460, 1
    %v462 = vadd.f32 %v460, %v461
    %s463 = scalar_lea.vmem %s5, 640
    %v464 = vld [vmem:[%s463] sm:$0xff]
    %v465 = vld [vmem:[%s463 + $0x8] sm:$0xff]
    %v466 = vld [vmem:[%s463 + $0x10] sm:$0xff]
    %v467 = vld [vmem:[%s463 + $0x18] sm:$0xff]
    %v468 = vld [vmem:[%s463 + $0x20] sm:$0xff]
    %v469 = vld [vmem:[%s463 + $0x28] sm:$0xff]
    %v470 = vld [vmem:[%s463 + $0x30] sm:$0xff]
    %v471 = vld [vmem:[%s463 + $0x38] sm:$0xff]
    %v472 = vld [vmem:[%s463 + $0x40] sm:$0xff]
    %v473 = vld [vmem:[%s463 + $0x48] sm:$0xff]
    %v474 = vld [vmem:[%s463 + $0x50] sm:$0xff]
    %v475 = vld [vmem:[%s463 + $0x58] sm:$0xff]
    %v476 = vld [vmem:[%s463 + $0x60] sm:$0xff]
    %v477 = vld [vmem:[%s463 + $0x68] sm:$0xff]
    %v478 = vld [vmem:[%s463 + $0x70] sm:$0xff]
    %v479 = vld [vmem:[%s463 + $0x78] sm:$0xff]
    %480 = vmatpush.msra.mxu0 %v479
    %481 = vmatpush.msra.mxu0 %v478
    %482 = vmatpush.msra.mxu0 %v477
    %483 = vmatpush.msra.mxu0 %v476
    %484 = vmatpush.msra.mxu0 %v475
    %485 = vmatpush.msra.mxu0 %v474
    %486 = vmatpush.msra.mxu0 %v473
    %487 = vmatpush.msra.mxu0 %v472
    %488 = vmatpush.msra.mxu0 %v471
    %489 = vmatpush.msra.mxu0 %v470
    %490 = vmatpush.msra.mxu0 %v469
    %491 = vmatpush.msra.mxu0 %v468
    %492 = vmatpush.msra.mxu0 %v467
    %493 = vmatpush.msra.mxu0 %v466
    %494 = vmatpush.msra.mxu0 %v465
    %495 = vmatpush.msra.mxu0 %v464
    %496 = vmatmul.f32.gmra.mxu0 %v462
    %v497 = vpop.f32.mrf.mxu0
    %v498 = vadd.f32 0.0, %v497
    %499 = vdwg.mxu0
    %v500 = vadd.f32 %v446, %v498
    %vm501 = vcmp.eq.s32.totalorder %v28, 6
    %vm502 = vcmp.eq.s32.totalorder %v29, 6
    %v503 = vsel %vm501, 1, 0
    %v504 = vsel %vm502, 1, 0
    %vm505 = vcmp.eq.s32.totalorder %v503, 1
    %vm506 = vcmp.eq.s32.totalorder %v504, 1
    %v507 = vsel %vm505, %v168, 0.0
    %v508 = vsel %vm506, %v169, 0.0
    %v509 = vsel %vm172, %v508, 0.0
    %v510 = vadd.f32 %v507, %v509
    %v511 = vrot.slane %v510, 4
    %v512 = vadd.f32 %v510, %v511
    %v513 = vrot.slane %v512, 2
    %v514 = vadd.f32 %v512, %v513
    %v515 = vrot.slane %v514, 1
    %v516 = vadd.f32 %v514, %v515
    %s517 = scalar_lea.vmem %s5, 768
    %v518 = vld [vmem:[%s517] sm:$0xff]
    %v519 = vld [vmem:[%s517 + $0x8] sm:$0xff]
    %v520 = vld [vmem:[%s517 + $0x10] sm:$0xff]
    %v521 = vld [vmem:[%s517 + $0x18] sm:$0xff]
    %v522 = vld [vmem:[%s517 + $0x20] sm:$0xff]
    %v523 = vld [vmem:[%s517 + $0x28] sm:$0xff]
    %v524 = vld [vmem:[%s517 + $0x30] sm:$0xff]
    %v525 = vld [vmem:[%s517 + $0x38] sm:$0xff]
    %v526 = vld [vmem:[%s517 + $0x40] sm:$0xff]
    %v527 = vld [vmem:[%s517 + $0x48] sm:$0xff]
    %v528 = vld [vmem:[%s517 + $0x50] sm:$0xff]
    %v529 = vld [vmem:[%s517 + $0x58] sm:$0xff]
    %v530 = vld [vmem:[%s517 + $0x60] sm:$0xff]
    %v531 = vld [vmem:[%s517 + $0x68] sm:$0xff]
    %v532 = vld [vmem:[%s517 + $0x70] sm:$0xff]
    %v533 = vld [vmem:[%s517 + $0x78] sm:$0xff]
    %534 = vmatpush.msra.mxu0 %v533
    %535 = vmatpush.msra.mxu0 %v532
    %536 = vmatpush.msra.mxu0 %v531
    %537 = vmatpush.msra.mxu0 %v530
    %538 = vmatpush.msra.mxu0 %v529
    %539 = vmatpush.msra.mxu0 %v528
    %540 = vmatpush.msra.mxu0 %v527
    %541 = vmatpush.msra.mxu0 %v526
    %542 = vmatpush.msra.mxu0 %v525
    %543 = vmatpush.msra.mxu0 %v524
    %544 = vmatpush.msra.mxu0 %v523
    %545 = vmatpush.msra.mxu0 %v522
    %546 = vmatpush.msra.mxu0 %v521
    %547 = vmatpush.msra.mxu0 %v520
    %548 = vmatpush.msra.mxu0 %v519
    %549 = vmatpush.msra.mxu0 %v518
    %550 = vmatmul.f32.gmra.mxu0 %v516
    %v551 = vpop.f32.mrf.mxu0
    %v552 = vadd.f32 0.0, %v551
    %553 = vdwg.mxu0
    %v554 = vadd.f32 %v500, %v552
    %vm555 = vcmp.eq.s32.totalorder %v28, 7
    %vm556 = vcmp.eq.s32.totalorder %v29, 7
    %v557 = vsel %vm555, 1, 0
    %v558 = vsel %vm556, 1, 0
    %vm559 = vcmp.eq.s32.totalorder %v557, 1
    %vm560 = vcmp.eq.s32.totalorder %v558, 1
    %v561 = vsel %vm559, %v168, 0.0
    %v562 = vsel %vm560, %v169, 0.0
    %v563 = vsel %vm172, %v562, 0.0
    %v564 = vadd.f32 %v561, %v563
    %v565 = vrot.slane %v564, 4
    %v566 = vadd.f32 %v564, %v565
    %v567 = vrot.slane %v566, 2
    %v568 = vadd.f32 %v566, %v567
    %v569 = vrot.slane %v568, 1
    %v570 = vadd.f32 %v568, %v569
    %s571 = scalar_lea.vmem %s5, 896
    %v572 = vld [vmem:[%s571] sm:$0xff]
    %v573 = vld [vmem:[%s571 + $0x8] sm:$0xff]
    %v574 = vld [vmem:[%s571 + $0x10] sm:$0xff]
    %v575 = vld [vmem:[%s571 + $0x18] sm:$0xff]
    %v576 = vld [vmem:[%s571 + $0x20] sm:$0xff]
    %v577 = vld [vmem:[%s571 + $0x28] sm:$0xff]
    %v578 = vld [vmem:[%s571 + $0x30] sm:$0xff]
    %v579 = vld [vmem:[%s571 + $0x38] sm:$0xff]
    %v580 = vld [vmem:[%s571 + $0x40] sm:$0xff]
    %v581 = vld [vmem:[%s571 + $0x48] sm:$0xff]
    %v582 = vld [vmem:[%s571 + $0x50] sm:$0xff]
    %v583 = vld [vmem:[%s571 + $0x58] sm:$0xff]
    %v584 = vld [vmem:[%s571 + $0x60] sm:$0xff]
    %v585 = vld [vmem:[%s571 + $0x68] sm:$0xff]
    %v586 = vld [vmem:[%s571 + $0x70] sm:$0xff]
    %v587 = vld [vmem:[%s571 + $0x78] sm:$0xff]
    %588 = vmatpush.msra.mxu0 %v587
    %589 = vmatpush.msra.mxu0 %v586
    %590 = vmatpush.msra.mxu0 %v585
    %591 = vmatpush.msra.mxu0 %v584
    %592 = vmatpush.msra.mxu0 %v583
    %593 = vmatpush.msra.mxu0 %v582
    %594 = vmatpush.msra.mxu0 %v581
    %595 = vmatpush.msra.mxu0 %v580
    %596 = vmatpush.msra.mxu0 %v579
    %597 = vmatpush.msra.mxu0 %v578
    %598 = vmatpush.msra.mxu0 %v577
    %599 = vmatpush.msra.mxu0 %v576
    %600 = vmatpush.msra.mxu0 %v575
    %601 = vmatpush.msra.mxu0 %v574
    %602 = vmatpush.msra.mxu0 %v573
    %603 = vmatpush.msra.mxu0 %v572
    %604 = vmatmul.f32.gmra.mxu0 %v570
    %v605 = vpop.f32.mrf.mxu0
    %v606 = vadd.f32 0.0, %v605
    %607 = vdwg.mxu0
    %v608 = vadd.f32 %v554, %v606
    %vm609 = vcmp.eq.s32.totalorder %v28, 8
    %vm610 = vcmp.eq.s32.totalorder %v29, 8
    %v611 = vsel %vm609, 1, 0
    %v612 = vsel %vm610, 1, 0
    %vm613 = vcmp.eq.s32.totalorder %v611, 1
    %vm614 = vcmp.eq.s32.totalorder %v612, 1
    %v615 = vsel %vm613, %v168, 0.0
    %v616 = vsel %vm614, %v169, 0.0
    %v617 = vsel %vm172, %v616, 0.0
    %v618 = vadd.f32 %v615, %v617
    %v619 = vrot.slane %v618, 4
    %v620 = vadd.f32 %v618, %v619
    %v621 = vrot.slane %v620, 2
    %v622 = vadd.f32 %v620, %v621
    %v623 = vrot.slane %v622, 1
    %v624 = vadd.f32 %v622, %v623
    %s625 = scalar_lea.vmem %s5, 1024
    %v626 = vld [vmem:[%s625] sm:$0xff]
    %v627 = vld [vmem:[%s625 + $0x8] sm:$0xff]
    %v628 = vld [vmem:[%s625 + $0x10] sm:$0xff]
    %v629 = vld [vmem:[%s625 + $0x18] sm:$0xff]
    %v630 = vld [vmem:[%s625 + $0x20] sm:$0xff]
    %v631 = vld [vmem:[%s625 + $0x28] sm:$0xff]
    %v632 = vld [vmem:[%s625 + $0x30] sm:$0xff]
    %v633 = vld [vmem:[%s625 + $0x38] sm:$0xff]
    %v634 = vld [vmem:[%s625 + $0x40] sm:$0xff]
    %v635 = vld [vmem:[%s625 + $0x48] sm:$0xff]
    %v636 = vld [vmem:[%s625 + $0x50] sm:$0xff]
    %v637 = vld [vmem:[%s625 + $0x58] sm:$0xff]
    %v638 = vld [vmem:[%s625 + $0x60] sm:$0xff]
    %v639 = vld [vmem:[%s625 + $0x68] sm:$0xff]
    %v640 = vld [vmem:[%s625 + $0x70] sm:$0xff]
    %v641 = vld [vmem:[%s625 + $0x78] sm:$0xff]
    %642 = vmatpush.msra.mxu0 %v641
    %643 = vmatpush.msra.mxu0 %v640
    %644 = vmatpush.msra.mxu0 %v639
    %645 = vmatpush.msra.mxu0 %v638
    %646 = vmatpush.msra.mxu0 %v637
    %647 = vmatpush.msra.mxu0 %v636
    %648 = vmatpush.msra.mxu0 %v635
    %649 = vmatpush.msra.mxu0 %v634
    %650 = vmatpush.msra.mxu0 %v633
    %651 = vmatpush.msra.mxu0 %v632
    %652 = vmatpush.msra.mxu0 %v631
    %653 = vmatpush.msra.mxu0 %v630
    %654 = vmatpush.msra.mxu0 %v629
    %655 = vmatpush.msra.mxu0 %v628
    %656 = vmatpush.msra.mxu0 %v627
    %657 = vmatpush.msra.mxu0 %v626
    %658 = vmatmul.f32.gmra.mxu0 %v624
    %v659 = vpop.f32.mrf.mxu0
    %v660 = vadd.f32 0.0, %v659
    %661 = vdwg.mxu0
    %v662 = vadd.f32 %v608, %v660
    %663 = vst [vmem:[%s7] sm:$0x1] %v662
    %s664 = scalar_lea.vmem %s0, 16
    %v665 = vld [vmem:[%s664] sm:$0xff]
    %v666 = vld [vmem:[%s664 + $0x8] sm:$0x1]
    %v667 = vsel %vm32, %v665, 0.0
    %v668 = vsel %vm34, %v666, 0.0
    %v669 = vadd.f32 %v667, %v668
    %v670 = vrot.slane %v669, 4
    %v671 = vadd.f32 %v669, %v670
    %v672 = vrot.slane %v671, 2
    %v673 = vadd.f32 %v671, %v672
    %v674 = vrot.slane %v673, 1
    %v675 = vadd.f32 %v673, %v674
    %v676 = vmul.f32 %v675, %v49
    %v677 = vsel %vm32, %v665, -inf
    %v678 = vsel %vm34, %v666, -inf
    %v679 = vmax.f32 %v677, %v678
    %v680 = vrot.slane %v679, 4
    %v681 = vmax.f32 %v679, %v680
    %v682 = vrot.slane %v681, 2
    %v683 = vmax.f32 %v681, %v682
    %v684 = vrot.slane %v683, 1
    %v685 = vmax.f32 %v683, %v684
    %v686 = vld [vmem:[%s1] sm:$0xff]
    %v687 = vld [vmem:[%s1 + $0x8] sm:$0xff]
    %v688 = vld [vmem:[%s1 + $0x10] sm:$0xff]
    %v689 = vld [vmem:[%s1 + $0x18] sm:$0xff]
    %v690 = vld [vmem:[%s1 + $0x20] sm:$0xff]
    %v691 = vld [vmem:[%s1 + $0x28] sm:$0xff]
    %v692 = vld [vmem:[%s1 + $0x30] sm:$0xff]
    %v693 = vld [vmem:[%s1 + $0x38] sm:$0xff]
    %v694 = vld [vmem:[%s2] sm:$0xff]
    %v695 = vld [vmem:[%s2 + $0x8] sm:$0xff]
    %v696 = vld [vmem:[%s2 + $0x10] sm:$0xff]
    %v697 = vld [vmem:[%s2 + $0x18] sm:$0xff]
    %v698 = vld [vmem:[%s2 + $0x20] sm:$0xff]
    %v699 = vld [vmem:[%s2 + $0x28] sm:$0xff]
    %v700 = vld [vmem:[%s2 + $0x30] sm:$0xff]
    %v701 = vld [vmem:[%s2 + $0x38] sm:$0xff]
    %v703 = vsel %vm32, %v685, 0
    %705 = vmatpush.msra.mxu0 0.0
    %706 = vmatpush.msra.mxu0 0.0
    %707 = vmatpush.msra.mxu0 0.0
    %708 = vmatpush.msra.mxu0 0.0
    %709 = vmatpush.msra.mxu0 0.0
    %710 = vmatpush.msra.mxu0 0.0
    %711 = vmatpush.msra.mxu0 0.0
    %712 = vmatpush.msra.mxu0 0.0
    %713 = vmatpush.msra.mxu0 %v701
    %714 = vmatpush.msra.mxu0 %v700
    %715 = vmatpush.msra.mxu0 %v699
    %716 = vmatpush.msra.mxu0 %v698
    %717 = vmatpush.msra.mxu0 %v697
    %718 = vmatpush.msra.mxu0 %v696
    %719 = vmatpush.msra.mxu0 %v695
    %720 = vmatpush.msra.mxu0 %v694
    %721 = vmatmul.f32.gmra.mxu0 %v703
    %v722 = vpop.f32.mrf.mxu0
    %v723 = vadd.f32 0.0, %v722
    %724 = vdwg.mxu0
    %v726 = vsel %vm32, %v676, 0
    %728 = vmatpush.msra.mxu0 0.0
    %729 = vmatpush.msra.mxu0 0.0
    %730 = vmatpush.msra.mxu0 0.0
    %731 = vmatpush.msra.mxu0 0.0
    %732 = vmatpush.msra.mxu0 0.0
    %733 = vmatpush.msra.mxu0 0.0
    %734 = vmatpush.msra.mxu0 0.0
    %735 = vmatpush.msra.mxu0 0.0
    %736 = vmatpush.msra.mxu0 %v693
    %737 = vmatpush.msra.mxu0 %v692
    %738 = vmatpush.msra.mxu0 %v691
    %739 = vmatpush.msra.mxu0 %v690
    %740 = vmatpush.msra.mxu0 %v689
    %741 = vmatpush.msra.mxu0 %v688
    %742 = vmatpush.msra.mxu0 %v687
    %743 = vmatpush.msra.mxu0 %v686
    %744 = vmatmul.f32.gmra.mxu0 %v726
    %v745 = vpop.f32.mrf.mxu0
    %v746 = vadd.f32 %v723, %v745
    %747 = vdwg.mxu0
    %s748 = scalar_lea.vmem [#allocation2], 1
    %749 = vst [vmem:[%s748] sm:$0x1] %v746
    %v750 = vld [vmem:[%s3] sm:$0xff]
    %v751 = vld [vmem:[%s3 + $0x8] sm:$0xff]
    %v752 = vld [vmem:[%s3 + $0x10] sm:$0xff]
    %v753 = vld [vmem:[%s3 + $0x18] sm:$0xff]
    %v754 = vld [vmem:[%s3 + $0x20] sm:$0xff]
    %v755 = vld [vmem:[%s3 + $0x28] sm:$0xff]
    %v756 = vld [vmem:[%s3 + $0x30] sm:$0xff]
    %v757 = vld [vmem:[%s3 + $0x38] sm:$0xff]
    %v758 = vld [vmem:[%s4] sm:$0x1]
    %v760 = vperm.slane %v758, 0
    %v763 = vsel %vm32, %v665, 0
    %v766 = vsel %vm32, %v666, 0
    %768 = vmatpush.msra.mxu0 0.0
    %769 = vmatpush.msra.mxu0 0.0
    %770 = vmatpush.msra.mxu0 0.0
    %771 = vmatpush.msra.mxu0 0.0
    %772 = vmatpush.msra.mxu0 0.0
    %773 = vmatpush.msra.mxu0 0.0
    %774 = vmatpush.msra.mxu0 0.0
    %775 = vmatpush.msra.mxu0 0.0
    %776 = vmatpush.msra.mxu0 %v757
    %777 = vmatpush.msra.mxu0 %v756
    %778 = vmatpush.msra.mxu0 %v755
    %779 = vmatpush.msra.mxu0 %v754
    %780 = vmatpush.msra.mxu0 %v753
    %781 = vmatpush.msra.mxu0 %v752
    %782 = vmatpush.msra.mxu0 %v751
    %783 = vmatpush.msra.mxu0 %v750
    %784 = vmatmul.f32.gmra.mxu0 %v763
    %v785 = vpop.f32.mrf.mxu0
    %v786 = vadd.f32 %v760, %v785
    %787 = vmatmul.f32.gmra.mxu0 %v766
    %v788 = vpop.f32.mrf.mxu0
    %v789 = vadd.f32 %v760, %v788
    %790 = vdwg.mxu0
    %vm791 = vcmp.ge.f32.partialorder %v786, 0.0
    %vm792 = vcmp.ge.f32.partialorder %v789, 0.0
    %v793 = vmul.f32 %v786, 0.2
    %v794 = vmul.f32 %v789, 0.2
    %v795 = vsel %vm791, %v786, %v793
    %v796 = vsel %vm792, %v789, %v794
    %797 = vadd.xlane.f32.xlu0 %v795
    %v798 = vpop.xlane.xlu0 %797
    %v799 = vsel %vm172, %v796, 0.0
    %800 = vadd.xlane.f32.xlu0 %v799
    %v801 = vpop.xlane.xlu0 %800
    %s802 = scalar_lea.vmem %s8, 16
    %803 = vst.msk [vmem:[%s802] sm:$0xff] %vm176, %v798
    %804 = vst.msk [vmem:[%s802 + $0x8] sm:$0x1] %vm178, %v801
    %v805 = vsel %vm184, %v795, 0.0
    %v806 = vsel %vm185, %v796, 0.0
    %v807 = vsel %vm172, %v806, 0.0
    %v808 = vadd.f32 %v805, %v807
    %v809 = vrot.slane %v808, 4
    %v810 = vadd.f32 %v808, %v809
    %v811 = vrot.slane %v810, 2
    %v812 = vadd.f32 %v810, %v811
    %v813 = vrot.slane %v812, 1
    %v814 = vadd.f32 %v812, %v813
    %v815 = vld [vmem:[%s5] sm:$0xff]
    %v816 = vld [vmem:[%s5 + $0x8] sm:$0xff]
    %v817 = vld [vmem:[%s5 + $0x10] sm:$0xff]
    %v818 = vld [vmem:[%s5 + $0x18] sm:$0xff]
    %v819 = vld [vmem:[%s5 + $0x20] sm:$0xff]
    %v820 = vld [vmem:[%s5 + $0x28] sm:$0xff]
    %v821 = vld [vmem:[%s5 + $0x30] sm:$0xff]
    %v822 = vld [vmem:[%s5 + $0x38] sm:$0xff]
    %v823 = vld [vmem:[%s5 + $0x40] sm:$0xff]
    %v824 = vld [vmem:[%s5 + $0x48] sm:$0xff]
    %v825 = vld [vmem:[%s5 + $0x50] sm:$0xff]
    %v826 = vld [vmem:[%s5 + $0x58] sm:$0xff]
    %v827 = vld [vmem:[%s5 + $0x60] sm:$0xff]
    %v828 = vld [vmem:[%s5 + $0x68] sm:$0xff]
    %v829 = vld [vmem:[%s5 + $0x70] sm:$0xff]
    %v830 = vld [vmem:[%s5 + $0x78] sm:$0xff]
    %v831 = vsel %vm216, %v795, 0.0
    %v832 = vsel %vm217, %v796, 0.0
    %v833 = vsel %vm172, %v832, 0.0
    %v834 = vadd.f32 %v831, %v833
    %v835 = vrot.slane %v834, 4
    %v836 = vadd.f32 %v834, %v835
    %v837 = vrot.slane %v836, 2
    %v838 = vadd.f32 %v836, %v837
    %v839 = vrot.slane %v838, 1
    %v840 = vadd.f32 %v838, %v839
    %v841 = vld [vmem:[%s228] sm:$0xff]
    %v842 = vld [vmem:[%s228 + $0x8] sm:$0xff]
    %v843 = vld [vmem:[%s228 + $0x10] sm:$0xff]
    %v844 = vld [vmem:[%s228 + $0x18] sm:$0xff]
    %v845 = vld [vmem:[%s228 + $0x20] sm:$0xff]
    %v846 = vld [vmem:[%s228 + $0x28] sm:$0xff]
    %v847 = vld [vmem:[%s228 + $0x30] sm:$0xff]
    %v848 = vld [vmem:[%s228 + $0x38] sm:$0xff]
    %v849 = vld [vmem:[%s228 + $0x40] sm:$0xff]
    %v850 = vld [vmem:[%s228 + $0x48] sm:$0xff]
    %v851 = vld [vmem:[%s228 + $0x50] sm:$0xff]
    %v852 = vld [vmem:[%s228 + $0x58] sm:$0xff]
    %v853 = vld [vmem:[%s228 + $0x60] sm:$0xff]
    %v854 = vld [vmem:[%s228 + $0x68] sm:$0xff]
    %v855 = vld [vmem:[%s228 + $0x70] sm:$0xff]
    %v856 = vld [vmem:[%s228 + $0x78] sm:$0xff]
    %857 = vmatpush.msra.mxu0 %v856
    %858 = vmatpush.msra.mxu0 %v855
    %859 = vmatpush.msra.mxu0 %v854
    %860 = vmatpush.msra.mxu0 %v853
    %861 = vmatpush.msra.mxu0 %v852
    %862 = vmatpush.msra.mxu0 %v851
    %863 = vmatpush.msra.mxu0 %v850
    %864 = vmatpush.msra.mxu0 %v849
    %865 = vmatpush.msra.mxu0 %v848
    %866 = vmatpush.msra.mxu0 %v847
    %867 = vmatpush.msra.mxu0 %v846
    %868 = vmatpush.msra.mxu0 %v845
    %869 = vmatpush.msra.mxu0 %v844
    %870 = vmatpush.msra.mxu0 %v843
    %871 = vmatpush.msra.mxu0 %v842
    %872 = vmatpush.msra.mxu0 %v841
    %873 = vmatmul.f32.gmra.mxu0 %v840
    %v874 = vpop.f32.mrf.mxu0
    %v875 = vadd.f32 0.0, %v874
    %876 = vdwg.mxu0
    %877 = vmatpush.msra.mxu0 %v830
    %878 = vmatpush.msra.mxu0 %v829
    %879 = vmatpush.msra.mxu0 %v828
    %880 = vmatpush.msra.mxu0 %v827
    %881 = vmatpush.msra.mxu0 %v826
    %882 = vmatpush.msra.mxu0 %v825
    %883 = vmatpush.msra.mxu0 %v824
    %884 = vmatpush.msra.mxu0 %v823
    %885 = vmatpush.msra.mxu0 %v822
    %886 = vmatpush.msra.mxu0 %v821
    %887 = vmatpush.msra.mxu0 %v820
    %888 = vmatpush.msra.mxu0 %v819
    %889 = vmatpush.msra.mxu0 %v818
    %890 = vmatpush.msra.mxu0 %v817
    %891 = vmatpush.msra.mxu0 %v816
    %892 = vmatpush.msra.mxu0 %v815
    %893 = vmatmul.f32.gmra.mxu0 %v814
    %v894 = vpop.f32.mrf.mxu0
    %v895 = vadd.f32 %v875, %v894
    %896 = vdwg.mxu0
    %v897 = vsel %vm289, %v795, 0.0
    %v898 = vsel %vm290, %v796, 0.0
    %v899 = vsel %vm172, %v898, 0.0
    %v900 = vadd.f32 %v897, %v899
    %v901 = vrot.slane %v900, 4
    %v902 = vadd.f32 %v900, %v901
    %v903 = vrot.slane %v902, 2
    %v904 = vadd.f32 %v902, %v903
    %v905 = vrot.slane %v904, 1
    %v906 = vadd.f32 %v904, %v905
    %v907 = vld [vmem:[%s301] sm:$0xff]
    %v908 = vld [vmem:[%s301 + $0x8] sm:$0xff]
    %v909 = vld [vmem:[%s301 + $0x10] sm:$0xff]
    %v910 = vld [vmem:[%s301 + $0x18] sm:$0xff]
    %v911 = vld [vmem:[%s301 + $0x20] sm:$0xff]
    %v912 = vld [vmem:[%s301 + $0x28] sm:$0xff]
    %v913 = vld [vmem:[%s301 + $0x30] sm:$0xff]
    %v914 = vld [vmem:[%s301 + $0x38] sm:$0xff]
    %v915 = vld [vmem:[%s301 + $0x40] sm:$0xff]
    %v916 = vld [vmem:[%s301 + $0x48] sm:$0xff]
    %v917 = vld [vmem:[%s301 + $0x50] sm:$0xff]
    %v918 = vld [vmem:[%s301 + $0x58] sm:$0xff]
    %v919 = vld [vmem:[%s301 + $0x60] sm:$0xff]
    %v920 = vld [vmem:[%s301 + $0x68] sm:$0xff]
    %v921 = vld [vmem:[%s301 + $0x70] sm:$0xff]
    %v922 = vld [vmem:[%s301 + $0x78] sm:$0xff]
    %923 = vmatpush.msra.mxu0 %v922
    %924 = vmatpush.msra.mxu0 %v921
    %925 = vmatpush.msra.mxu0 %v920
    %926 = vmatpush.msra.mxu0 %v919
    %927 = vmatpush.msra.mxu0 %v918
    %928 = vmatpush.msra.mxu0 %v917
    %929 = vmatpush.msra.mxu0 %v916
    %930 = vmatpush.msra.mxu0 %v915
    %931 = vmatpush.msra.mxu0 %v914
    %932 = vmatpush.msra.mxu0 %v913
    %933 = vmatpush.msra.mxu0 %v912
    %934 = vmatpush.msra.mxu0 %v911
    %935 = vmatpush.msra.mxu0 %v910
    %936 = vmatpush.msra.mxu0 %v909
    %937 = vmatpush.msra.mxu0 %v908
    %938 = vmatpush.msra.mxu0 %v907
    %939 = vmatmul.f32.gmra.mxu0 %v906
    %v940 = vpop.f32.mrf.mxu0
    %v941 = vadd.f32 0.0, %v940
    %942 = vdwg.mxu0
    %v943 = vadd.f32 %v895, %v941
    %v944 = vsel %vm343, %v795, 0.0
    %v945 = vsel %vm344, %v796, 0.0
    %v946 = vsel %vm172, %v945, 0.0
    %v947 = vadd.f32 %v944, %v946
    %v948 = vrot.slane %v947, 4
    %v949 = vadd.f32 %v947, %v948
    %v950 = vrot.slane %v949, 2
    %v951 = vadd.f32 %v949, %v950
    %v952 = vrot.slane %v951, 1
    %v953 = vadd.f32 %v951, %v952
    %v954 = vld [vmem:[%s355] sm:$0xff]
    %v955 = vld [vmem:[%s355 + $0x8] sm:$0xff]
    %v956 = vld [vmem:[%s355 + $0x10] sm:$0xff]
    %v957 = vld [vmem:[%s355 + $0x18] sm:$0xff]
    %v958 = vld [vmem:[%s355 + $0x20] sm:$0xff]
    %v959 = vld [vmem:[%s355 + $0x28] sm:$0xff]
    %v960 = vld [vmem:[%s355 + $0x30] sm:$0xff]
    %v961 = vld [vmem:[%s355 + $0x38] sm:$0xff]
    %v962 = vld [vmem:[%s355 + $0x40] sm:$0xff]
    %v963 = vld [vmem:[%s355 + $0x48] sm:$0xff]
    %v964 = vld [vmem:[%s355 + $0x50] sm:$0xff]
    %v965 = vld [vmem:[%s355 + $0x58] sm:$0xff]
    %v966 = vld [vmem:[%s355 + $0x60] sm:$0xff]
    %v967 = vld [vmem:[%s355 + $0x68] sm:$0xff]
    %v968 = vld [vmem:[%s355 + $0x70] sm:$0xff]
    %v969 = vld [vmem:[%s355 + $0x78] sm:$0xff]
    %970 = vmatpush.msra.mxu0 %v969
    %971 = vmatpush.msra.mxu0 %v968
    %972 = vmatpush.msra.mxu0 %v967
    %973 = vmatpush.msra.mxu0 %v966
    %974 = vmatpush.msra.mxu0 %v965
    %975 = vmatpush.msra.mxu0 %v964
    %976 = vmatpush.msra.mxu0 %v963
    %977 = vmatpush.msra.mxu0 %v962
    %978 = vmatpush.msra.mxu0 %v961
    %979 = vmatpush.msra.mxu0 %v960
    %980 = vmatpush.msra.mxu0 %v959
    %981 = vmatpush.msra.mxu0 %v958
    %982 = vmatpush.msra.mxu0 %v957
    %983 = vmatpush.msra.mxu0 %v956
    %984 = vmatpush.msra.mxu0 %v955
    %985 = vmatpush.msra.mxu0 %v954
    %986 = vmatmul.f32.gmra.mxu0 %v953
    %v987 = vpop.f32.mrf.mxu0
    %v988 = vadd.f32 0.0, %v987
    %989 = vdwg.mxu0
    %v990 = vadd.f32 %v943, %v988
    %v991 = vsel %vm397, %v795, 0.0
    %v992 = vsel %vm398, %v796, 0.0
    %v993 = vsel %vm172, %v992, 0.0
    %v994 = vadd.f32 %v991, %v993
    %v995 = vrot.slane %v994, 4
    %v996 = vadd.f32 %v994, %v995
    %v997 = vrot.slane %v996, 2
    %v998 = vadd.f32 %v996, %v997
    %v999 = vrot.slane %v998, 1
    %v1000 = vadd.f32 %v998, %v999
    %v1001 = vld [vmem:[%s409] sm:$0xff]
    %v1002 = vld [vmem:[%s409 + $0x8] sm:$0xff]
    %v1003 = vld [vmem:[%s409 + $0x10] sm:$0xff]
    %v1004 = vld [vmem:[%s409 + $0x18] sm:$0xff]
    %v1005 = vld [vmem:[%s409 + $0x20] sm:$0xff]
    %v1006 = vld [vmem:[%s409 + $0x28] sm:$0xff]
    %v1007 = vld [vmem:[%s409 + $0x30] sm:$0xff]
    %v1008 = vld [vmem:[%s409 + $0x38] sm:$0xff]
    %v1009 = vld [vmem:[%s409 + $0x40] sm:$0xff]
    %v1010 = vld [vmem:[%s409 + $0x48] sm:$0xff]
    %v1011 = vld [vmem:[%s409 + $0x50] sm:$0xff]
    %v1012 = vld [vmem:[%s409 + $0x58] sm:$0xff]
    %v1013 = vld [vmem:[%s409 + $0x60] sm:$0xff]
    %v1014 = vld [vmem:[%s409 + $0x68] sm:$0xff]
    %v1015 = vld [vmem:[%s409 + $0x70] sm:$0xff]
    %v1016 = vld [vmem:[%s409 + $0x78] sm:$0xff]
    %1017 = vmatpush.msra.mxu0 %v1016
    %1018 = vmatpush.msra.mxu0 %v1015
    %1019 = vmatpush.msra.mxu0 %v1014
    %1020 = vmatpush.msra.mxu0 %v1013
    %1021 = vmatpush.msra.mxu0 %v1012
    %1022 = vmatpush.msra.mxu0 %v1011
    %1023 = vmatpush.msra.mxu0 %v1010
    %1024 = vmatpush.msra.mxu0 %v1009
    %1025 = vmatpush.msra.mxu0 %v1008
    %1026 = vmatpush.msra.mxu0 %v1007
    %1027 = vmatpush.msra.mxu0 %v1006
    %1028 = vmatpush.msra.mxu0 %v1005
    %1029 = vmatpush.msra.mxu0 %v1004
    %1030 = vmatpush.msra.mxu0 %v1003
    %1031 = vmatpush.msra.mxu0 %v1002
    %1032 = vmatpush.msra.mxu0 %v1001
    %1033 = vmatmul.f32.gmra.mxu0 %v1000
    %v1034 = vpop.f32.mrf.mxu0
    %v1035 = vadd.f32 0.0, %v1034
    %1036 = vdwg.mxu0
    %v1037 = vadd.f32 %v990, %v1035
    %v1038 = vsel %vm451, %v795, 0.0
    %v1039 = vsel %vm452, %v796, 0.0
    %v1040 = vsel %vm172, %v1039, 0.0
    %v1041 = vadd.f32 %v1038, %v1040
    %v1042 = vrot.slane %v1041, 4
    %v1043 = vadd.f32 %v1041, %v1042
    %v1044 = vrot.slane %v1043, 2
    %v1045 = vadd.f32 %v1043, %v1044
    %v1046 = vrot.slane %v1045, 1
    %v1047 = vadd.f32 %v1045, %v1046
    %v1048 = vld [vmem:[%s463] sm:$0xff]
    %v1049 = vld [vmem:[%s463 + $0x8] sm:$0xff]
    %v1050 = vld [vmem:[%s463 + $0x10] sm:$0xff]
    %v1051 = vld [vmem:[%s463 + $0x18] sm:$0xff]
    %v1052 = vld [vmem:[%s463 + $0x20] sm:$0xff]
    %v1053 = vld [vmem:[%s463 + $0x28] sm:$0xff]
    %v1054 = vld [vmem:[%s463 + $0x30] sm:$0xff]
    %v1055 = vld [vmem:[%s463 + $0x38] sm:$0xff]
    %v1056 = vld [vmem:[%s463 + $0x40] sm:$0xff]
    %v1057 = vld [vmem:[%s463 + $0x48] sm:$0xff]
    %v1058 = vld [vmem:[%s463 + $0x50] sm:$0xff]
    %v1059 = vld [vmem:[%s463 + $0x58] sm:$0xff]
    %v1060 = vld [vmem:[%s463 + $0x60] sm:$0xff]
    %v1061 = vld [vmem:[%s463 + $0x68] sm:$0xff]
    %v1062 = vld [vmem:[%s463 + $0x70] sm:$0xff]
    %v1063 = vld [vmem:[%s463 + $0x78] sm:$0xff]
    %1064 = vmatpush.msra.mxu0 %v1063
    %1065 = vmatpush.msra.mxu0 %v1062
    %1066 = vmatpush.msra.mxu0 %v1061
    %1067 = vmatpush.msra.mxu0 %v1060
    %1068 = vmatpush.msra.mxu0 %v1059
    %1069 = vmatpush.msra.mxu0 %v1058
    %1070 = vmatpush.msra.mxu0 %v1057
    %1071 = vmatpush.msra.mxu0 %v1056
    %1072 = vmatpush.msra.mxu0 %v1055
    %1073 = vmatpush.msra.mxu0 %v1054
    %1074 = vmatpush.msra.mxu0 %v1053
    %1075 = vmatpush.msra.mxu0 %v1052
    %1076 = vmatpush.msra.mxu0 %v1051
    %1077 = vmatpush.msra.mxu0 %v1050
    %1078 = vmatpush.msra.mxu0 %v1049
    %1079 = vmatpush.msra.mxu0 %v1048
    %1080 = vmatmul.f32.gmra.mxu0 %v1047
    %v1081 = vpop.f32.mrf.mxu0
    %v1082 = vadd.f32 0.0, %v1081
    %1083 = vdwg.mxu0
    %v1084 = vadd.f32 %v1037, %v1082
    %v1085 = vsel %vm505, %v795, 0.0
    %v1086 = vsel %vm506, %v796, 0.0
    %v1087 = vsel %vm172, %v1086, 0.0
    %v1088 = vadd.f32 %v1085, %v1087
    %v1089 = vrot.slane %v1088, 4
    %v1090 = vadd.f32 %v1088, %v1089
    %v1091 = vrot.slane %v1090, 2
    %v1092 = vadd.f32 %v1090, %v1091
    %v1093 = vrot.slane %v1092, 1
    %v1094 = vadd.f32 %v1092, %v1093
    %v1095 = vld [vmem:[%s517] sm:$0xff]
    %v1096 = vld [vmem:[%s517 + $0x8] sm:$0xff]
    %v1097 = vld [vmem:[%s517 + $0x10] sm:$0xff]
    %v1098 = vld [vmem:[%s517 + $0x18] sm:$0xff]
    %v1099 = vld [vmem:[%s517 + $0x20] sm:$0xff]
    %v1100 = vld [vmem:[%s517 + $0x28] sm:$0xff]
    %v1101 = vld [vmem:[%s517 + $0x30] sm:$0xff]
    %v1102 = vld [vmem:[%s517 + $0x38] sm:$0xff]
    %v1103 = vld [vmem:[%s517 + $0x40] sm:$0xff]
    %v1104 = vld [vmem:[%s517 + $0x48] sm:$0xff]
    %v1105 = vld [vmem:[%s517 + $0x50] sm:$0xff]
    %v1106 = vld [vmem:[%s517 + $0x58] sm:$0xff]
    %v1107 = vld [vmem:[%s517 + $0x60] sm:$0xff]
    %v1108 = vld [vmem:[%s517 + $0x68] sm:$0xff]
    %v1109 = vld [vmem:[%s517 + $0x70] sm:$0xff]
    %v1110 = vld [vmem:[%s517 + $0x78] sm:$0xff]
    %1111 = vmatpush.msra.mxu0 %v1110
    %1112 = vmatpush.msra.mxu0 %v1109
    %1113 = vmatpush.msra.mxu0 %v1108
    %1114 = vmatpush.msra.mxu0 %v1107
    %1115 = vmatpush.msra.mxu0 %v1106
    %1116 = vmatpush.msra.mxu0 %v1105
    %1117 = vmatpush.msra.mxu0 %v1104
    %1118 = vmatpush.msra.mxu0 %v1103
    %1119 = vmatpush.msra.mxu0 %v1102
    %1120 = vmatpush.msra.mxu0 %v1101
    %1121 = vmatpush.msra.mxu0 %v1100
    %1122 = vmatpush.msra.mxu0 %v1099
    %1123 = vmatpush.msra.mxu0 %v1098
    %1124 = vmatpush.msra.mxu0 %v1097
    %1125 = vmatpush.msra.mxu0 %v1096
    %1126 = vmatpush.msra.mxu0 %v1095
    %1127 = vmatmul.f32.gmra.mxu0 %v1094
    %v1128 = vpop.f32.mrf.mxu0
    %v1129 = vadd.f32 0.0, %v1128
    %1130 = vdwg.mxu0
    %v1131 = vadd.f32 %v1084, %v1129
    %v1132 = vsel %vm559, %v795, 0.0
    %v1133 = vsel %vm560, %v796, 0.0
    %v1134 = vsel %vm172, %v1133, 0.0
    %v1135 = vadd.f32 %v1132, %v1134
    %v1136 = vrot.slane %v1135, 4
    %v1137 = vadd.f32 %v1135, %v1136
    %v1138 = vrot.slane %v1137, 2
    %v1139 = vadd.f32 %v1137, %v1138
    %v1140 = vrot.slane %v1139, 1
    %v1141 = vadd.f32 %v1139, %v1140
    %v1142 = vld [vmem:[%s571] sm:$0xff]
    %v1143 = vld [vmem:[%s571 + $0x8] sm:$0xff]
    %v1144 = vld [vmem:[%s571 + $0x10] sm:$0xff]
    %v1145 = vld [vmem:[%s571 + $0x18] sm:$0xff]
    %v1146 = vld [vmem:[%s571 + $0x20] sm:$0xff]
    %v1147 = vld [vmem:[%s571 + $0x28] sm:$0xff]
    %v1148 = vld [vmem:[%s571 + $0x30] sm:$0xff]
    %v1149 = vld [vmem:[%s571 + $0x38] sm:$0xff]
    %v1150 = vld [vmem:[%s571 + $0x40] sm:$0xff]
    %v1151 = vld [vmem:[%s571 + $0x48] sm:$0xff]
    %v1152 = vld [vmem:[%s571 + $0x50] sm:$0xff]
    %v1153 = vld [vmem:[%s571 + $0x58] sm:$0xff]
    %v1154 = vld [vmem:[%s571 + $0x60] sm:$0xff]
    %v1155 = vld [vmem:[%s571 + $0x68] sm:$0xff]
    %v1156 = vld [vmem:[%s571 + $0x70] sm:$0xff]
    %v1157 = vld [vmem:[%s571 + $0x78] sm:$0xff]
    %1158 = vmatpush.msra.mxu0 %v1157
    %1159 = vmatpush.msra.mxu0 %v1156
    %1160 = vmatpush.msra.mxu0 %v1155
    %1161 = vmatpush.msra.mxu0 %v1154
    %1162 = vmatpush.msra.mxu0 %v1153
    %1163 = vmatpush.msra.mxu0 %v1152
    %1164 = vmatpush.msra.mxu0 %v1151
    %1165 = vmatpush.msra.mxu0 %v1150
    %1166 = vmatpush.msra.mxu0 %v1149
    %1167 = vmatpush.msra.mxu0 %v1148
    %1168 = vmatpush.msra.mxu0 %v1147
    %1169 = vmatpush.msra.mxu0 %v1146
    %1170 = vmatpush.msra.mxu0 %v1145
    %1171 = vmatpush.msra.mxu0 %v1144
    %1172 = vmatpush.msra.mxu0 %v1143
    %1173 = vmatpush.msra.mxu0 %v1142
    %1174 = vmatmul.f32.gmra.mxu0 %v1141
    %v1175 = vpop.f32.mrf.mxu0
    %v1176 = vadd.f32 0.0, %v1175
    %1177 = vdwg.mxu0
    %v1178 = vadd.f32 %v1131, %v1176
    %v1179 = vsel %vm613, %v795, 0.0
    %v1180 = vsel %vm614, %v796, 0.0
    %v1181 = vsel %vm172, %v1180, 0.0
    %v1182 = vadd.f32 %v1179, %v1181
    %v1183 = vrot.slane %v1182, 4
    %v1184 = vadd.f32 %v1182, %v1183
    %v1185 = vrot.slane %v1184, 2
    %v1186 = vadd.f32 %v1184, %v1185
    %v1187 = vrot.slane %v1186, 1
    %v1188 = vadd.f32 %v1186, %v1187
    %v1189 = vld [vmem:[%s625] sm:$0xff]
    %v1190 = vld [vmem:[%s625 + $0x8] sm:$0xff]
    %v1191 = vld [vmem:[%s625 + $0x10] sm:$0xff]
    %v1192 = vld [vmem:[%s625 + $0x18] sm:$0xff]
    %v1193 = vld [vmem:[%s625 + $0x20] sm:$0xff]
    %v1194 = vld [vmem:[%s625 + $0x28] sm:$0xff]
    %v1195 = vld [vmem:[%s625 + $0x30] sm:$0xff]
    %v1196 = vld [vmem:[%s625 + $0x38] sm:$0xff]
    %v1197 = vld [vmem:[%s625 + $0x40] sm:$0xff]
    %v1198 = vld [vmem:[%s625 + $0x48] sm:$0xff]
    %v1199 = vld [vmem:[%s625 + $0x50] sm:$0xff]
    %v1200 = vld [vmem:[%s625 + $0x58] sm:$0xff]
    %v1201 = vld [vmem:[%s625 + $0x60] sm:$0xff]
    %v1202 = vld [vmem:[%s625 + $0x68] sm:$0xff]
    %v1203 = vld [vmem:[%s625 + $0x70] sm:$0xff]
    %v1204 = vld [vmem:[%s625 + $0x78] sm:$0xff]
    %1205 = vmatpush.msra.mxu0 %v1204
    %1206 = vmatpush.msra.mxu0 %v1203
    %1207 = vmatpush.msra.mxu0 %v1202
    %1208 = vmatpush.msra.mxu0 %v1201
    %1209 = vmatpush.msra.mxu0 %v1200
    %1210 = vmatpush.msra.mxu0 %v1199
    %1211 = vmatpush.msra.mxu0 %v1198
    %1212 = vmatpush.msra.mxu0 %v1197
    %1213 = vmatpush.msra.mxu0 %v1196
    %1214 = vmatpush.msra.mxu0 %v1195
    %1215 = vmatpush.msra.mxu0 %v1194
    %1216 = vmatpush.msra.mxu0 %v1193
    %1217 = vmatpush.msra.mxu0 %v1192
    %1218 = vmatpush.msra.mxu0 %v1191
    %1219 = vmatpush.msra.mxu0 %v1190
    %1220 = vmatpush.msra.mxu0 %v1189
    %1221 = vmatmul.f32.gmra.mxu0 %v1188
    %v1222 = vpop.f32.mrf.mxu0
    %v1223 = vadd.f32 0.0, %v1222
    %1224 = vdwg.mxu0
    %v1225 = vadd.f32 %v1178, %v1223
    %s1226 = scalar_lea.vmem %s7, 1
    %1227 = vst [vmem:[%s1226] sm:$0x1] %v1225
    // Predicated region
    $region26: #{_lambda_.9} parent=1 // pred_check
      _
    $region27: #{_lambda_.9} parent=1 // pred_check_branch
      %1229 = sbr.rel (0) target = $region29
    $region28: #{_lambda_.9} parent=1 // pred_region
      %1231 = vsyncadd [#allocation3], 0
      %s1232 = sshll.u32 [#allocation2], 4
      %s1233 = int_to_ptr.vmem [resolvable:$true] %s1232
      %s1234 = sshll.u32 %s6, 4
      %s1235 = int_to_ptr.hbm [resolvable:$true] %s1234
      %1240 = dma.vmem_to_hbm [thread:$0]  %s1233, 32, %s1235, [#allocation3], 16, 16, 1
    $region29: #{_lambda_.9} parent=1 // pred_fallthru
      _
    // Predicated region
    $region30: #{_lambda_.9} parent=1 // pred_check
      _
    $region31: #{_lambda_.9} parent=1 // pred_check_branch
      %1242 = sbr.rel (0) target = $region33
    $region32: #{_lambda_.9} parent=1 // pred_region
      _
    $region33: #{_lambda_.9} parent=1 // pred_fallthru
      _
    // Predicated region
    $region34: #{_lambda_.9} parent=1 // pred_check
      _
    $region35: #{_lambda_.9} parent=1 // pred_check_branch
      %1244 = sbr.rel (0) target = $region37
    $region36: #{_lambda_.9} parent=1 // pred_region
      _
    $region37: #{_lambda_.9} parent=1 // pred_fallthru
      _
    // Predicated region
    $region38: #{_lambda_.9} parent=1 // pred_check
      _
    $region39: #{_lambda_.9} parent=1 // pred_check_branch
      %1246 = sbr.rel (0) target = $region41
    $region40: #{_lambda_.9} parent=1 // pred_region
      %1248 = dma.done [#allocation3], 32
    $region41: #{_lambda_.9} parent=1 // pred_fallthru
      _
    // Predicated region
    $region42: #{_lambda_.9} parent=1 // pred_check
      _
    $region43: #{_lambda_.9} parent=1 // pred_check_branch
      %1250 = sbr.rel (0) target = $region45
    $region44: #{_lambda_.9} parent=1 // pred_region
      _
    $region45: #{_lambda_.9} parent=1 // pred_fallthru
      _
    // Predicated region
    $region46: #{_lambda_.9} parent=1 // pred_check
      _
    $region47: #{_lambda_.9} parent=1 // pred_check_branch
      %1252 = sbr.rel (0) target = $region49
    $region48: #{_lambda_.9} parent=1 // pred_region
      _
    $region49: #{_lambda_.9} parent=1 // pred_fallthru
      _
    %1253 = vsyncpa [#allocation3], 1

</llo_original>
